<compile_context>
chip_gen: v6e
topology: v6e:2x2x1
jax: 0.10.0
libtpu: 0.0.40
codegen_flags: <defaults>
</compile_context>

<pallas_src>
import functools

import jax
import jax.numpy as jnp
from jax import lax
from jax.experimental import pallas as pl
from jax.experimental.pallas import tpu as pltpu


def attention_kernel(x_ref, wq_ref, wk_ref, wv_ref, wproj_ref, bproj_ref, o_ref,
                     *, num_heads, scale):
    """One grid step handles one batch element: per-head QKV projections (leading-dim
    indexed weight slabs, full-C contraction), softmax attention, one merged output
    projection. MXU inputs stay in native dtype; accumulation / softmax are f32."""
    x = x_ref[0]                                  # (N, C), native dtype (f32 or bf16)
    dt = x.dtype

    head_outs = []
    for h in range(num_heads):                    # static Python loop (unrolled)
        # Per-head projections; scale folded into q while still in f32.
        q = (jnp.dot(x, wq_ref[h], preferred_element_type=jnp.float32)
             * scale).astype(dt)                                      # (N, hd)
        k = jnp.dot(x, wk_ref[h], preferred_element_type=jnp.float32).astype(dt)
        v = jnp.dot(x, wv_ref[h], preferred_element_type=jnp.float32).astype(dt)

        # q @ k^T without materializing a transpose: contract the last dims on the MXU.
        s = lax.dot_general(q, k, (((1,), (1,)), ((), ())),
                            preferred_element_type=jnp.float32)       # (N, N) f32
        s = s - jnp.max(s, axis=-1, keepdims=True)
        p = jnp.exp(s)
        p = p * pl.reciprocal(jnp.sum(p, axis=-1, keepdims=True), approx=True)

        head_outs.append(
            jnp.dot(p.astype(dt), v, preferred_element_type=jnp.float32).astype(dt))

    # Concatenate heads once, then a single full-width projection matmul.
    o = jnp.concatenate(head_outs, axis=-1)                           # (N, C)
    y = jnp.dot(o, wproj_ref[...], preferred_element_type=jnp.float32)
    y = y + bproj_ref[...].astype(jnp.float32)                        # (1, C) broadcast
    o_ref[0] = y.astype(o_ref.dtype)


def attention_forward(x, w_qkv, w_proj, b_proj, *, num_heads):
    B, N, C = x.shape
    assert C % num_heads == 0
    hd = C // num_heads
    scale = float(hd ** -0.5)

    # (C, 3C) -> per-head (H, C, hd) slabs. The torch module reshapes the 3C output
    # axis as (3, H, hd) row-major, so this decomposition matches exactly. Doing the
    # split in the wrapper keeps all in-kernel weight indexing on the leading dim
    # (no lane-unaligned slicing inside the kernel).
    w4 = w_qkv.reshape(C, 3, num_heads, hd)
    w_q = jnp.transpose(w4[:, 0], (1, 0, 2))      # (H, C, hd)
    w_k = jnp.transpose(w4[:, 1], (1, 0, 2))
    w_v = jnp.transpose(w4[:, 2], (1, 0, 2))
    b_proj2d = b_proj.reshape(1, C)

    kernel = functools.partial(attention_kernel, num_heads=num_heads, scale=scale)
    return pl.pallas_call(
        kernel,
        out_shape=jax.ShapeDtypeStruct((B, N, C), x.dtype),
        grid=(B,),
        in_specs=[
            pl.BlockSpec((1, N, C), lambda b: (b, 0, 0)),            # x: one batch/step
            pl.BlockSpec((num_heads, C, hd), lambda b: (0, 0, 0)),   # W_q (resident)
            pl.BlockSpec((num_heads, C, hd), lambda b: (0, 0, 0)),   # W_k (resident)
            pl.BlockSpec((num_heads, C, hd), lambda b: (0, 0, 0)),   # W_v (resident)
            pl.BlockSpec((C, C), lambda b: (0, 0)),                  # W_proj (resident)
            pl.BlockSpec((1, C), lambda b: (0, 0)),                  # b_proj (resident)
        ],
        out_specs=pl.BlockSpec((1, N, C), lambda b: (b, 0, 0)),
        compiler_params=pltpu.CompilerParams(
            dimension_semantics=("parallel",),
            # Safe on all generations: <= default scoped VMEM on v6e/v7x, well under
            # v5e's physical 128 MiB; the resident weights + per-step tiles fit easily.
            vmem_limit_bytes=32 * 1024 * 1024,
        ),
    )(x, w_q, w_k, w_v, w_proj, b_proj2d)


def attention_reference(x, w_qkv, w_proj, b_proj, *, num_heads):
    """Plain-JAX replica of the PyTorch forward, for correctness checking."""
    B, N, C = x.shape
    hd = C // num_heads
    scale = hd ** -0.5
    qkv = x @ w_qkv                                           # (B, N, 3C)
    qkv = qkv.reshape(B, N, 3, num_heads, hd).transpose(2, 0, 3, 1, 4)
    q, k, v = qkv[0], qkv[1], qkv[2]                          # (B, H, N, hd)
    attn = (q @ k.transpose(0, 1, 3, 2)) * scale              # (B, H, N, N)
    attn = jax.nn.softmax(attn, axis=-1)
    out = (attn @ v).transpose(0, 2, 1, 3).reshape(B, N, C)   # (B, N, C)
    return out @ w_proj + b_proj


if __name__ == "__main__":
    B, N, C = 2, 8, 32
    num_heads = 8

    key = jax.random.PRNGKey(0)
    kx, kqkv, kproj, kb = jax.random.split(key, 4)

    x = jax.random.normal(kx, (B, N, C), dtype=jnp.float32)
    # Deterministic synthetic parameters (nn.Linear shapes, stored as (in, out)).
    w_qkv = jax.random.normal(kqkv, (C, 3 * C), dtype=jnp.float32) * 0.05
    w_proj = jax.random.normal(kproj, (C, C), dtype=jnp.float32) * 0.05
    b_proj = jax.random.normal(kb, (C,), dtype=jnp.float32) * 0.05

    out = attention_forward(x, w_qkv, w_proj, b_proj, num_heads=num_heads)
    out = jax.block_until_ready(out)

    ref = attention_reference(x, w_qkv, w_proj, b_proj, num_heads=num_heads)
    assert out.shape == (B, N, C)
    # Tolerance loosened slightly vs. exact math because the softmax denominator uses
    # the approximate EUP reciprocal (pl.reciprocal(approx=True)).
    assert jnp.allclose(out, ref, atol=2e-3, rtol=2e-3), "mismatch vs reference"

    print("KERNEL_OK")
</pallas_src>

<mosaic_0001>
module attributes {stable_mosaic.version = 11 : i64} {
  func.func @attention_kernel(%arg0: i32, %arg1: memref<1x8x32xf32, #tpu.memory_space<vmem>>, %arg2: memref<8x32x4xf32, #tpu.memory_space<vmem>>, %arg3: memref<8x32x4xf32, #tpu.memory_space<vmem>>, %arg4: memref<8x32x4xf32, #tpu.memory_space<vmem>>, %arg5: memref<32x32xf32, #tpu.memory_space<vmem>>, %arg6: memref<1x32xf32, #tpu.memory_space<vmem>>, %arg7: memref<1x8x32xf32, #tpu.memory_space<vmem>>) attributes {dimension_semantics = [#tpu.dimension_semantics<parallel>], iteration_bounds = array<i64: 2>, scalar_prefetch = 0 : i64, scratch_operands = 0 : i64, tpu.core_type = #tpu.core_type<tc>, window_params = [{transform_indices = @transform_0, window_bounds = array<i64: 1, 8, 32>}, {pipeline_mode = #tpu.pipeline_mode<synchronous>, transform_indices = @transform_1, window_bounds = array<i64: 8, 32, 4>}, {pipeline_mode = #tpu.pipeline_mode<synchronous>, transform_indices = @transform_2, window_bounds = array<i64: 8, 32, 4>}, {pipeline_mode = #tpu.pipeline_mode<synchronous>, transform_indices = @transform_3, window_bounds = array<i64: 8, 32, 4>}, {pipeline_mode = #tpu.pipeline_mode<synchronous>, transform_indices = @transform_4, window_bounds = array<i64: 32, 32>}, {pipeline_mode = #tpu.pipeline_mode<synchronous>, transform_indices = @transform_5, window_bounds = array<i64: 1, 32>}, {transform_indices = @transform_6, window_bounds = array<i64: 1, 8, 32>}]} {
    %c0 = arith.constant 0 : index
    %c0_0 = arith.constant 0 : index
    %c0_1 = arith.constant 0 : index
    %0 = vector.load %arg1[%c0, %c0_0, %c0_1] : memref<1x8x32xf32, #tpu.memory_space<vmem>>, vector<1x8x32xf32>
    %1 = vector.shape_cast %0 : vector<1x8x32xf32> to vector<8x32xf32>
    %c0_2 = arith.constant 0 : index
    %c0_3 = arith.constant 0 : index
    %c0_4 = arith.constant 0 : index
    %2 = vector.load %arg2[%c0_2, %c0_3, %c0_4] : memref<8x32x4xf32, #tpu.memory_space<vmem>>, vector<1x32x4xf32>
    %3 = vector.shape_cast %2 : vector<1x32x4xf32> to vector<32x4xf32>
    %cst = arith.constant dense<0.000000e+00> : vector<8x4xf32>
    %4 = tpu.matmul %1, %3, %cst {dimension_numbers = #tpu.dot_dimension_numbers<[1], [0], [0], [1], [0, 0, 1, 1], [], []>} : vector<8x32xf32>, vector<32x4xf32>, vector<8x4xf32> -> vector<8x4xf32>
    %cst_5 = arith.constant 5.000000e-01 : f32
    %5 = vector.broadcast %cst_5 : f32 to vector<8x4xf32>
    %6 = arith.mulf %4, %5 : vector<8x4xf32>
    %c0_6 = arith.constant 0 : index
    %c0_7 = arith.constant 0 : index
    %c0_8 = arith.constant 0 : index
    %7 = vector.load %arg3[%c0_6, %c0_7, %c0_8] : memref<8x32x4xf32, #tpu.memory_space<vmem>>, vector<1x32x4xf32>
    %8 = vector.shape_cast %7 : vector<1x32x4xf32> to vector<32x4xf32>
    %cst_9 = arith.constant dense<0.000000e+00> : vector<8x4xf32>
    %9 = tpu.matmul %1, %8, %cst_9 {dimension_numbers = #tpu.dot_dimension_numbers<[1], [0], [0], [1], [0, 0, 1, 1], [], []>} : vector<8x32xf32>, vector<32x4xf32>, vector<8x4xf32> -> vector<8x4xf32>
    %c0_10 = arith.constant 0 : index
    %c0_11 = arith.constant 0 : index
    %c0_12 = arith.constant 0 : index
    %10 = vector.load %arg4[%c0_10, %c0_11, %c0_12] : memref<8x32x4xf32, #tpu.memory_space<vmem>>, vector<1x32x4xf32>
    %11 = vector.shape_cast %10 : vector<1x32x4xf32> to vector<32x4xf32>
    %cst_13 = arith.constant dense<0.000000e+00> : vector<8x4xf32>
    %12 = tpu.matmul %1, %11, %cst_13 {dimension_numbers = #tpu.dot_dimension_numbers<[1], [0], [0], [1], [0, 0, 1, 1], [], []>} : vector<8x32xf32>, vector<32x4xf32>, vector<8x4xf32> -> vector<8x4xf32>
    %cst_14 = arith.constant dense<0.000000e+00> : vector<8x8xf32>
    %13 = tpu.matmul %6, %9, %cst_14 {dimension_numbers = #tpu.dot_dimension_numbers<[1], [1], [0], [0], [0, 0, 1, 0], [], []>} : vector<8x4xf32>, vector<8x4xf32>, vector<8x8xf32> -> vector<8x8xf32>
    %cst_15 = arith.constant dense<0xFF800000> : vector<8xf32>
    %14 = vector.multi_reduction <maximumf>, %13, %cst_15 [1] : vector<8x8xf32> to vector<8xf32>
    %15 = vector.shape_cast %14 : vector<8xf32> to vector<8x1xf32>
    %16 = vector.broadcast %15 : vector<8x1xf32> to vector<8x8xf32>
    %17 = arith.subf %13, %16 : vector<8x8xf32>
    %18 = math.exp %17 : vector<8x8xf32>
    %cst_16 = arith.constant dense<0.000000e+00> : vector<8xf32>
    %19 = vector.multi_reduction <add>, %18, %cst_16 [1] : vector<8x8xf32> to vector<8xf32>
    %20 = vector.shape_cast %19 : vector<8xf32> to vector<8x1xf32>
    %21 = tpu.reciprocal %20 {approx = true} : vector<8x1xf32> -> vector<8x1xf32>
    %22 = vector.broadcast %21 : vector<8x1xf32> to vector<8x8xf32>
    %23 = arith.mulf %18, %22 : vector<8x8xf32>
    %cst_17 = arith.constant dense<0.000000e+00> : vector<8x4xf32>
    %24 = tpu.matmul %23, %12, %cst_17 {dimension_numbers = #tpu.dot_dimension_numbers<[1], [0], [0], [1], [0, 0, 1, 1], [], []>} : vector<8x8xf32>, vector<8x4xf32>, vector<8x4xf32> -> vector<8x4xf32>
    %c1 = arith.constant 1 : index
    %c0_18 = arith.constant 0 : index
    %c0_19 = arith.constant 0 : index
    %25 = vector.load %arg2[%c1, %c0_18, %c0_19] : memref<8x32x4xf32, #tpu.memory_space<vmem>>, vector<1x32x4xf32>
    %26 = vector.shape_cast %25 : vector<1x32x4xf32> to vector<32x4xf32>
    %cst_20 = arith.constant dense<0.000000e+00> : vector<8x4xf32>
    %27 = tpu.matmul %1, %26, %cst_20 {dimension_numbers = #tpu.dot_dimension_numbers<[1], [0], [0], [1], [0, 0, 1, 1], [], []>} : vector<8x32xf32>, vector<32x4xf32>, vector<8x4xf32> -> vector<8x4xf32>
    %cst_21 = arith.constant 5.000000e-01 : f32
    %28 = vector.broadcast %cst_21 : f32 to vector<8x4xf32>
    %29 = arith.mulf %27, %28 : vector<8x4xf32>
    %c1_22 = arith.constant 1 : index
    %c0_23 = arith.constant 0 : index
    %c0_24 = arith.constant 0 : index
    %30 = vector.load %arg3[%c1_22, %c0_23, %c0_24] : memref<8x32x4xf32, #tpu.memory_space<vmem>>, vector<1x32x4xf32>
    %31 = vector.shape_cast %30 : vector<1x32x4xf32> to vector<32x4xf32>
    %cst_25 = arith.constant dense<0.000000e+00> : vector<8x4xf32>
    %32 = tpu.matmul %1, %31, %cst_25 {dimension_numbers = #tpu.dot_dimension_numbers<[1], [0], [0], [1], [0, 0, 1, 1], [], []>} : vector<8x32xf32>, vector<32x4xf32>, vector<8x4xf32> -> vector<8x4xf32>
    %c1_26 = arith.constant 1 : index
    %c0_27 = arith.constant 0 : index
    %c0_28 = arith.constant 0 : index
    %33 = vector.load %arg4[%c1_26, %c0_27, %c0_28] : memref<8x32x4xf32, #tpu.memory_space<vmem>>, vector<1x32x4xf32>
    %34 = vector.shape_cast %33 : vector<1x32x4xf32> to vector<32x4xf32>
    %cst_29 = arith.constant dense<0.000000e+00> : vector<8x4xf32>
    %35 = tpu.matmul %1, %34, %cst_29 {dimension_numbers = #tpu.dot_dimension_numbers<[1], [0], [0], [1], [0, 0, 1, 1], [], []>} : vector<8x32xf32>, vector<32x4xf32>, vector<8x4xf32> -> vector<8x4xf32>
    %cst_30 = arith.constant dense<0.000000e+00> : vector<8x8xf32>
    %36 = tpu.matmul %29, %32, %cst_30 {dimension_numbers = #tpu.dot_dimension_numbers<[1], [1], [0], [0], [0, 0, 1, 0], [], []>} : vector<8x4xf32>, vector<8x4xf32>, vector<8x8xf32> -> vector<8x8xf32>
    %cst_31 = arith.constant dense<0xFF800000> : vector<8xf32>
    %37 = vector.multi_reduction <maximumf>, %36, %cst_31 [1] : vector<8x8xf32> to vector<8xf32>
    %38 = vector.shape_cast %37 : vector<8xf32> to vector<8x1xf32>
    %39 = vector.broadcast %38 : vector<8x1xf32> to vector<8x8xf32>
    %40 = arith.subf %36, %39 : vector<8x8xf32>
    %41 = math.exp %40 : vector<8x8xf32>
    %cst_32 = arith.constant dense<0.000000e+00> : vector<8xf32>
    %42 = vector.multi_reduction <add>, %41, %cst_32 [1] : vector<8x8xf32> to vector<8xf32>
    %43 = vector.shape_cast %42 : vector<8xf32> to vector<8x1xf32>
    %44 = tpu.reciprocal %43 {approx = true} : vector<8x1xf32> -> vector<8x1xf32>
    %45 = vector.broadcast %44 : vector<8x1xf32> to vector<8x8xf32>
    %46 = arith.mulf %41, %45 : vector<8x8xf32>
    %cst_33 = arith.constant dense<0.000000e+00> : vector<8x4xf32>
    %47 = tpu.matmul %46, %35, %cst_33 {dimension_numbers = #tpu.dot_dimension_numbers<[1], [0], [0], [1], [0, 0, 1, 1], [], []>} : vector<8x8xf32>, vector<8x4xf32>, vector<8x4xf32> -> vector<8x4xf32>
    %c2 = arith.constant 2 : index
    %c0_34 = arith.constant 0 : index
    %c0_35 = arith.constant 0 : index
    %48 = vector.load %arg2[%c2, %c0_34, %c0_35] : memref<8x32x4xf32, #tpu.memory_space<vmem>>, vector<1x32x4xf32>
    %49 = vector.shape_cast %48 : vector<1x32x4xf32> to vector<32x4xf32>
    %cst_36 = arith.constant dense<0.000000e+00> : vector<8x4xf32>
    %50 = tpu.matmul %1, %49, %cst_36 {dimension_numbers = #tpu.dot_dimension_numbers<[1], [0], [0], [1], [0, 0, 1, 1], [], []>} : vector<8x32xf32>, vector<32x4xf32>, vector<8x4xf32> -> vector<8x4xf32>
    %cst_37 = arith.constant 5.000000e-01 : f32
    %51 = vector.broadcast %cst_37 : f32 to vector<8x4xf32>
    %52 = arith.mulf %50, %51 : vector<8x4xf32>
    %c2_38 = arith.constant 2 : index
    %c0_39 = arith.constant 0 : index
    %c0_40 = arith.constant 0 : index
    %53 = vector.load %arg3[%c2_38, %c0_39, %c0_40] : memref<8x32x4xf32, #tpu.memory_space<vmem>>, vector<1x32x4xf32>
    %54 = vector.shape_cast %53 : vector<1x32x4xf32> to vector<32x4xf32>
    %cst_41 = arith.constant dense<0.000000e+00> : vector<8x4xf32>
    %55 = tpu.matmul %1, %54, %cst_41 {dimension_numbers = #tpu.dot_dimension_numbers<[1], [0], [0], [1], [0, 0, 1, 1], [], []>} : vector<8x32xf32>, vector<32x4xf32>, vector<8x4xf32> -> vector<8x4xf32>
    %c2_42 = arith.constant 2 : index
    %c0_43 = arith.constant 0 : index
    %c0_44 = arith.constant 0 : index
    %56 = vector.load %arg4[%c2_42, %c0_43, %c0_44] : memref<8x32x4xf32, #tpu.memory_space<vmem>>, vector<1x32x4xf32>
    %57 = vector.shape_cast %56 : vector<1x32x4xf32> to vector<32x4xf32>
    %cst_45 = arith.constant dense<0.000000e+00> : vector<8x4xf32>
    %58 = tpu.matmul %1, %57, %cst_45 {dimension_numbers = #tpu.dot_dimension_numbers<[1], [0], [0], [1], [0, 0, 1, 1], [], []>} : vector<8x32xf32>, vector<32x4xf32>, vector<8x4xf32> -> vector<8x4xf32>
    %cst_46 = arith.constant dense<0.000000e+00> : vector<8x8xf32>
    %59 = tpu.matmul %52, %55, %cst_46 {dimension_numbers = #tpu.dot_dimension_numbers<[1], [1], [0], [0], [0, 0, 1, 0], [], []>} : vector<8x4xf32>, vector<8x4xf32>, vector<8x8xf32> -> vector<8x8xf32>
    %cst_47 = arith.constant dense<0xFF800000> : vector<8xf32>
    %60 = vector.multi_reduction <maximumf>, %59, %cst_47 [1] : vector<8x8xf32> to vector<8xf32>
    %61 = vector.shape_cast %60 : vector<8xf32> to vector<8x1xf32>
    %62 = vector.broadcast %61 : vector<8x1xf32> to vector<8x8xf32>
    %63 = arith.subf %59, %62 : vector<8x8xf32>
    %64 = math.exp %63 : vector<8x8xf32>
    %cst_48 = arith.constant dense<0.000000e+00> : vector<8xf32>
    %65 = vector.multi_reduction <add>, %64, %cst_48 [1] : vector<8x8xf32> to vector<8xf32>
    %66 = vector.shape_cast %65 : vector<8xf32> to vector<8x1xf32>
    %67 = tpu.reciprocal %66 {approx = true} : vector<8x1xf32> -> vector<8x1xf32>
    %68 = vector.broadcast %67 : vector<8x1xf32> to vector<8x8xf32>
    %69 = arith.mulf %64, %68 : vector<8x8xf32>
    %cst_49 = arith.constant dense<0.000000e+00> : vector<8x4xf32>
    %70 = tpu.matmul %69, %58, %cst_49 {dimension_numbers = #tpu.dot_dimension_numbers<[1], [0], [0], [1], [0, 0, 1, 1], [], []>} : vector<8x8xf32>, vector<8x4xf32>, vector<8x4xf32> -> vector<8x4xf32>
    %c3 = arith.constant 3 : index
    %c0_50 = arith.constant 0 : index
    %c0_51 = arith.constant 0 : index
    %71 = vector.load %arg2[%c3, %c0_50, %c0_51] : memref<8x32x4xf32, #tpu.memory_space<vmem>>, vector<1x32x4xf32>
    %72 = vector.shape_cast %71 : vector<1x32x4xf32> to vector<32x4xf32>
    %cst_52 = arith.constant dense<0.000000e+00> : vector<8x4xf32>
    %73 = tpu.matmul %1, %72, %cst_52 {dimension_numbers = #tpu.dot_dimension_numbers<[1], [0], [0], [1], [0, 0, 1, 1], [], []>} : vector<8x32xf32>, vector<32x4xf32>, vector<8x4xf32> -> vector<8x4xf32>
    %cst_53 = arith.constant 5.000000e-01 : f32
    %74 = vector.broadcast %cst_53 : f32 to vector<8x4xf32>
    %75 = arith.mulf %73, %74 : vector<8x4xf32>
    %c3_54 = arith.constant 3 : index
    %c0_55 = arith.constant 0 : index
    %c0_56 = arith.constant 0 : index
    %76 = vector.load %arg3[%c3_54, %c0_55, %c0_56] : memref<8x32x4xf32, #tpu.memory_space<vmem>>, vector<1x32x4xf32>
    %77 = vector.shape_cast %76 : vector<1x32x4xf32> to vector<32x4xf32>
    %cst_57 = arith.constant dense<0.000000e+00> : vector<8x4xf32>
    %78 = tpu.matmul %1, %77, %cst_57 {dimension_numbers = #tpu.dot_dimension_numbers<[1], [0], [0], [1], [0, 0, 1, 1], [], []>} : vector<8x32xf32>, vector<32x4xf32>, vector<8x4xf32> -> vector<8x4xf32>
    %c3_58 = arith.constant 3 : index
    %c0_59 = arith.constant 0 : index
    %c0_60 = arith.constant 0 : index
    %79 = vector.load %arg4[%c3_58, %c0_59, %c0_60] : memref<8x32x4xf32, #tpu.memory_space<vmem>>, vector<1x32x4xf32>
    %80 = vector.shape_cast %79 : vector<1x32x4xf32> to vector<32x4xf32>
    %cst_61 = arith.constant dense<0.000000e+00> : vector<8x4xf32>
    %81 = tpu.matmul %1, %80, %cst_61 {dimension_numbers = #tpu.dot_dimension_numbers<[1], [0], [0], [1], [0, 0, 1, 1], [], []>} : vector<8x32xf32>, vector<32x4xf32>, vector<8x4xf32> -> vector<8x4xf32>
    %cst_62 = arith.constant dense<0.000000e+00> : vector<8x8xf32>
    %82 = tpu.matmul %75, %78, %cst_62 {dimension_numbers = #tpu.dot_dimension_numbers<[1], [1], [0], [0], [0, 0, 1, 0], [], []>} : vector<8x4xf32>, vector<8x4xf32>, vector<8x8xf32> -> vector<8x8xf32>
    %cst_63 = arith.constant dense<0xFF800000> : vector<8xf32>
    %83 = vector.multi_reduction <maximumf>, %82, %cst_63 [1] : vector<8x8xf32> to vector<8xf32>
    %84 = vector.shape_cast %83 : vector<8xf32> to vector<8x1xf32>
    %85 = vector.broadcast %84 : vector<8x1xf32> to vector<8x8xf32>
    %86 = arith.subf %82, %85 : vector<8x8xf32>
    %87 = math.exp %86 : vector<8x8xf32>
    %cst_64 = arith.constant dense<0.000000e+00> : vector<8xf32>
    %88 = vector.multi_reduction <add>, %87, %cst_64 [1] : vector<8x8xf32> to vector<8xf32>
    %89 = vector.shape_cast %88 : vector<8xf32> to vector<8x1xf32>
    %90 = tpu.reciprocal %89 {approx = true} : vector<8x1xf32> -> vector<8x1xf32>
    %91 = vector.broadcast %90 : vector<8x1xf32> to vector<8x8xf32>
    %92 = arith.mulf %87, %91 : vector<8x8xf32>
    %cst_65 = arith.constant dense<0.000000e+00> : vector<8x4xf32>
    %93 = tpu.matmul %92, %81, %cst_65 {dimension_numbers = #tpu.dot_dimension_numbers<[1], [0], [0], [1], [0, 0, 1, 1], [], []>} : vector<8x8xf32>, vector<8x4xf32>, vector<8x4xf32> -> vector<8x4xf32>
    %c4 = arith.constant 4 : index
    %c0_66 = arith.constant 0 : index
    %c0_67 = arith.constant 0 : index
    %94 = vector.load %arg2[%c4, %c0_66, %c0_67] : memref<8x32x4xf32, #tpu.memory_space<vmem>>, vector<1x32x4xf32>
    %95 = vector.shape_cast %94 : vector<1x32x4xf32> to vector<32x4xf32>
    %cst_68 = arith.constant dense<0.000000e+00> : vector<8x4xf32>
    %96 = tpu.matmul %1, %95, %cst_68 {dimension_numbers = #tpu.dot_dimension_numbers<[1], [0], [0], [1], [0, 0, 1, 1], [], []>} : vector<8x32xf32>, vector<32x4xf32>, vector<8x4xf32> -> vector<8x4xf32>
    %cst_69 = arith.constant 5.000000e-01 : f32
    %97 = vector.broadcast %cst_69 : f32 to vector<8x4xf32>
    %98 = arith.mulf %96, %97 : vector<8x4xf32>
    %c4_70 = arith.constant 4 : index
    %c0_71 = arith.constant 0 : index
    %c0_72 = arith.constant 0 : index
    %99 = vector.load %arg3[%c4_70, %c0_71, %c0_72] : memref<8x32x4xf32, #tpu.memory_space<vmem>>, vector<1x32x4xf32>
    %100 = vector.shape_cast %99 : vector<1x32x4xf32> to vector<32x4xf32>
    %cst_73 = arith.constant dense<0.000000e+00> : vector<8x4xf32>
    %101 = tpu.matmul %1, %100, %cst_73 {dimension_numbers = #tpu.dot_dimension_numbers<[1], [0], [0], [1], [0, 0, 1, 1], [], []>} : vector<8x32xf32>, vector<32x4xf32>, vector<8x4xf32> -> vector<8x4xf32>
    %c4_74 = arith.constant 4 : index
    %c0_75 = arith.constant 0 : index
    %c0_76 = arith.constant 0 : index
    %102 = vector.load %arg4[%c4_74, %c0_75, %c0_76] : memref<8x32x4xf32, #tpu.memory_space<vmem>>, vector<1x32x4xf32>
    %103 = vector.shape_cast %102 : vector<1x32x4xf32> to vector<32x4xf32>
    %cst_77 = arith.constant dense<0.000000e+00> : vector<8x4xf32>
    %104 = tpu.matmul %1, %103, %cst_77 {dimension_numbers = #tpu.dot_dimension_numbers<[1], [0], [0], [1], [0, 0, 1, 1], [], []>} : vector<8x32xf32>, vector<32x4xf32>, vector<8x4xf32> -> vector<8x4xf32>
    %cst_78 = arith.constant dense<0.000000e+00> : vector<8x8xf32>
    %105 = tpu.matmul %98, %101, %cst_78 {dimension_numbers = #tpu.dot_dimension_numbers<[1], [1], [0], [0], [0, 0, 1, 0], [], []>} : vector<8x4xf32>, vector<8x4xf32>, vector<8x8xf32> -> vector<8x8xf32>
    %cst_79 = arith.constant dense<0xFF800000> : vector<8xf32>
    %106 = vector.multi_reduction <maximumf>, %105, %cst_79 [1] : vector<8x8xf32> to vector<8xf32>
    %107 = vector.shape_cast %106 : vector<8xf32> to vector<8x1xf32>
    %108 = vector.broadcast %107 : vector<8x1xf32> to vector<8x8xf32>
    %109 = arith.subf %105, %108 : vector<8x8xf32>
    %110 = math.exp %109 : vector<8x8xf32>
    %cst_80 = arith.constant dense<0.000000e+00> : vector<8xf32>
    %111 = vector.multi_reduction <add>, %110, %cst_80 [1] : vector<8x8xf32> to vector<8xf32>
    %112 = vector.shape_cast %111 : vector<8xf32> to vector<8x1xf32>
    %113 = tpu.reciprocal %112 {approx = true} : vector<8x1xf32> -> vector<8x1xf32>
    %114 = vector.broadcast %113 : vector<8x1xf32> to vector<8x8xf32>
    %115 = arith.mulf %110, %114 : vector<8x8xf32>
    %cst_81 = arith.constant dense<0.000000e+00> : vector<8x4xf32>
    %116 = tpu.matmul %115, %104, %cst_81 {dimension_numbers = #tpu.dot_dimension_numbers<[1], [0], [0], [1], [0, 0, 1, 1], [], []>} : vector<8x8xf32>, vector<8x4xf32>, vector<8x4xf32> -> vector<8x4xf32>
    %c5 = arith.constant 5 : index
    %c0_82 = arith.constant 0 : index
    %c0_83 = arith.constant 0 : index
    %117 = vector.load %arg2[%c5, %c0_82, %c0_83] : memref<8x32x4xf32, #tpu.memory_space<vmem>>, vector<1x32x4xf32>
    %118 = vector.shape_cast %117 : vector<1x32x4xf32> to vector<32x4xf32>
    %cst_84 = arith.constant dense<0.000000e+00> : vector<8x4xf32>
    %119 = tpu.matmul %1, %118, %cst_84 {dimension_numbers = #tpu.dot_dimension_numbers<[1], [0], [0], [1], [0, 0, 1, 1], [], []>} : vector<8x32xf32>, vector<32x4xf32>, vector<8x4xf32> -> vector<8x4xf32>
    %cst_85 = arith.constant 5.000000e-01 : f32
    %120 = vector.broadcast %cst_85 : f32 to vector<8x4xf32>
    %121 = arith.mulf %119, %120 : vector<8x4xf32>
    %c5_86 = arith.constant 5 : index
    %c0_87 = arith.constant 0 : index
    %c0_88 = arith.constant 0 : index
    %122 = vector.load %arg3[%c5_86, %c0_87, %c0_88] : memref<8x32x4xf32, #tpu.memory_space<vmem>>, vector<1x32x4xf32>
    %123 = vector.shape_cast %122 : vector<1x32x4xf32> to vector<32x4xf32>
    %cst_89 = arith.constant dense<0.000000e+00> : vector<8x4xf32>
    %124 = tpu.matmul %1, %123, %cst_89 {dimension_numbers = #tpu.dot_dimension_numbers<[1], [0], [0], [1], [0, 0, 1, 1], [], []>} : vector<8x32xf32>, vector<32x4xf32>, vector<8x4xf32> -> vector<8x4xf32>
    %c5_90 = arith.constant 5 : index
    %c0_91 = arith.constant 0 : index
    %c0_92 = arith.constant 0 : index
    %125 = vector.load %arg4[%c5_90, %c0_91, %c0_92] : memref<8x32x4xf32, #tpu.memory_space<vmem>>, vector<1x32x4xf32>
    %126 = vector.shape_cast %125 : vector<1x32x4xf32> to vector<32x4xf32>
    %cst_93 = arith.constant dense<0.000000e+00> : vector<8x4xf32>
    %127 = tpu.matmul %1, %126, %cst_93 {dimension_numbers = #tpu.dot_dimension_numbers<[1], [0], [0], [1], [0, 0, 1, 1], [], []>} : vector<8x32xf32>, vector<32x4xf32>, vector<8x4xf32> -> vector<8x4xf32>
    %cst_94 = arith.constant dense<0.000000e+00> : vector<8x8xf32>
    %128 = tpu.matmul %121, %124, %cst_94 {dimension_numbers = #tpu.dot_dimension_numbers<[1], [1], [0], [0], [0, 0, 1, 0], [], []>} : vector<8x4xf32>, vector<8x4xf32>, vector<8x8xf32> -> vector<8x8xf32>
    %cst_95 = arith.constant dense<0xFF800000> : vector<8xf32>
    %129 = vector.multi_reduction <maximumf>, %128, %cst_95 [1] : vector<8x8xf32> to vector<8xf32>
    %130 = vector.shape_cast %129 : vector<8xf32> to vector<8x1xf32>
    %131 = vector.broadcast %130 : vector<8x1xf32> to vector<8x8xf32>
    %132 = arith.subf %128, %131 : vector<8x8xf32>
    %133 = math.exp %132 : vector<8x8xf32>
    %cst_96 = arith.constant dense<0.000000e+00> : vector<8xf32>
    %134 = vector.multi_reduction <add>, %133, %cst_96 [1] : vector<8x8xf32> to vector<8xf32>
    %135 = vector.shape_cast %134 : vector<8xf32> to vector<8x1xf32>
    %136 = tpu.reciprocal %135 {approx = true} : vector<8x1xf32> -> vector<8x1xf32>
    %137 = vector.broadcast %136 : vector<8x1xf32> to vector<8x8xf32>
    %138 = arith.mulf %133, %137 : vector<8x8xf32>
    %cst_97 = arith.constant dense<0.000000e+00> : vector<8x4xf32>
    %139 = tpu.matmul %138, %127, %cst_97 {dimension_numbers = #tpu.dot_dimension_numbers<[1], [0], [0], [1], [0, 0, 1, 1], [], []>} : vector<8x8xf32>, vector<8x4xf32>, vector<8x4xf32> -> vector<8x4xf32>
    %c6 = arith.constant 6 : index
    %c0_98 = arith.constant 0 : index
    %c0_99 = arith.constant 0 : index
    %140 = vector.load %arg2[%c6, %c0_98, %c0_99] : memref<8x32x4xf32, #tpu.memory_space<vmem>>, vector<1x32x4xf32>
    %141 = vector.shape_cast %140 : vector<1x32x4xf32> to vector<32x4xf32>
    %cst_100 = arith.constant dense<0.000000e+00> : vector<8x4xf32>
    %142 = tpu.matmul %1, %141, %cst_100 {dimension_numbers = #tpu.dot_dimension_numbers<[1], [0], [0], [1], [0, 0, 1, 1], [], []>} : vector<8x32xf32>, vector<32x4xf32>, vector<8x4xf32> -> vector<8x4xf32>
    %cst_101 = arith.constant 5.000000e-01 : f32
    %143 = vector.broadcast %cst_101 : f32 to vector<8x4xf32>
    %144 = arith.mulf %142, %143 : vector<8x4xf32>
    %c6_102 = arith.constant 6 : index
    %c0_103 = arith.constant 0 : index
    %c0_104 = arith.constant 0 : index
    %145 = vector.load %arg3[%c6_102, %c0_103, %c0_104] : memref<8x32x4xf32, #tpu.memory_space<vmem>>, vector<1x32x4xf32>
    %146 = vector.shape_cast %145 : vector<1x32x4xf32> to vector<32x4xf32>
    %cst_105 = arith.constant dense<0.000000e+00> : vector<8x4xf32>
    %147 = tpu.matmul %1, %146, %cst_105 {dimension_numbers = #tpu.dot_dimension_numbers<[1], [0], [0], [1], [0, 0, 1, 1], [], []>} : vector<8x32xf32>, vector<32x4xf32>, vector<8x4xf32> -> vector<8x4xf32>
    %c6_106 = arith.constant 6 : index
    %c0_107 = arith.constant 0 : index
    %c0_108 = arith.constant 0 : index
    %148 = vector.load %arg4[%c6_106, %c0_107, %c0_108] : memref<8x32x4xf32, #tpu.memory_space<vmem>>, vector<1x32x4xf32>
    %149 = vector.shape_cast %148 : vector<1x32x4xf32> to vector<32x4xf32>
    %cst_109 = arith.constant dense<0.000000e+00> : vector<8x4xf32>
    %150 = tpu.matmul %1, %149, %cst_109 {dimension_numbers = #tpu.dot_dimension_numbers<[1], [0], [0], [1], [0, 0, 1, 1], [], []>} : vector<8x32xf32>, vector<32x4xf32>, vector<8x4xf32> -> vector<8x4xf32>
    %cst_110 = arith.constant dense<0.000000e+00> : vector<8x8xf32>
    %151 = tpu.matmul %144, %147, %cst_110 {dimension_numbers = #tpu.dot_dimension_numbers<[1], [1], [0], [0], [0, 0, 1, 0], [], []>} : vector<8x4xf32>, vector<8x4xf32>, vector<8x8xf32> -> vector<8x8xf32>
    %cst_111 = arith.constant dense<0xFF800000> : vector<8xf32>
    %152 = vector.multi_reduction <maximumf>, %151, %cst_111 [1] : vector<8x8xf32> to vector<8xf32>
    %153 = vector.shape_cast %152 : vector<8xf32> to vector<8x1xf32>
    %154 = vector.broadcast %153 : vector<8x1xf32> to vector<8x8xf32>
    %155 = arith.subf %151, %154 : vector<8x8xf32>
    %156 = math.exp %155 : vector<8x8xf32>
    %cst_112 = arith.constant dense<0.000000e+00> : vector<8xf32>
    %157 = vector.multi_reduction <add>, %156, %cst_112 [1] : vector<8x8xf32> to vector<8xf32>
    %158 = vector.shape_cast %157 : vector<8xf32> to vector<8x1xf32>
    %159 = tpu.reciprocal %158 {approx = true} : vector<8x1xf32> -> vector<8x1xf32>
    %160 = vector.broadcast %159 : vector<8x1xf32> to vector<8x8xf32>
    %161 = arith.mulf %156, %160 : vector<8x8xf32>
    %cst_113 = arith.constant dense<0.000000e+00> : vector<8x4xf32>
    %162 = tpu.matmul %161, %150, %cst_113 {dimension_numbers = #tpu.dot_dimension_numbers<[1], [0], [0], [1], [0, 0, 1, 1], [], []>} : vector<8x8xf32>, vector<8x4xf32>, vector<8x4xf32> -> vector<8x4xf32>
    %c7 = arith.constant 7 : index
    %c0_114 = arith.constant 0 : index
    %c0_115 = arith.constant 0 : index
    %163 = vector.load %arg2[%c7, %c0_114, %c0_115] : memref<8x32x4xf32, #tpu.memory_space<vmem>>, vector<1x32x4xf32>
    %164 = vector.shape_cast %163 : vector<1x32x4xf32> to vector<32x4xf32>
    %cst_116 = arith.constant dense<0.000000e+00> : vector<8x4xf32>
    %165 = tpu.matmul %1, %164, %cst_116 {dimension_numbers = #tpu.dot_dimension_numbers<[1], [0], [0], [1], [0, 0, 1, 1], [], []>} : vector<8x32xf32>, vector<32x4xf32>, vector<8x4xf32> -> vector<8x4xf32>
    %cst_117 = arith.constant 5.000000e-01 : f32
    %166 = vector.broadcast %cst_117 : f32 to vector<8x4xf32>
    %167 = arith.mulf %165, %166 : vector<8x4xf32>
    %c7_118 = arith.constant 7 : index
    %c0_119 = arith.constant 0 : index
    %c0_120 = arith.constant 0 : index
    %168 = vector.load %arg3[%c7_118, %c0_119, %c0_120] : memref<8x32x4xf32, #tpu.memory_space<vmem>>, vector<1x32x4xf32>
    %169 = vector.shape_cast %168 : vector<1x32x4xf32> to vector<32x4xf32>
    %cst_121 = arith.constant dense<0.000000e+00> : vector<8x4xf32>
    %170 = tpu.matmul %1, %169, %cst_121 {dimension_numbers = #tpu.dot_dimension_numbers<[1], [0], [0], [1], [0, 0, 1, 1], [], []>} : vector<8x32xf32>, vector<32x4xf32>, vector<8x4xf32> -> vector<8x4xf32>
    %c7_122 = arith.constant 7 : index
    %c0_123 = arith.constant 0 : index
    %c0_124 = arith.constant 0 : index
    %171 = vector.load %arg4[%c7_122, %c0_123, %c0_124] : memref<8x32x4xf32, #tpu.memory_space<vmem>>, vector<1x32x4xf32>
    %172 = vector.shape_cast %171 : vector<1x32x4xf32> to vector<32x4xf32>
    %cst_125 = arith.constant dense<0.000000e+00> : vector<8x4xf32>
    %173 = tpu.matmul %1, %172, %cst_125 {dimension_numbers = #tpu.dot_dimension_numbers<[1], [0], [0], [1], [0, 0, 1, 1], [], []>} : vector<8x32xf32>, vector<32x4xf32>, vector<8x4xf32> -> vector<8x4xf32>
    %cst_126 = arith.constant dense<0.000000e+00> : vector<8x8xf32>
    %174 = tpu.matmul %167, %170, %cst_126 {dimension_numbers = #tpu.dot_dimension_numbers<[1], [1], [0], [0], [0, 0, 1, 0], [], []>} : vector<8x4xf32>, vector<8x4xf32>, vector<8x8xf32> -> vector<8x8xf32>
    %cst_127 = arith.constant dense<0xFF800000> : vector<8xf32>
    %175 = vector.multi_reduction <maximumf>, %174, %cst_127 [1] : vector<8x8xf32> to vector<8xf32>
    %176 = vector.shape_cast %175 : vector<8xf32> to vector<8x1xf32>
    %177 = vector.broadcast %176 : vector<8x1xf32> to vector<8x8xf32>
    %178 = arith.subf %174, %177 : vector<8x8xf32>
    %179 = math.exp %178 : vector<8x8xf32>
    %cst_128 = arith.constant dense<0.000000e+00> : vector<8xf32>
    %180 = vector.multi_reduction <add>, %179, %cst_128 [1] : vector<8x8xf32> to vector<8xf32>
    %181 = vector.shape_cast %180 : vector<8xf32> to vector<8x1xf32>
    %182 = tpu.reciprocal %181 {approx = true} : vector<8x1xf32> -> vector<8x1xf32>
    %183 = vector.broadcast %182 : vector<8x1xf32> to vector<8x8xf32>
    %184 = arith.mulf %179, %183 : vector<8x8xf32>
    %cst_129 = arith.constant dense<0.000000e+00> : vector<8x4xf32>
    %185 = tpu.matmul %184, %173, %cst_129 {dimension_numbers = #tpu.dot_dimension_numbers<[1], [0], [0], [1], [0, 0, 1, 1], [], []>} : vector<8x8xf32>, vector<8x4xf32>, vector<8x4xf32> -> vector<8x4xf32>
    %186 = tpu.concatenate %24, %47, %70, %93, %116, %139, %162, %185 in 1 : vector<8x4xf32>, vector<8x4xf32>, vector<8x4xf32>, vector<8x4xf32>, vector<8x4xf32>, vector<8x4xf32>, vector<8x4xf32>, vector<8x4xf32> -> vector<8x32xf32>
    %c0_130 = arith.constant 0 : index
    %c0_131 = arith.constant 0 : index
    %187 = vector.load %arg5[%c0_130, %c0_131] : memref<32x32xf32, #tpu.memory_space<vmem>>, vector<32x32xf32>
    %cst_132 = arith.constant dense<0.000000e+00> : vector<8x32xf32>
    %188 = tpu.matmul %186, %187, %cst_132 {dimension_numbers = #tpu.dot_dimension_numbers<[1], [0], [0], [1], [0, 0, 1, 1], [], []>} : vector<8x32xf32>, vector<32x32xf32>, vector<8x32xf32> -> vector<8x32xf32>
    %c0_133 = arith.constant 0 : index
    %c0_134 = arith.constant 0 : index
    %189 = vector.load %arg6[%c0_133, %c0_134] : memref<1x32xf32, #tpu.memory_space<vmem>>, vector<1x32xf32>
    %190 = vector.broadcast %189 : vector<1x32xf32> to vector<8x32xf32>
    %191 = arith.addf %188, %190 : vector<8x32xf32>
    %c0_135 = arith.constant 0 : index
    %c0_136 = arith.constant 0 : index
    %c0_137 = arith.constant 0 : index
    %192 = vector.load %arg7[%c0_135, %c0_136, %c0_137] : memref<1x8x32xf32, #tpu.memory_space<vmem>>, vector<1x8x32xf32>
    %193 = vector.shape_cast %192 : vector<1x8x32xf32> to vector<8x32xf32>
    %194 = vector.shape_cast %191 : vector<8x32xf32> to vector<1x8x32xf32>
    tpu.vector_store %arg7[%c0_135, %c0_136, %c0_137], %194 {strides = array<i32>} : memref<1x8x32xf32, #tpu.memory_space<vmem>>, vector<1x8x32xf32>,
    return
  }
  func.func @transform_0(%arg0: i32) -> (i32, i32, i32) {
    %c0_i32 = arith.constant 0 : i32
    %c0_i32_0 = arith.constant 0 : i32
    %c0_i32_1 = arith.constant 0 : i32
    return %arg0, %c0_i32, %c0_i32_0 : i32, i32, i32
  }
  func.func @transform_1(%arg0: i32) -> (i32, i32, i32) {
    %c0_i32 = arith.constant 0 : i32
    %c0_i32_0 = arith.constant 0 : i32
    %c0_i32_1 = arith.constant 0 : i32
    %c0_i32_2 = arith.constant 0 : i32
    return %c0_i32, %c0_i32_0, %c0_i32_1 : i32, i32, i32
  }
  func.func @transform_2(%arg0: i32) -> (i32, i32, i32) {
    %c0_i32 = arith.constant 0 : i32
    %c0_i32_0 = arith.constant 0 : i32
    %c0_i32_1 = arith.constant 0 : i32
    %c0_i32_2 = arith.constant 0 : i32
    return %c0_i32, %c0_i32_0, %c0_i32_1 : i32, i32, i32
  }
  func.func @transform_3(%arg0: i32) -> (i32, i32, i32) {
    %c0_i32 = arith.constant 0 : i32
    %c0_i32_0 = arith.constant 0 : i32
    %c0_i32_1 = arith.constant 0 : i32
    %c0_i32_2 = arith.constant 0 : i32
    return %c0_i32, %c0_i32_0, %c0_i32_1 : i32, i32, i32
  }
  func.func @transform_4(%arg0: i32) -> (i32, i32) {
    %c0_i32 = arith.constant 0 : i32
    %c0_i32_0 = arith.constant 0 : i32
    %c0_i32_1 = arith.constant 0 : i32
    return %c0_i32, %c0_i32_0 : i32, i32
  }
  func.func @transform_5(%arg0: i32) -> (i32, i32) {
    %c0_i32 = arith.constant 0 : i32
    %c0_i32_0 = arith.constant 0 : i32
    %c0_i32_1 = arith.constant 0 : i32
    return %c0_i32, %c0_i32_0 : i32, i32
  }
  func.func @transform_6(%arg0: i32) -> (i32, i32, i32) {
    %c0_i32 = arith.constant 0 : i32
    %c0_i32_0 = arith.constant 0 : i32
    %c0_i32_1 = arith.constant 0 : i32
    return %arg0, %c0_i32, %c0_i32_0 : i32, i32, i32
  }
}

</mosaic_0001>

<llo_original>
// kernel: tpu_custom_call.1
$region0: #{tpu_custom_call.1}
  #allocation0 [shape = 'u32[]', space=smem, size = 0x4, offset = 0x4, fixed_abs, tag = 'smem constant byte address 0x4 - core index']
  #allocation1 [shape = 'u32[144,128]{1,0:T(1,128)}', space=vmem, size = 0x12000, scoped, tag = 'internal scratch']
  %s0 = inlined_call_operand.vmem [shape: f32[2,8,32], index: 0, kind: input, shape index: {}]
  %s1 = inlined_call_operand.vmem [shape: f32[8,32,4], index: 1, kind: input, shape index: {}]
  %s2 = inlined_call_operand.vmem [shape: f32[8,32,4], index: 2, kind: input, shape index: {}]
  %s3 = inlined_call_operand.vmem [shape: f32[8,32,4], index: 3, kind: input, shape index: {}]
  %s4 = inlined_call_operand.vmem [shape: f32[32,32], index: 4, kind: input, shape index: {}]
  %s5 = inlined_call_operand.vmem [shape: f32[1,32], index: 5, kind: input, shape index: {}]
  %s6 = inlined_call_operand.hbm [shape: f32[2,8,32], index: 6, kind: output, shape index: {}]
  %s7 = sld [smem:[#allocation0]]
  $region57: #{tpu_custom_call.1} parent=0
    _
  %s9 = ssub.s32 1, %s7
  %s10 = scalar_select 0, %s9, %s7
  $region1: #{tpu_custom_call.1} parent=0
    #allocation2 [shape = 'u8[8192]{0}', space=vmem, size = 0x2000, scoped, tag = 'output window, operand 0']
    #allocation3 [shape = 's32[2]{0}', space=sflag, size = 0x8, scoped, tag = 'scoped memory for tpu_custom_call.1']
    %11 = vsyncpa [#allocation3], 0
    %s12 = scalar_lea.sflag [#allocation3], 1
    %13 = vsyncpa %s12, 0
    loop: start=0, step=1, limit=4
    $region2: #{tpu_custom_call.1} parent=1 // loop_pre_header
      _
    $region3: #{tpu_custom_call.1} parent=1 // loop_header
      %s15 = sphi 0, %s19
      %p16 = scmp.ge.s32.totalorder %s15, 4
      %s25 = sphi 0, %s27
      %s28 = sphi 0, %s25
      %s29 = sphi 0, %s28
      %s45 = sphi 0, %s29
      %s49 = sphi 0, %s49
      %s51 = sphi 0, %s49
      %s52 = sphi 0, %s51
      %s66 = sphi 0, %s52
      %s70 = sphi 0, %s70
      %s72 = sphi 0, %s70
      %s73 = sphi 0, %s72
      %s87 = sphi 0, %s73
      %s91 = sphi 0, %s91
      %s93 = sphi 0, %s91
      %s94 = sphi 0, %s93
      %s108 = sphi 0, %s94
      %s112 = sphi 0, %s112
      %s114 = sphi 0, %s112
      %s115 = sphi 0, %s114
      %s129 = sphi 0, %s115
      %s133 = sphi 0, %s133
      %s135 = sphi 0, %s133
      %s136 = sphi 0, %s135
      %s150 = sphi 0, %s136
      %s156 = sphi 0, %s158
      %s159 = sphi 0, %s156
      %s160 = sphi 0, %s159
      %s176 = sphi 0, %s160
    $region4: #{tpu_custom_call.1} parent=1 // loop_header_branch
      %18 = sbr.rel (%p16) target = $region8
    $region5: #{tpu_custom_call.1} parent=1 // loop_body
      %s20 = ssub.s32 %s15, 1
      %s21 = ssub.s32 %s15, 2
      %s22 = sadd.s32 %s15, 1
      %s23 = ssub.s32 %s15, %s22
      %p24 = scmp.eq.s32.totalorder %s23, 0
      %s26 = sadd.s32 %s25, 1
      %s27 = scalar_select %p24, %s25, %s26
      %p30 = pneg %p24
      %p31 = scmp.eq.s32.totalorder %s15, 1
      %p32 = por %p30, %p31
      %p33 = scmp.ne.s32.totalorder %s25, %s28
      %p34 = scmp.eq.s32.totalorder %s15, 0
      %p35 = por %p33, %p34
      %p36 = scmp.ne.s32.totalorder %s25, %s28
      %p37 = scmp.eq.s32.totalorder %s20, 1
      %p38 = por %p36, %p37
      %p39 = scmp.ne.s32.totalorder %s28, %s29
      %p40 = scmp.eq.s32.totalorder %s20, 0
      %p41 = por %p39, %p40
      %p42 = scmp.ne.s32.totalorder %s28, %s29
      %p43 = scmp.eq.s32.totalorder %s21, 1
      %p44 = por %p42, %p43
      %p46 = scmp.ne.s32.totalorder %s29, %s45
      %p47 = scmp.eq.s32.totalorder %s21, 0
      %p48 = por %p46, %p47
      %s50 = sadd.s32 %s49, 1
      %p53 = scmp.eq.s32.totalorder %s15, 1
      %p54 = scmp.ne.s32.totalorder %s49, %s51
      %p55 = scmp.eq.s32.totalorder %s15, 0
      %p56 = por %p54, %p55
      %p57 = scmp.ne.s32.totalorder %s49, %s51
      %p58 = scmp.eq.s32.totalorder %s20, 1
      %p59 = por %p57, %p58
      %p60 = scmp.ne.s32.totalorder %s51, %s52
      %p61 = scmp.eq.s32.totalorder %s20, 0
      %p62 = por %p60, %p61
      %p63 = scmp.ne.s32.totalorder %s51, %s52
      %p64 = scmp.eq.s32.totalorder %s21, 1
      %p65 = por %p63, %p64
      %p67 = scmp.ne.s32.totalorder %s52, %s66
      %p68 = scmp.eq.s32.totalorder %s21, 0
      %p69 = por %p67, %p68
      %s71 = sadd.s32 %s70, 1
      %p74 = scmp.eq.s32.totalorder %s15, 1
      %p75 = scmp.ne.s32.totalorder %s70, %s72
      %p76 = scmp.eq.s32.totalorder %s15, 0
      %p77 = por %p75, %p76
      %p78 = scmp.ne.s32.totalorder %s70, %s72
      %p79 = scmp.eq.s32.totalorder %s20, 1
      %p80 = por %p78, %p79
      %p81 = scmp.ne.s32.totalorder %s72, %s73
      %p82 = scmp.eq.s32.totalorder %s20, 0
      %p83 = por %p81, %p82
      %p84 = scmp.ne.s32.totalorder %s72, %s73
      %p85 = scmp.eq.s32.totalorder %s21, 1
      %p86 = por %p84, %p85
      %p88 = scmp.ne.s32.totalorder %s73, %s87
      %p89 = scmp.eq.s32.totalorder %s21, 0
      %p90 = por %p88, %p89
      %s92 = sadd.s32 %s91, 1
      %p95 = scmp.eq.s32.totalorder %s15, 1
      %p96 = scmp.ne.s32.totalorder %s91, %s93
      %p97 = scmp.eq.s32.totalorder %s15, 0
      %p98 = por %p96, %p97
      %p99 = scmp.ne.s32.totalorder %s91, %s93
      %p100 = scmp.eq.s32.totalorder %s20, 1
      %p101 = por %p99, %p100
      %p102 = scmp.ne.s32.totalorder %s93, %s94
      %p103 = scmp.eq.s32.totalorder %s20, 0
      %p104 = por %p102, %p103
      %p105 = scmp.ne.s32.totalorder %s93, %s94
      %p106 = scmp.eq.s32.totalorder %s21, 1
      %p107 = por %p105, %p106
      %p109 = scmp.ne.s32.totalorder %s94, %s108
      %p110 = scmp.eq.s32.totalorder %s21, 0
      %p111 = por %p109, %p110
      %s113 = sadd.s32 %s112, 1
      %p116 = scmp.eq.s32.totalorder %s15, 1
      %p117 = scmp.ne.s32.totalorder %s112, %s114
      %p118 = scmp.eq.s32.totalorder %s15, 0
      %p119 = por %p117, %p118
      %p120 = scmp.ne.s32.totalorder %s112, %s114
      %p121 = scmp.eq.s32.totalorder %s20, 1
      %p122 = por %p120, %p121
      %p123 = scmp.ne.s32.totalorder %s114, %s115
      %p124 = scmp.eq.s32.totalorder %s20, 0
      %p125 = por %p123, %p124
      %p126 = scmp.ne.s32.totalorder %s114, %s115
      %p127 = scmp.eq.s32.totalorder %s21, 1
      %p128 = por %p126, %p127
      %p130 = scmp.ne.s32.totalorder %s115, %s129
      %p131 = scmp.eq.s32.totalorder %s21, 0
      %p132 = por %p130, %p131
      %s134 = sadd.s32 %s133, 1
      %p137 = scmp.eq.s32.totalorder %s15, 1
      %p138 = scmp.ne.s32.totalorder %s133, %s135
      %p139 = scmp.eq.s32.totalorder %s15, 0
      %p140 = por %p138, %p139
      %p141 = scmp.ne.s32.totalorder %s133, %s135
      %p142 = scmp.eq.s32.totalorder %s20, 1
      %p143 = por %p141, %p142
      %p144 = scmp.ne.s32.totalorder %s135, %s136
      %p145 = scmp.eq.s32.totalorder %s20, 0
      %p146 = por %p144, %p145
      %p147 = scmp.ne.s32.totalorder %s135, %s136
      %p148 = scmp.eq.s32.totalorder %s21, 1
      %p149 = por %p147, %p148
      %p151 = scmp.ne.s32.totalorder %s136, %s150
      %p152 = scmp.eq.s32.totalorder %s21, 0
      %p153 = por %p151, %p152
      %s154 = ssub.s32 %s15, %s22
      %p155 = scmp.eq.s32.totalorder %s154, 0
      %s157 = sadd.s32 %s156, 1
      %s158 = scalar_select %p155, %s156, %s157
      %p161 = pneg %p155
      %p162 = scmp.eq.s32.totalorder %s15, 1
      %p163 = por %p161, %p162
      %p164 = scmp.ne.s32.totalorder %s156, %s159
      %p165 = scmp.eq.s32.totalorder %s15, 0
      %p166 = por %p164, %p165
      %p167 = scmp.ne.s32.totalorder %s156, %s159
      %p168 = scmp.eq.s32.totalorder %s20, 1
      %p169 = por %p167, %p168
      %p170 = scmp.ne.s32.totalorder %s159, %s160
      %p171 = scmp.eq.s32.totalorder %s20, 0
      %p172 = por %p170, %p171
      %p173 = scmp.ne.s32.totalorder %s159, %s160
      %p174 = scmp.eq.s32.totalorder %s21, 1
      %p175 = por %p173, %p174
      %p177 = scmp.ne.s32.totalorder %s160, %s176
      %p178 = scmp.eq.s32.totalorder %s21, 0
      %p179 = por %p177, %p178
      %p180 = scmp.le.s32.totalorder 1, %s15
      %p181 = scmp.lt.s32.totalorder %s15, 3
      %p182 = pnand %p180, %p181
      %p183 = pneg %p182
      // Predicated region
      $region9: #{tpu_custom_call.1} parent=5 // pred_check
        _
      $region10: #{tpu_custom_call.1} parent=5 // pred_check_branch
        %185 = sbr.rel (%p182) target = $region12
      $region11: #{tpu_custom_call.1} parent=5 // pred_region
        %s186 = ssub.s32 %s15, 1
        // Predicated region
        $region13: #{tpu_custom_call.1} parent=11 // pred_check
          %p187 = pneg %p62
        $region14: #{tpu_custom_call.1} parent=11 // pred_check_branch
          %189 = sbr.rel (%p187) target = $region16
        $region15: #{tpu_custom_call.1} parent=11 // pred_region
          _
        $region16: #{tpu_custom_call.1} parent=11 // pred_fallthru
          _
        // Predicated region
        $region17: #{tpu_custom_call.1} parent=11 // pred_check
          %p190 = pneg %p83
        $region18: #{tpu_custom_call.1} parent=11 // pred_check_branch
          %192 = sbr.rel (%p190) target = $region20
        $region19: #{tpu_custom_call.1} parent=11 // pred_region
          _
        $region20: #{tpu_custom_call.1} parent=11 // pred_fallthru
          _
        // Predicated region
        $region21: #{tpu_custom_call.1} parent=11 // pred_check
          %p193 = pneg %p104
        $region22: #{tpu_custom_call.1} parent=11 // pred_check_branch
          %195 = sbr.rel (%p193) target = $region24
        $region23: #{tpu_custom_call.1} parent=11 // pred_region
          _
        $region24: #{tpu_custom_call.1} parent=11 // pred_fallthru
          _
        // Predicated region
        $region25: #{tpu_custom_call.1} parent=11 // pred_check
          %p196 = pneg %p125
        $region26: #{tpu_custom_call.1} parent=11 // pred_check_branch
          %198 = sbr.rel (%p196) target = $region28
        $region27: #{tpu_custom_call.1} parent=11 // pred_region
          _
        $region28: #{tpu_custom_call.1} parent=11 // pred_fallthru
          _
        // Predicated region
        $region29: #{tpu_custom_call.1} parent=11 // pred_check
          %p199 = pneg %p146
        $region30: #{tpu_custom_call.1} parent=11 // pred_check_branch
          %201 = sbr.rel (%p199) target = $region32
        $region31: #{tpu_custom_call.1} parent=11 // pred_region
          _
        $region32: #{tpu_custom_call.1} parent=11 // pred_fallthru
          _
      $region12: #{tpu_custom_call.1} parent=5 // pred_fallthru
        _
      %p202 = scmp.lt.s32.totalorder %s15, 2
      // Predicated region
      $region33: #{tpu_custom_call.1} parent=5 // pred_check
        %p203 = pneg %p202
      $region34: #{tpu_custom_call.1} parent=5 // pred_check_branch
        %205 = sbr.rel (%p203) target = $region36
      $region35: #{tpu_custom_call.1} parent=5 // pred_region
        // Predicated region
        $region37: #{tpu_custom_call.1} parent=35 // pred_check
          %p206 = pneg %p35
        $region38: #{tpu_custom_call.1} parent=35 // pred_check_branch
          %208 = sbr.rel (%p206) target = $region40
        $region39: #{tpu_custom_call.1} parent=35 // pred_region
          %p209 = scmp.lt.s32.totalorder %s15, 1
          %s210 = scalar_select %p209, %s15, 1
          %s211 = smul.addr %s210, 8
          %s212 = scalar_lea.vmem %s0, %s211
        $region40: #{tpu_custom_call.1} parent=35 // pred_fallthru
          _
      $region36: #{tpu_custom_call.1} parent=5 // pred_fallthru
        _
      %p213 = scmp.le.s32.totalorder 1, %s15
      %p214 = scmp.lt.s32.totalorder %s15, 3
      %p215 = pnand %p213, %p214
      %p216 = pneg %p215
      // Predicated region
      $region41: #{tpu_custom_call.1} parent=5 // pred_check
        _
      $region42: #{tpu_custom_call.1} parent=5 // pred_check_branch
        %218 = sbr.rel (%p215) target = $region44
      $region43: #{tpu_custom_call.1} parent=5 // pred_region
        %s219 = ssub.s32 %s15, 1
        %p220 = scmp.lt.s32.totalorder %s20, 1
        %s221 = scalar_select %p220, %s20, 1
        %s222 = smul.addr %s221, 8
        %s223 = scalar_lea.vmem %s0, %s222
        %p224 = pneg %p41
        %p225 = pneg %p38
        %p226 = pneg %p62
        %p227 = pneg %p59
        %p228 = pneg %p83
        %p229 = pneg %p80
        %p230 = pneg %p104
        %p231 = pneg %p101
        %p232 = pneg %p125
        %p233 = pneg %p122
        %p234 = pneg %p146
        %p235 = pneg %p143
        %p236 = pneg %p172
        %p237 = pneg %p169
        %s238 = sand.u32 %s159, 1
        %s239 = scalar_lea.sflag [#allocation3], %s238
        %s240 = sand.u32 %s159, 1
        %s241 = smul.addr %s240, 8
        %s242 = scalar_lea.vmem [#allocation2], %s241
        %p243 = scmp.lt.s32.totalorder %s20, 1
        %s244 = scalar_select %p243, %s20, 1
        %s245 = smul.addr %s244, 8
        %s246 = scalar_lea.vmem %s0, %s245
        %v247 = vld [vmem:[%s246] sm:$0xff]
        %v248 = vld [vmem:[%s1] sm:$0xff]
        %v249 = vld [vmem:[%s1 + $0x8] sm:$0xff]
        %v250 = vld [vmem:[%s1 + $0x10] sm:$0xff]
        %v251 = vld [vmem:[%s1 + $0x18] sm:$0xff]
        %vm252 = vcmask 261120
        %v254 = vsel %vm252, %v247, 0
        %256 = vmatprep.subr.mxu0 0.0
        %257 = vmatpush1.msra.mxu0 0.0
        %258 = vmatprep.subr.mxu0 0.0
        %259 = vmatpush1.msra.mxu0 0.0
        %260 = vmatprep.subr.mxu0 0.0
        %261 = vmatpush1.msra.mxu0 0.0
        %262 = vmatprep.subr.mxu0 0.0
        %263 = vmatpush1.msra.mxu0 0.0
        %264 = vmatprep.subr.mxu0 0.0
        %265 = vmatpush1.msra.mxu0 0.0
        %266 = vmatprep.subr.mxu0 0.0
        %267 = vmatpush1.msra.mxu0 0.0
        %268 = vmatprep.subr.mxu0 0.0
        %269 = vmatpush1.msra.mxu0 0.0
        %270 = vmatprep.subr.mxu0 0.0
        %271 = vmatpush1.msra.mxu0 0.0
        %272 = vmatprep.subr.mxu0 0.0
        %273 = vmatpush1.msra.mxu0 0.0
        %274 = vmatprep.subr.mxu0 0.0
        %275 = vmatpush1.msra.mxu0 0.0
        %276 = vmatprep.subr.mxu0 0.0
        %277 = vmatpush1.msra.mxu0 0.0
        %278 = vmatprep.subr.mxu0 0.0
        %279 = vmatpush1.msra.mxu0 0.0
        %280 = vmatprep.subr.mxu0 0.0
        %281 = vmatpush1.msra.mxu0 %v251
        %282 = vmatprep.subr.mxu0 0.0
        %283 = vmatpush1.msra.mxu0 %v250
        %284 = vmatprep.subr.mxu0 0.0
        %285 = vmatpush1.msra.mxu0 %v249
        %286 = vmatprep.subr.mxu0 0.0
        %287 = vmatpush1.msra.mxu0 %v248
        %288 = vmatprep.subr.mxu0 0.0
        %289 = vmatpush2.msra.mxu0 0.0
        %290 = vmatprep.subr.mxu0 0.0
        %291 = vmatpush2.msra.mxu0 0.0
        %292 = vmatprep.subr.mxu0 0.0
        %293 = vmatpush2.msra.mxu0 0.0
        %294 = vmatprep.subr.mxu0 0.0
        %295 = vmatpush2.msra.mxu0 0.0
        %296 = vmatprep.subr.mxu0 0.0
        %297 = vmatpush2.msra.mxu0 0.0
        %298 = vmatprep.subr.mxu0 0.0
        %299 = vmatpush2.msra.mxu0 0.0
        %300 = vmatprep.subr.mxu0 0.0
        %301 = vmatpush2.msra.mxu0 0.0
        %302 = vmatprep.subr.mxu0 0.0
        %303 = vmatpush2.msra.mxu0 0.0
        %304 = vmatprep.subr.mxu0 0.0
        %305 = vmatpush2.msra.mxu0 0.0
        %306 = vmatprep.subr.mxu0 0.0
        %307 = vmatpush2.msra.mxu0 0.0
        %308 = vmatprep.subr.mxu0 0.0
        %309 = vmatpush2.msra.mxu0 0.0
        %310 = vmatprep.subr.mxu0 0.0
        %311 = vmatpush2.msra.mxu0 0.0
        %312 = vmatprep.subr.mxu0 0.0
        %313 = vmatpush2.msra.mxu0 0.0
        %314 = vmatprep.subr.mxu0 0.0
        %315 = vmatpush2.msra.mxu0 0.0
        %316 = vmatprep.subr.mxu0 0.0
        %317 = vmatpush2.msra.mxu0 0.0
        %318 = vmatprep.subr.mxu0 0.0
        %319 = vmatpush2.msra.mxu0 0.0
        %320 = vmatprep.mubr.f32.mxu0 0.0
        %321 = vmatmul.mubr.f32.gmra.mxu0 %v254
        %v322 = vpop.f32.mrf.mxu0
        %v323 = vadd.f32 0.0, %v322
        %v324 = vpop.f32.mrf.mxu0
        %325 = vdwg.mxu0
        %v326 = vmul.f32 %v323, 0.5
        %v327 = vld [vmem:[%s2] sm:$0xff]
        %v328 = vld [vmem:[%s2 + $0x8] sm:$0xff]
        %v329 = vld [vmem:[%s2 + $0x10] sm:$0xff]
        %v330 = vld [vmem:[%s2 + $0x18] sm:$0xff]
        %331 = vmatprep.subr.mxu0 0.0
        %332 = vmatpush1.msra.mxu0 0.0
        %333 = vmatprep.subr.mxu0 0.0
        %334 = vmatpush1.msra.mxu0 0.0
        %335 = vmatprep.subr.mxu0 0.0
        %336 = vmatpush1.msra.mxu0 0.0
        %337 = vmatprep.subr.mxu0 0.0
        %338 = vmatpush1.msra.mxu0 0.0
        %339 = vmatprep.subr.mxu0 0.0
        %340 = vmatpush1.msra.mxu0 0.0
        %341 = vmatprep.subr.mxu0 0.0
        %342 = vmatpush1.msra.mxu0 0.0
        %343 = vmatprep.subr.mxu0 0.0
        %344 = vmatpush1.msra.mxu0 0.0
        %345 = vmatprep.subr.mxu0 0.0
        %346 = vmatpush1.msra.mxu0 0.0
        %347 = vmatprep.subr.mxu0 0.0
        %348 = vmatpush1.msra.mxu0 0.0
        %349 = vmatprep.subr.mxu0 0.0
        %350 = vmatpush1.msra.mxu0 0.0
        %351 = vmatprep.subr.mxu0 0.0
        %352 = vmatpush1.msra.mxu0 0.0
        %353 = vmatprep.subr.mxu0 0.0
        %354 = vmatpush1.msra.mxu0 0.0
        %355 = vmatprep.subr.mxu0 0.0
        %356 = vmatpush1.msra.mxu0 %v330
        %357 = vmatprep.subr.mxu0 0.0
        %358 = vmatpush1.msra.mxu0 %v329
        %359 = vmatprep.subr.mxu0 0.0
        %360 = vmatpush1.msra.mxu0 %v328
        %361 = vmatprep.subr.mxu0 0.0
        %362 = vmatpush1.msra.mxu0 %v327
        %363 = vmatprep.subr.mxu0 0.0
        %364 = vmatpush2.msra.mxu0 0.0
        %365 = vmatprep.subr.mxu0 0.0
        %366 = vmatpush2.msra.mxu0 0.0
        %367 = vmatprep.subr.mxu0 0.0
        %368 = vmatpush2.msra.mxu0 0.0
        %369 = vmatprep.subr.mxu0 0.0
        %370 = vmatpush2.msra.mxu0 0.0
        %371 = vmatprep.subr.mxu0 0.0
        %372 = vmatpush2.msra.mxu0 0.0
        %373 = vmatprep.subr.mxu0 0.0
        %374 = vmatpush2.msra.mxu0 0.0
        %375 = vmatprep.subr.mxu0 0.0
        %376 = vmatpush2.msra.mxu0 0.0
        %377 = vmatprep.subr.mxu0 0.0
        %378 = vmatpush2.msra.mxu0 0.0
        %379 = vmatprep.subr.mxu0 0.0
        %380 = vmatpush2.msra.mxu0 0.0
        %381 = vmatprep.subr.mxu0 0.0
        %382 = vmatpush2.msra.mxu0 0.0
        %383 = vmatprep.subr.mxu0 0.0
        %384 = vmatpush2.msra.mxu0 0.0
        %385 = vmatprep.subr.mxu0 0.0
        %386 = vmatpush2.msra.mxu0 0.0
        %387 = vmatprep.subr.mxu0 0.0
        %388 = vmatpush2.msra.mxu0 0.0
        %389 = vmatprep.subr.mxu0 0.0
        %390 = vmatpush2.msra.mxu0 0.0
        %391 = vmatprep.subr.mxu0 0.0
        %392 = vmatpush2.msra.mxu0 0.0
        %393 = vmatprep.subr.mxu0 0.0
        %394 = vmatpush2.msra.mxu0 0.0
        %395 = vmatprep.mubr.f32.mxu0 0.0
        %396 = vmatmul.mubr.f32.gmra.mxu0 %v254
        %v397 = vpop.f32.mrf.mxu0
        %v398 = vadd.f32 0.0, %v397
        %v399 = vpop.f32.mrf.mxu0
        %400 = vdwg.mxu0
        %v401 = vld [vmem:[%s3] sm:$0xff]
        %v402 = vld [vmem:[%s3 + $0x8] sm:$0xff]
        %v403 = vld [vmem:[%s3 + $0x10] sm:$0xff]
        %v404 = vld [vmem:[%s3 + $0x18] sm:$0xff]
        %405 = vmatprep.subr.mxu0 0.0
        %406 = vmatpush1.msra.mxu0 0.0
        %407 = vmatprep.subr.mxu0 0.0
        %408 = vmatpush1.msra.mxu0 0.0
        %409 = vmatprep.subr.mxu0 0.0
        %410 = vmatpush1.msra.mxu0 0.0
        %411 = vmatprep.subr.mxu0 0.0
        %412 = vmatpush1.msra.mxu0 0.0
        %413 = vmatprep.subr.mxu0 0.0
        %414 = vmatpush1.msra.mxu0 0.0
        %415 = vmatprep.subr.mxu0 0.0
        %416 = vmatpush1.msra.mxu0 0.0
        %417 = vmatprep.subr.mxu0 0.0
        %418 = vmatpush1.msra.mxu0 0.0
        %419 = vmatprep.subr.mxu0 0.0
        %420 = vmatpush1.msra.mxu0 0.0
        %421 = vmatprep.subr.mxu0 0.0
        %422 = vmatpush1.msra.mxu0 0.0
        %423 = vmatprep.subr.mxu0 0.0
        %424 = vmatpush1.msra.mxu0 0.0
        %425 = vmatprep.subr.mxu0 0.0
        %426 = vmatpush1.msra.mxu0 0.0
        %427 = vmatprep.subr.mxu0 0.0
        %428 = vmatpush1.msra.mxu0 0.0
        %429 = vmatprep.subr.mxu0 0.0
        %430 = vmatpush1.msra.mxu0 %v404
        %431 = vmatprep.subr.mxu0 0.0
        %432 = vmatpush1.msra.mxu0 %v403
        %433 = vmatprep.subr.mxu0 0.0
        %434 = vmatpush1.msra.mxu0 %v402
        %435 = vmatprep.subr.mxu0 0.0
        %436 = vmatpush1.msra.mxu0 %v401
        %437 = vmatprep.subr.mxu0 0.0
        %438 = vmatpush2.msra.mxu0 0.0
        %439 = vmatprep.subr.mxu0 0.0
        %440 = vmatpush2.msra.mxu0 0.0
        %441 = vmatprep.subr.mxu0 0.0
        %442 = vmatpush2.msra.mxu0 0.0
        %443 = vmatprep.subr.mxu0 0.0
        %444 = vmatpush2.msra.mxu0 0.0
        %445 = vmatprep.subr.mxu0 0.0
        %446 = vmatpush2.msra.mxu0 0.0
        %447 = vmatprep.subr.mxu0 0.0
        %448 = vmatpush2.msra.mxu0 0.0
        %449 = vmatprep.subr.mxu0 0.0
        %450 = vmatpush2.msra.mxu0 0.0
        %451 = vmatprep.subr.mxu0 0.0
        %452 = vmatpush2.msra.mxu0 0.0
        %453 = vmatprep.subr.mxu0 0.0
        %454 = vmatpush2.msra.mxu0 0.0
        %455 = vmatprep.subr.mxu0 0.0
        %456 = vmatpush2.msra.mxu0 0.0
        %457 = vmatprep.subr.mxu0 0.0
        %458 = vmatpush2.msra.mxu0 0.0
        %459 = vmatprep.subr.mxu0 0.0
        %460 = vmatpush2.msra.mxu0 0.0
        %461 = vmatprep.subr.mxu0 0.0
        %462 = vmatpush2.msra.mxu0 0.0
        %463 = vmatprep.subr.mxu0 0.0
        %464 = vmatpush2.msra.mxu0 0.0
        %465 = vmatprep.subr.mxu0 0.0
        %466 = vmatpush2.msra.mxu0 0.0
        %467 = vmatprep.subr.mxu0 0.0
        %468 = vmatpush2.msra.mxu0 0.0
        %469 = vmatprep.mubr.f32.mxu0 0.0
        %470 = vmatmul.mubr.f32.gmra.mxu0 %v254
        %v471 = vpop.f32.mrf.mxu0
        %v472 = vadd.f32 0.0, %v471
        %v473 = vpop.f32.mrf.mxu0
        %474 = vdwg.mxu0
        %vm475 = vcmask 31744
        %v477 = vsel %vm475, %v326, 0
        %v480 = vsel %vm475, %v398, 0
        %482 = vmatprep.subr.mxu0 0.0
        %483 = vmatpush1.xpose.msra.mxu0 0.0
        %484 = vmatprep.subr.mxu0 0.0
        %485 = vmatpush1.xpose.msra.mxu0 0.0
        %486 = vmatprep.subr.mxu0 0.0
        %487 = vmatpush1.xpose.msra.mxu0 0.0
        %488 = vmatprep.subr.mxu0 0.0
        %489 = vmatpush1.xpose.msra.mxu0 0.0
        %490 = vmatprep.subr.mxu0 0.0
        %491 = vmatpush1.xpose.msra.mxu0 0.0
        %492 = vmatprep.subr.mxu0 0.0
        %493 = vmatpush1.xpose.msra.mxu0 0.0
        %494 = vmatprep.subr.mxu0 0.0
        %495 = vmatpush1.xpose.msra.mxu0 0.0
        %496 = vmatprep.subr.mxu0 0.0
        %497 = vmatpush1.xpose.msra.mxu0 0.0
        %498 = vmatprep.subr.mxu0 0.0
        %499 = vmatpush1.xpose.msra.mxu0 0.0
        %500 = vmatprep.subr.mxu0 0.0
        %501 = vmatpush1.xpose.msra.mxu0 0.0
        %502 = vmatprep.subr.mxu0 0.0
        %503 = vmatpush1.xpose.msra.mxu0 0.0
        %504 = vmatprep.subr.mxu0 0.0
        %505 = vmatpush1.xpose.msra.mxu0 0.0
        %506 = vmatprep.subr.mxu0 0.0
        %507 = vmatpush1.xpose.msra.mxu0 0.0
        %508 = vmatprep.subr.mxu0 0.0
        %509 = vmatpush1.xpose.msra.mxu0 0.0
        %510 = vmatprep.subr.mxu0 0.0
        %511 = vmatpush1.xpose.msra.mxu0 0.0
        %512 = vmatprep.subr.mxu0 0.0
        %513 = vmatpush1.xpose.msra.mxu0 %v480
        %514 = vmatprep.subr.mxu0 0.0
        %515 = vmatpush2.xpose.msra.mxu0 0.0
        %516 = vmatprep.subr.mxu0 0.0
        %517 = vmatpush2.xpose.msra.mxu0 0.0
        %518 = vmatprep.subr.mxu0 0.0
        %519 = vmatpush2.xpose.msra.mxu0 0.0
        %520 = vmatprep.subr.mxu0 0.0
        %521 = vmatpush2.xpose.msra.mxu0 0.0
        %522 = vmatprep.subr.mxu0 0.0
        %523 = vmatpush2.xpose.msra.mxu0 0.0
        %524 = vmatprep.subr.mxu0 0.0
        %525 = vmatpush2.xpose.msra.mxu0 0.0
        %526 = vmatprep.subr.mxu0 0.0
        %527 = vmatpush2.xpose.msra.mxu0 0.0
        %528 = vmatprep.subr.mxu0 0.0
        %529 = vmatpush2.xpose.msra.mxu0 0.0
        %530 = vmatprep.subr.mxu0 0.0
        %531 = vmatpush2.xpose.msra.mxu0 0.0
        %532 = vmatprep.subr.mxu0 0.0
        %533 = vmatpush2.xpose.msra.mxu0 0.0
        %534 = vmatprep.subr.mxu0 0.0
        %535 = vmatpush2.xpose.msra.mxu0 0.0
        %536 = vmatprep.subr.mxu0 0.0
        %537 = vmatpush2.xpose.msra.mxu0 0.0
        %538 = vmatprep.subr.mxu0 0.0
        %539 = vmatpush2.xpose.msra.mxu0 0.0
        %540 = vmatprep.subr.mxu0 0.0
        %541 = vmatpush2.xpose.msra.mxu0 0.0
        %542 = vmatprep.subr.mxu0 0.0
        %543 = vmatpush2.xpose.msra.mxu0 0.0
        %544 = vmatprep.subr.mxu0 0.0
        %545 = vmatpush2.xpose.msra.mxu0 0.0
        %546 = vmatprep.mubr.f32.mxu0 0.0
        %547 = vmatmul.mubr.f32.gmra.mxu0 %v477
        %v548 = vpop.f32.mrf.mxu0
        %v549 = vadd.f32 0.0, %v548
        %v550 = vpop.f32.mrf.mxu0
        %551 = vdwg.mxu0
        %vm552 = vcmask 64512
        %v553 = vsel %vm552, %v549, -inf
        %554 = vmax.xlane.f32.xlu0 %v553
        %v555 = vpop.xlane.xlu0 %554
        %v556 = vsub.f32 %v549, %v555
        %v557 = vmul.f32 %v556, 1.442695
        %v558 = vpow.pop %v557
        %v559 = vsel %vm552, %v558, 0.0
        %560 = vadd.xlane.f32.xlu0 %v559
        %v561 = vpop.xlane.xlu0 %560
        %v562 = vrcp.pop %v561
        %v563 = vmul.f32 %v558, %v562
        %v565 = vsel %vm552, %v563, 0
        %567 = vmatprep.subr.mxu0 0.0
        %568 = vmatpush1.msra.mxu0 0.0
        %569 = vmatprep.subr.mxu0 0.0
        %570 = vmatpush1.msra.mxu0 0.0
        %571 = vmatprep.subr.mxu0 0.0
        %572 = vmatpush1.msra.mxu0 0.0
        %573 = vmatprep.subr.mxu0 0.0
        %574 = vmatpush1.msra.mxu0 0.0
        %575 = vmatprep.subr.mxu0 0.0
        %576 = vmatpush1.msra.mxu0 0.0
        %577 = vmatprep.subr.mxu0 0.0
        %578 = vmatpush1.msra.mxu0 0.0
        %579 = vmatprep.subr.mxu0 0.0
        %580 = vmatpush1.msra.mxu0 0.0
        %581 = vmatprep.subr.mxu0 0.0
        %582 = vmatpush1.msra.mxu0 0.0
        %583 = vmatprep.subr.mxu0 0.0
        %584 = vmatpush1.msra.mxu0 0.0
        %585 = vmatprep.subr.mxu0 0.0
        %586 = vmatpush1.msra.mxu0 0.0
        %587 = vmatprep.subr.mxu0 0.0
        %588 = vmatpush1.msra.mxu0 0.0
        %589 = vmatprep.subr.mxu0 0.0
        %590 = vmatpush1.msra.mxu0 0.0
        %591 = vmatprep.subr.mxu0 0.0
        %592 = vmatpush1.msra.mxu0 0.0
        %593 = vmatprep.subr.mxu0 0.0
        %594 = vmatpush1.msra.mxu0 0.0
        %595 = vmatprep.subr.mxu0 0.0
        %596 = vmatpush1.msra.mxu0 0.0
        %597 = vmatprep.subr.mxu0 0.0
        %598 = vmatpush1.msra.mxu0 %v472
        %599 = vmatprep.subr.mxu0 0.0
        %600 = vmatpush2.msra.mxu0 0.0
        %601 = vmatprep.subr.mxu0 0.0
        %602 = vmatpush2.msra.mxu0 0.0
        %603 = vmatprep.subr.mxu0 0.0
        %604 = vmatpush2.msra.mxu0 0.0
        %605 = vmatprep.subr.mxu0 0.0
        %606 = vmatpush2.msra.mxu0 0.0
        %607 = vmatprep.subr.mxu0 0.0
        %608 = vmatpush2.msra.mxu0 0.0
        %609 = vmatprep.subr.mxu0 0.0
        %610 = vmatpush2.msra.mxu0 0.0
        %611 = vmatprep.subr.mxu0 0.0
        %612 = vmatpush2.msra.mxu0 0.0
        %613 = vmatprep.subr.mxu0 0.0
        %614 = vmatpush2.msra.mxu0 0.0
        %615 = vmatprep.subr.mxu0 0.0
        %616 = vmatpush2.msra.mxu0 0.0
        %617 = vmatprep.subr.mxu0 0.0
        %618 = vmatpush2.msra.mxu0 0.0
        %619 = vmatprep.subr.mxu0 0.0
        %620 = vmatpush2.msra.mxu0 0.0
        %621 = vmatprep.subr.mxu0 0.0
        %622 = vmatpush2.msra.mxu0 0.0
        %623 = vmatprep.subr.mxu0 0.0
        %624 = vmatpush2.msra.mxu0 0.0
        %625 = vmatprep.subr.mxu0 0.0
        %626 = vmatpush2.msra.mxu0 0.0
        %627 = vmatprep.subr.mxu0 0.0
        %628 = vmatpush2.msra.mxu0 0.0
        %629 = vmatprep.subr.mxu0 0.0
        %630 = vmatpush2.msra.mxu0 0.0
        %631 = vmatprep.mubr.f32.mxu0 0.0
        %632 = vmatmul.mubr.f32.gmra.mxu0 %v565
        %v633 = vpop.f32.mrf.mxu0
        %v634 = vadd.f32 0.0, %v633
        %v635 = vpop.f32.mrf.mxu0
        %636 = vdwg.mxu0
        %s637 = scalar_lea.vmem %s1, 32
        %v638 = vld [vmem:[%s637] sm:$0xff]
        %v639 = vld [vmem:[%s637 + $0x8] sm:$0xff]
        %v640 = vld [vmem:[%s637 + $0x10] sm:$0xff]
        %v641 = vld [vmem:[%s637 + $0x18] sm:$0xff]
        %642 = vmatprep.subr.mxu0 0.0
        %643 = vmatpush1.msra.mxu0 0.0
        %644 = vmatprep.subr.mxu0 0.0
        %645 = vmatpush1.msra.mxu0 0.0
        %646 = vmatprep.subr.mxu0 0.0
        %647 = vmatpush1.msra.mxu0 0.0
        %648 = vmatprep.subr.mxu0 0.0
        %649 = vmatpush1.msra.mxu0 0.0
        %650 = vmatprep.subr.mxu0 0.0
        %651 = vmatpush1.msra.mxu0 0.0
        %652 = vmatprep.subr.mxu0 0.0
        %653 = vmatpush1.msra.mxu0 0.0
        %654 = vmatprep.subr.mxu0 0.0
        %655 = vmatpush1.msra.mxu0 0.0
        %656 = vmatprep.subr.mxu0 0.0
        %657 = vmatpush1.msra.mxu0 0.0
        %658 = vmatprep.subr.mxu0 0.0
        %659 = vmatpush1.msra.mxu0 0.0
        %660 = vmatprep.subr.mxu0 0.0
        %661 = vmatpush1.msra.mxu0 0.0
        %662 = vmatprep.subr.mxu0 0.0
        %663 = vmatpush1.msra.mxu0 0.0
        %664 = vmatprep.subr.mxu0 0.0
        %665 = vmatpush1.msra.mxu0 0.0
        %666 = vmatprep.subr.mxu0 0.0
        %667 = vmatpush1.msra.mxu0 %v641
        %668 = vmatprep.subr.mxu0 0.0
        %669 = vmatpush1.msra.mxu0 %v640
        %670 = vmatprep.subr.mxu0 0.0
        %671 = vmatpush1.msra.mxu0 %v639
        %672 = vmatprep.subr.mxu0 0.0
        %673 = vmatpush1.msra.mxu0 %v638
        %674 = vmatprep.subr.mxu0 0.0
        %675 = vmatpush2.msra.mxu0 0.0
        %676 = vmatprep.subr.mxu0 0.0
        %677 = vmatpush2.msra.mxu0 0.0
        %678 = vmatprep.subr.mxu0 0.0
        %679 = vmatpush2.msra.mxu0 0.0
        %680 = vmatprep.subr.mxu0 0.0
        %681 = vmatpush2.msra.mxu0 0.0
        %682 = vmatprep.subr.mxu0 0.0
        %683 = vmatpush2.msra.mxu0 0.0
        %684 = vmatprep.subr.mxu0 0.0
        %685 = vmatpush2.msra.mxu0 0.0
        %686 = vmatprep.subr.mxu0 0.0
        %687 = vmatpush2.msra.mxu0 0.0
        %688 = vmatprep.subr.mxu0 0.0
        %689 = vmatpush2.msra.mxu0 0.0
        %690 = vmatprep.subr.mxu0 0.0
        %691 = vmatpush2.msra.mxu0 0.0
        %692 = vmatprep.subr.mxu0 0.0
        %693 = vmatpush2.msra.mxu0 0.0
        %694 = vmatprep.subr.mxu0 0.0
        %695 = vmatpush2.msra.mxu0 0.0
        %696 = vmatprep.subr.mxu0 0.0
        %697 = vmatpush2.msra.mxu0 0.0
        %698 = vmatprep.subr.mxu0 0.0
        %699 = vmatpush2.msra.mxu0 0.0
        %700 = vmatprep.subr.mxu0 0.0
        %701 = vmatpush2.msra.mxu0 0.0
        %702 = vmatprep.subr.mxu0 0.0
        %703 = vmatpush2.msra.mxu0 0.0
        %704 = vmatprep.subr.mxu0 0.0
        %705 = vmatpush2.msra.mxu0 0.0
        %706 = vmatprep.mubr.f32.mxu0 0.0
        %707 = vmatmul.mubr.f32.gmra.mxu0 %v254
        %v708 = vpop.f32.mrf.mxu0
        %v709 = vadd.f32 0.0, %v708
        %v710 = vpop.f32.mrf.mxu0
        %711 = vdwg.mxu0
        %v712 = vmul.f32 %v709, 0.5
        %s713 = scalar_lea.vmem %s2, 32
        %v714 = vld [vmem:[%s713] sm:$0xff]
        %v715 = vld [vmem:[%s713 + $0x8] sm:$0xff]
        %v716 = vld [vmem:[%s713 + $0x10] sm:$0xff]
        %v717 = vld [vmem:[%s713 + $0x18] sm:$0xff]
        %718 = vmatprep.subr.mxu0 0.0
        %719 = vmatpush1.msra.mxu0 0.0
        %720 = vmatprep.subr.mxu0 0.0
        %721 = vmatpush1.msra.mxu0 0.0
        %722 = vmatprep.subr.mxu0 0.0
        %723 = vmatpush1.msra.mxu0 0.0
        %724 = vmatprep.subr.mxu0 0.0
        %725 = vmatpush1.msra.mxu0 0.0
        %726 = vmatprep.subr.mxu0 0.0
        %727 = vmatpush1.msra.mxu0 0.0
        %728 = vmatprep.subr.mxu0 0.0
        %729 = vmatpush1.msra.mxu0 0.0
        %730 = vmatprep.subr.mxu0 0.0
        %731 = vmatpush1.msra.mxu0 0.0
        %732 = vmatprep.subr.mxu0 0.0
        %733 = vmatpush1.msra.mxu0 0.0
        %734 = vmatprep.subr.mxu0 0.0
        %735 = vmatpush1.msra.mxu0 0.0
        %736 = vmatprep.subr.mxu0 0.0
        %737 = vmatpush1.msra.mxu0 0.0
        %738 = vmatprep.subr.mxu0 0.0
        %739 = vmatpush1.msra.mxu0 0.0
        %740 = vmatprep.subr.mxu0 0.0
        %741 = vmatpush1.msra.mxu0 0.0
        %742 = vmatprep.subr.mxu0 0.0
        %743 = vmatpush1.msra.mxu0 %v717
        %744 = vmatprep.subr.mxu0 0.0
        %745 = vmatpush1.msra.mxu0 %v716
        %746 = vmatprep.subr.mxu0 0.0
        %747 = vmatpush1.msra.mxu0 %v715
        %748 = vmatprep.subr.mxu0 0.0
        %749 = vmatpush1.msra.mxu0 %v714
        %750 = vmatprep.subr.mxu0 0.0
        %751 = vmatpush2.msra.mxu0 0.0
        %752 = vmatprep.subr.mxu0 0.0
        %753 = vmatpush2.msra.mxu0 0.0
        %754 = vmatprep.subr.mxu0 0.0
        %755 = vmatpush2.msra.mxu0 0.0
        %756 = vmatprep.subr.mxu0 0.0
        %757 = vmatpush2.msra.mxu0 0.0
        %758 = vmatprep.subr.mxu0 0.0
        %759 = vmatpush2.msra.mxu0 0.0
        %760 = vmatprep.subr.mxu0 0.0
        %761 = vmatpush2.msra.mxu0 0.0
        %762 = vmatprep.subr.mxu0 0.0
        %763 = vmatpush2.msra.mxu0 0.0
        %764 = vmatprep.subr.mxu0 0.0
        %765 = vmatpush2.msra.mxu0 0.0
        %766 = vmatprep.subr.mxu0 0.0
        %767 = vmatpush2.msra.mxu0 0.0
        %768 = vmatprep.subr.mxu0 0.0
        %769 = vmatpush2.msra.mxu0 0.0
        %770 = vmatprep.subr.mxu0 0.0
        %771 = vmatpush2.msra.mxu0 0.0
        %772 = vmatprep.subr.mxu0 0.0
        %773 = vmatpush2.msra.mxu0 0.0
        %774 = vmatprep.subr.mxu0 0.0
        %775 = vmatpush2.msra.mxu0 0.0
        %776 = vmatprep.subr.mxu0 0.0
        %777 = vmatpush2.msra.mxu0 0.0
        %778 = vmatprep.subr.mxu0 0.0
        %779 = vmatpush2.msra.mxu0 0.0
        %780 = vmatprep.subr.mxu0 0.0
        %781 = vmatpush2.msra.mxu0 0.0
        %782 = vmatprep.mubr.f32.mxu0 0.0
        %783 = vmatmul.mubr.f32.gmra.mxu0 %v254
        %v784 = vpop.f32.mrf.mxu0
        %v785 = vadd.f32 0.0, %v784
        %v786 = vpop.f32.mrf.mxu0
        %787 = vdwg.mxu0
        %s788 = scalar_lea.vmem %s3, 32
        %v789 = vld [vmem:[%s788] sm:$0xff]
        %v790 = vld [vmem:[%s788 + $0x8] sm:$0xff]
        %v791 = vld [vmem:[%s788 + $0x10] sm:$0xff]
        %v792 = vld [vmem:[%s788 + $0x18] sm:$0xff]
        %793 = vmatprep.subr.mxu0 0.0
        %794 = vmatpush1.msra.mxu0 0.0
        %795 = vmatprep.subr.mxu0 0.0
        %796 = vmatpush1.msra.mxu0 0.0
        %797 = vmatprep.subr.mxu0 0.0
        %798 = vmatpush1.msra.mxu0 0.0
        %799 = vmatprep.subr.mxu0 0.0
        %800 = vmatpush1.msra.mxu0 0.0
        %801 = vmatprep.subr.mxu0 0.0
        %802 = vmatpush1.msra.mxu0 0.0
        %803 = vmatprep.subr.mxu0 0.0
        %804 = vmatpush1.msra.mxu0 0.0
        %805 = vmatprep.subr.mxu0 0.0
        %806 = vmatpush1.msra.mxu0 0.0
        %807 = vmatprep.subr.mxu0 0.0
        %808 = vmatpush1.msra.mxu0 0.0
        %809 = vmatprep.subr.mxu0 0.0
        %810 = vmatpush1.msra.mxu0 0.0
        %811 = vmatprep.subr.mxu0 0.0
        %812 = vmatpush1.msra.mxu0 0.0
        %813 = vmatprep.subr.mxu0 0.0
        %814 = vmatpush1.msra.mxu0 0.0
        %815 = vmatprep.subr.mxu0 0.0
        %816 = vmatpush1.msra.mxu0 0.0
        %817 = vmatprep.subr.mxu0 0.0
        %818 = vmatpush1.msra.mxu0 %v792
        %819 = vmatprep.subr.mxu0 0.0
        %820 = vmatpush1.msra.mxu0 %v791
        %821 = vmatprep.subr.mxu0 0.0
        %822 = vmatpush1.msra.mxu0 %v790
        %823 = vmatprep.subr.mxu0 0.0
        %824 = vmatpush1.msra.mxu0 %v789
        %825 = vmatprep.subr.mxu0 0.0
        %826 = vmatpush2.msra.mxu0 0.0
        %827 = vmatprep.subr.mxu0 0.0
        %828 = vmatpush2.msra.mxu0 0.0
        %829 = vmatprep.subr.mxu0 0.0
        %830 = vmatpush2.msra.mxu0 0.0
        %831 = vmatprep.subr.mxu0 0.0
        %832 = vmatpush2.msra.mxu0 0.0
        %833 = vmatprep.subr.mxu0 0.0
        %834 = vmatpush2.msra.mxu0 0.0
        %835 = vmatprep.subr.mxu0 0.0
        %836 = vmatpush2.msra.mxu0 0.0
        %837 = vmatprep.subr.mxu0 0.0
        %838 = vmatpush2.msra.mxu0 0.0
        %839 = vmatprep.subr.mxu0 0.0
        %840 = vmatpush2.msra.mxu0 0.0
        %841 = vmatprep.subr.mxu0 0.0
        %842 = vmatpush2.msra.mxu0 0.0
        %843 = vmatprep.subr.mxu0 0.0
        %844 = vmatpush2.msra.mxu0 0.0
        %845 = vmatprep.subr.mxu0 0.0
        %846 = vmatpush2.msra.mxu0 0.0
        %847 = vmatprep.subr.mxu0 0.0
        %848 = vmatpush2.msra.mxu0 0.0
        %849 = vmatprep.subr.mxu0 0.0
        %850 = vmatpush2.msra.mxu0 0.0
        %851 = vmatprep.subr.mxu0 0.0
        %852 = vmatpush2.msra.mxu0 0.0
        %853 = vmatprep.subr.mxu0 0.0
        %854 = vmatpush2.msra.mxu0 0.0
        %855 = vmatprep.subr.mxu0 0.0
        %856 = vmatpush2.msra.mxu0 0.0
        %857 = vmatprep.mubr.f32.mxu0 0.0
        %858 = vmatmul.mubr.f32.gmra.mxu0 %v254
        %v859 = vpop.f32.mrf.mxu0
        %v860 = vadd.f32 0.0, %v859
        %v861 = vpop.f32.mrf.mxu0
        %862 = vdwg.mxu0
        %v864 = vsel %vm475, %v712, 0
        %v867 = vsel %vm475, %v785, 0
        %869 = vmatprep.subr.mxu0 0.0
        %870 = vmatpush1.xpose.msra.mxu0 0.0
        %871 = vmatprep.subr.mxu0 0.0
        %872 = vmatpush1.xpose.msra.mxu0 0.0
        %873 = vmatprep.subr.mxu0 0.0
        %874 = vmatpush1.xpose.msra.mxu0 0.0
        %875 = vmatprep.subr.mxu0 0.0
        %876 = vmatpush1.xpose.msra.mxu0 0.0
        %877 = vmatprep.subr.mxu0 0.0
        %878 = vmatpush1.xpose.msra.mxu0 0.0
        %879 = vmatprep.subr.mxu0 0.0
        %880 = vmatpush1.xpose.msra.mxu0 0.0
        %881 = vmatprep.subr.mxu0 0.0
        %882 = vmatpush1.xpose.msra.mxu0 0.0
        %883 = vmatprep.subr.mxu0 0.0
        %884 = vmatpush1.xpose.msra.mxu0 0.0
        %885 = vmatprep.subr.mxu0 0.0
        %886 = vmatpush1.xpose.msra.mxu0 0.0
        %887 = vmatprep.subr.mxu0 0.0
        %888 = vmatpush1.xpose.msra.mxu0 0.0
        %889 = vmatprep.subr.mxu0 0.0
        %890 = vmatpush1.xpose.msra.mxu0 0.0
        %891 = vmatprep.subr.mxu0 0.0
        %892 = vmatpush1.xpose.msra.mxu0 0.0
        %893 = vmatprep.subr.mxu0 0.0
        %894 = vmatpush1.xpose.msra.mxu0 0.0
        %895 = vmatprep.subr.mxu0 0.0
        %896 = vmatpush1.xpose.msra.mxu0 0.0
        %897 = vmatprep.subr.mxu0 0.0
        %898 = vmatpush1.xpose.msra.mxu0 0.0
        %899 = vmatprep.subr.mxu0 0.0
        %900 = vmatpush1.xpose.msra.mxu0 %v867
        %901 = vmatprep.subr.mxu0 0.0
        %902 = vmatpush2.xpose.msra.mxu0 0.0
        %903 = vmatprep.subr.mxu0 0.0
        %904 = vmatpush2.xpose.msra.mxu0 0.0
        %905 = vmatprep.subr.mxu0 0.0
        %906 = vmatpush2.xpose.msra.mxu0 0.0
        %907 = vmatprep.subr.mxu0 0.0
        %908 = vmatpush2.xpose.msra.mxu0 0.0
        %909 = vmatprep.subr.mxu0 0.0
        %910 = vmatpush2.xpose.msra.mxu0 0.0
        %911 = vmatprep.subr.mxu0 0.0
        %912 = vmatpush2.xpose.msra.mxu0 0.0
        %913 = vmatprep.subr.mxu0 0.0
        %914 = vmatpush2.xpose.msra.mxu0 0.0
        %915 = vmatprep.subr.mxu0 0.0
        %916 = vmatpush2.xpose.msra.mxu0 0.0
        %917 = vmatprep.subr.mxu0 0.0
        %918 = vmatpush2.xpose.msra.mxu0 0.0
        %919 = vmatprep.subr.mxu0 0.0
        %920 = vmatpush2.xpose.msra.mxu0 0.0
        %921 = vmatprep.subr.mxu0 0.0
        %922 = vmatpush2.xpose.msra.mxu0 0.0
        %923 = vmatprep.subr.mxu0 0.0
        %924 = vmatpush2.xpose.msra.mxu0 0.0
        %925 = vmatprep.subr.mxu0 0.0
        %926 = vmatpush2.xpose.msra.mxu0 0.0
        %927 = vmatprep.subr.mxu0 0.0
        %928 = vmatpush2.xpose.msra.mxu0 0.0
        %929 = vmatprep.subr.mxu0 0.0
        %930 = vmatpush2.xpose.msra.mxu0 0.0
        %931 = vmatprep.subr.mxu0 0.0
        %932 = vmatpush2.xpose.msra.mxu0 0.0
        %933 = vmatprep.mubr.f32.mxu0 0.0
        %934 = vmatmul.mubr.f32.gmra.mxu0 %v864
        %v935 = vpop.f32.mrf.mxu0
        %v936 = vadd.f32 0.0, %v935
        %v937 = vpop.f32.mrf.mxu0
        %938 = vdwg.mxu0
        %v939 = vsel %vm552, %v936, -inf
        %940 = vmax.xlane.f32.xlu0 %v939
        %v941 = vpop.xlane.xlu0 %940
        %v942 = vsub.f32 %v936, %v941
        %v943 = vmul.f32 %v942, 1.442695
        %v944 = vpow.pop %v943
        %v945 = vsel %vm552, %v944, 0.0
        %946 = vadd.xlane.f32.xlu0 %v945
        %v947 = vpop.xlane.xlu0 %946
        %v948 = vrcp.pop %v947
        %v949 = vmul.f32 %v944, %v948
        %v951 = vsel %vm552, %v949, 0
        %953 = vmatprep.subr.mxu0 0.0
        %954 = vmatpush1.msra.mxu0 0.0
        %955 = vmatprep.subr.mxu0 0.0
        %956 = vmatpush1.msra.mxu0 0.0
        %957 = vmatprep.subr.mxu0 0.0
        %958 = vmatpush1.msra.mxu0 0.0
        %959 = vmatprep.subr.mxu0 0.0
        %960 = vmatpush1.msra.mxu0 0.0
        %961 = vmatprep.subr.mxu0 0.0
        %962 = vmatpush1.msra.mxu0 0.0
        %963 = vmatprep.subr.mxu0 0.0
        %964 = vmatpush1.msra.mxu0 0.0
        %965 = vmatprep.subr.mxu0 0.0
        %966 = vmatpush1.msra.mxu0 0.0
        %967 = vmatprep.subr.mxu0 0.0
        %968 = vmatpush1.msra.mxu0 0.0
        %969 = vmatprep.subr.mxu0 0.0
        %970 = vmatpush1.msra.mxu0 0.0
        %971 = vmatprep.subr.mxu0 0.0
        %972 = vmatpush1.msra.mxu0 0.0
        %973 = vmatprep.subr.mxu0 0.0
        %974 = vmatpush1.msra.mxu0 0.0
        %975 = vmatprep.subr.mxu0 0.0
        %976 = vmatpush1.msra.mxu0 0.0
        %977 = vmatprep.subr.mxu0 0.0
        %978 = vmatpush1.msra.mxu0 0.0
        %979 = vmatprep.subr.mxu0 0.0
        %980 = vmatpush1.msra.mxu0 0.0
        %981 = vmatprep.subr.mxu0 0.0
        %982 = vmatpush1.msra.mxu0 0.0
        %983 = vmatprep.subr.mxu0 0.0
        %984 = vmatpush1.msra.mxu0 %v860
        %985 = vmatprep.subr.mxu0 0.0
        %986 = vmatpush2.msra.mxu0 0.0
        %987 = vmatprep.subr.mxu0 0.0
        %988 = vmatpush2.msra.mxu0 0.0
        %989 = vmatprep.subr.mxu0 0.0
        %990 = vmatpush2.msra.mxu0 0.0
        %991 = vmatprep.subr.mxu0 0.0
        %992 = vmatpush2.msra.mxu0 0.0
        %993 = vmatprep.subr.mxu0 0.0
        %994 = vmatpush2.msra.mxu0 0.0
        %995 = vmatprep.subr.mxu0 0.0
        %996 = vmatpush2.msra.mxu0 0.0
        %997 = vmatprep.subr.mxu0 0.0
        %998 = vmatpush2.msra.mxu0 0.0
        %999 = vmatprep.subr.mxu0 0.0
        %1000 = vmatpush2.msra.mxu0 0.0
        %1001 = vmatprep.subr.mxu0 0.0
        %1002 = vmatpush2.msra.mxu0 0.0
        %1003 = vmatprep.subr.mxu0 0.0
        %1004 = vmatpush2.msra.mxu0 0.0
        %1005 = vmatprep.subr.mxu0 0.0
        %1006 = vmatpush2.msra.mxu0 0.0
        %1007 = vmatprep.subr.mxu0 0.0
        %1008 = vmatpush2.msra.mxu0 0.0
        %1009 = vmatprep.subr.mxu0 0.0
        %1010 = vmatpush2.msra.mxu0 0.0
        %1011 = vmatprep.subr.mxu0 0.0
        %1012 = vmatpush2.msra.mxu0 0.0
        %1013 = vmatprep.subr.mxu0 0.0
        %1014 = vmatpush2.msra.mxu0 0.0
        %1015 = vmatprep.subr.mxu0 0.0
        %1016 = vmatpush2.msra.mxu0 0.0
        %1017 = vmatprep.mubr.f32.mxu0 0.0
        %1018 = vmatmul.mubr.f32.gmra.mxu0 %v951
        %v1019 = vpop.f32.mrf.mxu0
        %v1020 = vadd.f32 0.0, %v1019
        %v1021 = vpop.f32.mrf.mxu0
        %1022 = vdwg.mxu0
        %s1023 = scalar_lea.vmem %s1, 64
        %v1024 = vld [vmem:[%s1023] sm:$0xff]
        %v1025 = vld [vmem:[%s1023 + $0x8] sm:$0xff]
        %v1026 = vld [vmem:[%s1023 + $0x10] sm:$0xff]
        %v1027 = vld [vmem:[%s1023 + $0x18] sm:$0xff]
        %1028 = vmatprep.subr.mxu0 0.0
        %1029 = vmatpush1.msra.mxu0 0.0
        %1030 = vmatprep.subr.mxu0 0.0
        %1031 = vmatpush1.msra.mxu0 0.0
        %1032 = vmatprep.subr.mxu0 0.0
        %1033 = vmatpush1.msra.mxu0 0.0
        %1034 = vmatprep.subr.mxu0 0.0
        %1035 = vmatpush1.msra.mxu0 0.0
        %1036 = vmatprep.subr.mxu0 0.0
        %1037 = vmatpush1.msra.mxu0 0.0
        %1038 = vmatprep.subr.mxu0 0.0
        %1039 = vmatpush1.msra.mxu0 0.0
        %1040 = vmatprep.subr.mxu0 0.0
        %1041 = vmatpush1.msra.mxu0 0.0
        %1042 = vmatprep.subr.mxu0 0.0
        %1043 = vmatpush1.msra.mxu0 0.0
        %1044 = vmatprep.subr.mxu0 0.0
        %1045 = vmatpush1.msra.mxu0 0.0
        %1046 = vmatprep.subr.mxu0 0.0
        %1047 = vmatpush1.msra.mxu0 0.0
        %1048 = vmatprep.subr.mxu0 0.0
        %1049 = vmatpush1.msra.mxu0 0.0
        %1050 = vmatprep.subr.mxu0 0.0
        %1051 = vmatpush1.msra.mxu0 0.0
        %1052 = vmatprep.subr.mxu0 0.0
        %1053 = vmatpush1.msra.mxu0 %v1027
        %1054 = vmatprep.subr.mxu0 0.0
        %1055 = vmatpush1.msra.mxu0 %v1026
        %1056 = vmatprep.subr.mxu0 0.0
        %1057 = vmatpush1.msra.mxu0 %v1025
        %1058 = vmatprep.subr.mxu0 0.0
        %1059 = vmatpush1.msra.mxu0 %v1024
        %1060 = vmatprep.subr.mxu0 0.0
        %1061 = vmatpush2.msra.mxu0 0.0
        %1062 = vmatprep.subr.mxu0 0.0
        %1063 = vmatpush2.msra.mxu0 0.0
        %1064 = vmatprep.subr.mxu0 0.0
        %1065 = vmatpush2.msra.mxu0 0.0
        %1066 = vmatprep.subr.mxu0 0.0
        %1067 = vmatpush2.msra.mxu0 0.0
        %1068 = vmatprep.subr.mxu0 0.0
        %1069 = vmatpush2.msra.mxu0 0.0
        %1070 = vmatprep.subr.mxu0 0.0
        %1071 = vmatpush2.msra.mxu0 0.0
        %1072 = vmatprep.subr.mxu0 0.0
        %1073 = vmatpush2.msra.mxu0 0.0
        %1074 = vmatprep.subr.mxu0 0.0
        %1075 = vmatpush2.msra.mxu0 0.0
        %1076 = vmatprep.subr.mxu0 0.0
        %1077 = vmatpush2.msra.mxu0 0.0
        %1078 = vmatprep.subr.mxu0 0.0
        %1079 = vmatpush2.msra.mxu0 0.0
        %1080 = vmatprep.subr.mxu0 0.0
        %1081 = vmatpush2.msra.mxu0 0.0
        %1082 = vmatprep.subr.mxu0 0.0
        %1083 = vmatpush2.msra.mxu0 0.0
        %1084 = vmatprep.subr.mxu0 0.0
        %1085 = vmatpush2.msra.mxu0 0.0
        %1086 = vmatprep.subr.mxu0 0.0
        %1087 = vmatpush2.msra.mxu0 0.0
        %1088 = vmatprep.subr.mxu0 0.0
        %1089 = vmatpush2.msra.mxu0 0.0
        %1090 = vmatprep.subr.mxu0 0.0
        %1091 = vmatpush2.msra.mxu0 0.0
        %1092 = vmatprep.mubr.f32.mxu0 0.0
        %1093 = vmatmul.mubr.f32.gmra.mxu0 %v254
        %v1094 = vpop.f32.mrf.mxu0
        %v1095 = vadd.f32 0.0, %v1094
        %v1096 = vpop.f32.mrf.mxu0
        %1097 = vdwg.mxu0
        %v1098 = vmul.f32 %v1095, 0.5
        %s1099 = scalar_lea.vmem %s2, 64
        %v1100 = vld [vmem:[%s1099] sm:$0xff]
        %v1101 = vld [vmem:[%s1099 + $0x8] sm:$0xff]
        %v1102 = vld [vmem:[%s1099 + $0x10] sm:$0xff]
        %v1103 = vld [vmem:[%s1099 + $0x18] sm:$0xff]
        %1104 = vmatprep.subr.mxu0 0.0
        %1105 = vmatpush1.msra.mxu0 0.0
        %1106 = vmatprep.subr.mxu0 0.0
        %1107 = vmatpush1.msra.mxu0 0.0
        %1108 = vmatprep.subr.mxu0 0.0
        %1109 = vmatpush1.msra.mxu0 0.0
        %1110 = vmatprep.subr.mxu0 0.0
        %1111 = vmatpush1.msra.mxu0 0.0
        %1112 = vmatprep.subr.mxu0 0.0
        %1113 = vmatpush1.msra.mxu0 0.0
        %1114 = vmatprep.subr.mxu0 0.0
        %1115 = vmatpush1.msra.mxu0 0.0
        %1116 = vmatprep.subr.mxu0 0.0
        %1117 = vmatpush1.msra.mxu0 0.0
        %1118 = vmatprep.subr.mxu0 0.0
        %1119 = vmatpush1.msra.mxu0 0.0
        %1120 = vmatprep.subr.mxu0 0.0
        %1121 = vmatpush1.msra.mxu0 0.0
        %1122 = vmatprep.subr.mxu0 0.0
        %1123 = vmatpush1.msra.mxu0 0.0
        %1124 = vmatprep.subr.mxu0 0.0
        %1125 = vmatpush1.msra.mxu0 0.0
        %1126 = vmatprep.subr.mxu0 0.0
        %1127 = vmatpush1.msra.mxu0 0.0
        %1128 = vmatprep.subr.mxu0 0.0
        %1129 = vmatpush1.msra.mxu0 %v1103
        %1130 = vmatprep.subr.mxu0 0.0
        %1131 = vmatpush1.msra.mxu0 %v1102
        %1132 = vmatprep.subr.mxu0 0.0
        %1133 = vmatpush1.msra.mxu0 %v1101
        %1134 = vmatprep.subr.mxu0 0.0
        %1135 = vmatpush1.msra.mxu0 %v1100
        %1136 = vmatprep.subr.mxu0 0.0
        %1137 = vmatpush2.msra.mxu0 0.0
        %1138 = vmatprep.subr.mxu0 0.0
        %1139 = vmatpush2.msra.mxu0 0.0
        %1140 = vmatprep.subr.mxu0 0.0
        %1141 = vmatpush2.msra.mxu0 0.0
        %1142 = vmatprep.subr.mxu0 0.0
        %1143 = vmatpush2.msra.mxu0 0.0
        %1144 = vmatprep.subr.mxu0 0.0
        %1145 = vmatpush2.msra.mxu0 0.0
        %1146 = vmatprep.subr.mxu0 0.0
        %1147 = vmatpush2.msra.mxu0 0.0
        %1148 = vmatprep.subr.mxu0 0.0
        %1149 = vmatpush2.msra.mxu0 0.0
        %1150 = vmatprep.subr.mxu0 0.0
        %1151 = vmatpush2.msra.mxu0 0.0
        %1152 = vmatprep.subr.mxu0 0.0
        %1153 = vmatpush2.msra.mxu0 0.0
        %1154 = vmatprep.subr.mxu0 0.0
        %1155 = vmatpush2.msra.mxu0 0.0
        %1156 = vmatprep.subr.mxu0 0.0
        %1157 = vmatpush2.msra.mxu0 0.0
        %1158 = vmatprep.subr.mxu0 0.0
        %1159 = vmatpush2.msra.mxu0 0.0
        %1160 = vmatprep.subr.mxu0 0.0
        %1161 = vmatpush2.msra.mxu0 0.0
        %1162 = vmatprep.subr.mxu0 0.0
        %1163 = vmatpush2.msra.mxu0 0.0
        %1164 = vmatprep.subr.mxu0 0.0
        %1165 = vmatpush2.msra.mxu0 0.0
        %1166 = vmatprep.subr.mxu0 0.0
        %1167 = vmatpush2.msra.mxu0 0.0
        %1168 = vmatprep.mubr.f32.mxu0 0.0
        %1169 = vmatmul.mubr.f32.gmra.mxu0 %v254
        %v1170 = vpop.f32.mrf.mxu0
        %v1171 = vadd.f32 0.0, %v1170
        %v1172 = vpop.f32.mrf.mxu0
        %1173 = vdwg.mxu0
        %s1174 = scalar_lea.vmem %s3, 64
        %v1175 = vld [vmem:[%s1174] sm:$0xff]
        %v1176 = vld [vmem:[%s1174 + $0x8] sm:$0xff]
        %v1177 = vld [vmem:[%s1174 + $0x10] sm:$0xff]
        %v1178 = vld [vmem:[%s1174 + $0x18] sm:$0xff]
        %1179 = vmatprep.subr.mxu0 0.0
        %1180 = vmatpush1.msra.mxu0 0.0
        %1181 = vmatprep.subr.mxu0 0.0
        %1182 = vmatpush1.msra.mxu0 0.0
        %1183 = vmatprep.subr.mxu0 0.0
        %1184 = vmatpush1.msra.mxu0 0.0
        %1185 = vmatprep.subr.mxu0 0.0
        %1186 = vmatpush1.msra.mxu0 0.0
        %1187 = vmatprep.subr.mxu0 0.0
        %1188 = vmatpush1.msra.mxu0 0.0
        %1189 = vmatprep.subr.mxu0 0.0
        %1190 = vmatpush1.msra.mxu0 0.0
        %1191 = vmatprep.subr.mxu0 0.0
        %1192 = vmatpush1.msra.mxu0 0.0
        %1193 = vmatprep.subr.mxu0 0.0
        %1194 = vmatpush1.msra.mxu0 0.0
        %1195 = vmatprep.subr.mxu0 0.0
        %1196 = vmatpush1.msra.mxu0 0.0
        %1197 = vmatprep.subr.mxu0 0.0
        %1198 = vmatpush1.msra.mxu0 0.0
        %1199 = vmatprep.subr.mxu0 0.0
        %1200 = vmatpush1.msra.mxu0 0.0
        %1201 = vmatprep.subr.mxu0 0.0
        %1202 = vmatpush1.msra.mxu0 0.0
        %1203 = vmatprep.subr.mxu0 0.0
        %1204 = vmatpush1.msra.mxu0 %v1178
        %1205 = vmatprep.subr.mxu0 0.0
        %1206 = vmatpush1.msra.mxu0 %v1177
        %1207 = vmatprep.subr.mxu0 0.0
        %1208 = vmatpush1.msra.mxu0 %v1176
        %1209 = vmatprep.subr.mxu0 0.0
        %1210 = vmatpush1.msra.mxu0 %v1175
        %1211 = vmatprep.subr.mxu0 0.0
        %1212 = vmatpush2.msra.mxu0 0.0
        %1213 = vmatprep.subr.mxu0 0.0
        %1214 = vmatpush2.msra.mxu0 0.0
        %1215 = vmatprep.subr.mxu0 0.0
        %1216 = vmatpush2.msra.mxu0 0.0
        %1217 = vmatprep.subr.mxu0 0.0
        %1218 = vmatpush2.msra.mxu0 0.0
        %1219 = vmatprep.subr.mxu0 0.0
        %1220 = vmatpush2.msra.mxu0 0.0
        %1221 = vmatprep.subr.mxu0 0.0
        %1222 = vmatpush2.msra.mxu0 0.0
        %1223 = vmatprep.subr.mxu0 0.0
        %1224 = vmatpush2.msra.mxu0 0.0
        %1225 = vmatprep.subr.mxu0 0.0
        %1226 = vmatpush2.msra.mxu0 0.0
        %1227 = vmatprep.subr.mxu0 0.0
        %1228 = vmatpush2.msra.mxu0 0.0
        %1229 = vmatprep.subr.mxu0 0.0
        %1230 = vmatpush2.msra.mxu0 0.0
        %1231 = vmatprep.subr.mxu0 0.0
        %1232 = vmatpush2.msra.mxu0 0.0
        %1233 = vmatprep.subr.mxu0 0.0
        %1234 = vmatpush2.msra.mxu0 0.0
        %1235 = vmatprep.subr.mxu0 0.0
        %1236 = vmatpush2.msra.mxu0 0.0
        %1237 = vmatprep.subr.mxu0 0.0
        %1238 = vmatpush2.msra.mxu0 0.0
        %1239 = vmatprep.subr.mxu0 0.0
        %1240 = vmatpush2.msra.mxu0 0.0
        %1241 = vmatprep.subr.mxu0 0.0
        %1242 = vmatpush2.msra.mxu0 0.0
        %1243 = vmatprep.mubr.f32.mxu0 0.0
        %1244 = vmatmul.mubr.f32.gmra.mxu0 %v254
        %v1245 = vpop.f32.mrf.mxu0
        %v1246 = vadd.f32 0.0, %v1245
        %v1247 = vpop.f32.mrf.mxu0
        %1248 = vdwg.mxu0
        %v1250 = vsel %vm475, %v1098, 0
        %v1253 = vsel %vm475, %v1171, 0
        %1255 = vmatprep.subr.mxu0 0.0
        %1256 = vmatpush1.xpose.msra.mxu0 0.0
        %1257 = vmatprep.subr.mxu0 0.0
        %1258 = vmatpush1.xpose.msra.mxu0 0.0
        %1259 = vmatprep.subr.mxu0 0.0
        %1260 = vmatpush1.xpose.msra.mxu0 0.0
        %1261 = vmatprep.subr.mxu0 0.0
        %1262 = vmatpush1.xpose.msra.mxu0 0.0
        %1263 = vmatprep.subr.mxu0 0.0
        %1264 = vmatpush1.xpose.msra.mxu0 0.0
        %1265 = vmatprep.subr.mxu0 0.0
        %1266 = vmatpush1.xpose.msra.mxu0 0.0
        %1267 = vmatprep.subr.mxu0 0.0
        %1268 = vmatpush1.xpose.msra.mxu0 0.0
        %1269 = vmatprep.subr.mxu0 0.0
        %1270 = vmatpush1.xpose.msra.mxu0 0.0
        %1271 = vmatprep.subr.mxu0 0.0
        %1272 = vmatpush1.xpose.msra.mxu0 0.0
        %1273 = vmatprep.subr.mxu0 0.0
        %1274 = vmatpush1.xpose.msra.mxu0 0.0
        %1275 = vmatprep.subr.mxu0 0.0
        %1276 = vmatpush1.xpose.msra.mxu0 0.0
        %1277 = vmatprep.subr.mxu0 0.0
        %1278 = vmatpush1.xpose.msra.mxu0 0.0
        %1279 = vmatprep.subr.mxu0 0.0
        %1280 = vmatpush1.xpose.msra.mxu0 0.0
        %1281 = vmatprep.subr.mxu0 0.0
        %1282 = vmatpush1.xpose.msra.mxu0 0.0
        %1283 = vmatprep.subr.mxu0 0.0
        %1284 = vmatpush1.xpose.msra.mxu0 0.0
        %1285 = vmatprep.subr.mxu0 0.0
        %1286 = vmatpush1.xpose.msra.mxu0 %v1253
        %1287 = vmatprep.subr.mxu0 0.0
        %1288 = vmatpush2.xpose.msra.mxu0 0.0
        %1289 = vmatprep.subr.mxu0 0.0
        %1290 = vmatpush2.xpose.msra.mxu0 0.0
        %1291 = vmatprep.subr.mxu0 0.0
        %1292 = vmatpush2.xpose.msra.mxu0 0.0
        %1293 = vmatprep.subr.mxu0 0.0
        %1294 = vmatpush2.xpose.msra.mxu0 0.0
        %1295 = vmatprep.subr.mxu0 0.0
        %1296 = vmatpush2.xpose.msra.mxu0 0.0
        %1297 = vmatprep.subr.mxu0 0.0
        %1298 = vmatpush2.xpose.msra.mxu0 0.0
        %1299 = vmatprep.subr.mxu0 0.0
        %1300 = vmatpush2.xpose.msra.mxu0 0.0
        %1301 = vmatprep.subr.mxu0 0.0
        %1302 = vmatpush2.xpose.msra.mxu0 0.0
        %1303 = vmatprep.subr.mxu0 0.0
        %1304 = vmatpush2.xpose.msra.mxu0 0.0
        %1305 = vmatprep.subr.mxu0 0.0
        %1306 = vmatpush2.xpose.msra.mxu0 0.0
        %1307 = vmatprep.subr.mxu0 0.0
        %1308 = vmatpush2.xpose.msra.mxu0 0.0
        %1309 = vmatprep.subr.mxu0 0.0
        %1310 = vmatpush2.xpose.msra.mxu0 0.0
        %1311 = vmatprep.subr.mxu0 0.0
        %1312 = vmatpush2.xpose.msra.mxu0 0.0
        %1313 = vmatprep.subr.mxu0 0.0
        %1314 = vmatpush2.xpose.msra.mxu0 0.0
        %1315 = vmatprep.subr.mxu0 0.0
        %1316 = vmatpush2.xpose.msra.mxu0 0.0
        %1317 = vmatprep.subr.mxu0 0.0
        %1318 = vmatpush2.xpose.msra.mxu0 0.0
        %1319 = vmatprep.mubr.f32.mxu0 0.0
        %1320 = vmatmul.mubr.f32.gmra.mxu0 %v1250
        %v1321 = vpop.f32.mrf.mxu0
        %v1322 = vadd.f32 0.0, %v1321
        %v1323 = vpop.f32.mrf.mxu0
        %1324 = vdwg.mxu0
        %v1325 = vsel %vm552, %v1322, -inf
        %1326 = vmax.xlane.f32.xlu0 %v1325
        %v1327 = vpop.xlane.xlu0 %1326
        %v1328 = vsub.f32 %v1322, %v1327
        %v1329 = vmul.f32 %v1328, 1.442695
        %v1330 = vpow.pop %v1329
        %v1331 = vsel %vm552, %v1330, 0.0
        %1332 = vadd.xlane.f32.xlu0 %v1331
        %v1333 = vpop.xlane.xlu0 %1332
        %v1334 = vrcp.pop %v1333
        %v1335 = vmul.f32 %v1330, %v1334
        %v1337 = vsel %vm552, %v1335, 0
        %1339 = vmatprep.subr.mxu0 0.0
        %1340 = vmatpush1.msra.mxu0 0.0
        %1341 = vmatprep.subr.mxu0 0.0
        %1342 = vmatpush1.msra.mxu0 0.0
        %1343 = vmatprep.subr.mxu0 0.0
        %1344 = vmatpush1.msra.mxu0 0.0
        %1345 = vmatprep.subr.mxu0 0.0
        %1346 = vmatpush1.msra.mxu0 0.0
        %1347 = vmatprep.subr.mxu0 0.0
        %1348 = vmatpush1.msra.mxu0 0.0
        %1349 = vmatprep.subr.mxu0 0.0
        %1350 = vmatpush1.msra.mxu0 0.0
        %1351 = vmatprep.subr.mxu0 0.0
        %1352 = vmatpush1.msra.mxu0 0.0
        %1353 = vmatprep.subr.mxu0 0.0
        %1354 = vmatpush1.msra.mxu0 0.0
        %1355 = vmatprep.subr.mxu0 0.0
        %1356 = vmatpush1.msra.mxu0 0.0
        %1357 = vmatprep.subr.mxu0 0.0
        %1358 = vmatpush1.msra.mxu0 0.0
        %1359 = vmatprep.subr.mxu0 0.0
        %1360 = vmatpush1.msra.mxu0 0.0
        %1361 = vmatprep.subr.mxu0 0.0
        %1362 = vmatpush1.msra.mxu0 0.0
        %1363 = vmatprep.subr.mxu0 0.0
        %1364 = vmatpush1.msra.mxu0 0.0
        %1365 = vmatprep.subr.mxu0 0.0
        %1366 = vmatpush1.msra.mxu0 0.0
        %1367 = vmatprep.subr.mxu0 0.0
        %1368 = vmatpush1.msra.mxu0 0.0
        %1369 = vmatprep.subr.mxu0 0.0
        %1370 = vmatpush1.msra.mxu0 %v1246
        %1371 = vmatprep.subr.mxu0 0.0
        %1372 = vmatpush2.msra.mxu0 0.0
        %1373 = vmatprep.subr.mxu0 0.0
        %1374 = vmatpush2.msra.mxu0 0.0
        %1375 = vmatprep.subr.mxu0 0.0
        %1376 = vmatpush2.msra.mxu0 0.0
        %1377 = vmatprep.subr.mxu0 0.0
        %1378 = vmatpush2.msra.mxu0 0.0
        %1379 = vmatprep.subr.mxu0 0.0
        %1380 = vmatpush2.msra.mxu0 0.0
        %1381 = vmatprep.subr.mxu0 0.0
        %1382 = vmatpush2.msra.mxu0 0.0
        %1383 = vmatprep.subr.mxu0 0.0
        %1384 = vmatpush2.msra.mxu0 0.0
        %1385 = vmatprep.subr.mxu0 0.0
        %1386 = vmatpush2.msra.mxu0 0.0
        %1387 = vmatprep.subr.mxu0 0.0
        %1388 = vmatpush2.msra.mxu0 0.0
        %1389 = vmatprep.subr.mxu0 0.0
        %1390 = vmatpush2.msra.mxu0 0.0
        %1391 = vmatprep.subr.mxu0 0.0
        %1392 = vmatpush2.msra.mxu0 0.0
        %1393 = vmatprep.subr.mxu0 0.0
        %1394 = vmatpush2.msra.mxu0 0.0
        %1395 = vmatprep.subr.mxu0 0.0
        %1396 = vmatpush2.msra.mxu0 0.0
        %1397 = vmatprep.subr.mxu0 0.0
        %1398 = vmatpush2.msra.mxu0 0.0
        %1399 = vmatprep.subr.mxu0 0.0
        %1400 = vmatpush2.msra.mxu0 0.0
        %1401 = vmatprep.subr.mxu0 0.0
        %1402 = vmatpush2.msra.mxu0 0.0
        %1403 = vmatprep.mubr.f32.mxu0 0.0
        %1404 = vmatmul.mubr.f32.gmra.mxu0 %v1337
        %v1405 = vpop.f32.mrf.mxu0
        %v1406 = vadd.f32 0.0, %v1405
        %v1407 = vpop.f32.mrf.mxu0
        %1408 = vdwg.mxu0
        %s1409 = scalar_lea.vmem %s1, 96
        %v1410 = vld [vmem:[%s1409] sm:$0xff]
        %v1411 = vld [vmem:[%s1409 + $0x8] sm:$0xff]
        %v1412 = vld [vmem:[%s1409 + $0x10] sm:$0xff]
        %v1413 = vld [vmem:[%s1409 + $0x18] sm:$0xff]
        %1414 = vmatprep.subr.mxu0 0.0
        %1415 = vmatpush1.msra.mxu0 0.0
        %1416 = vmatprep.subr.mxu0 0.0
        %1417 = vmatpush1.msra.mxu0 0.0
        %1418 = vmatprep.subr.mxu0 0.0
        %1419 = vmatpush1.msra.mxu0 0.0
        %1420 = vmatprep.subr.mxu0 0.0
        %1421 = vmatpush1.msra.mxu0 0.0
        %1422 = vmatprep.subr.mxu0 0.0
        %1423 = vmatpush1.msra.mxu0 0.0
        %1424 = vmatprep.subr.mxu0 0.0
        %1425 = vmatpush1.msra.mxu0 0.0
        %1426 = vmatprep.subr.mxu0 0.0
        %1427 = vmatpush1.msra.mxu0 0.0
        %1428 = vmatprep.subr.mxu0 0.0
        %1429 = vmatpush1.msra.mxu0 0.0
        %1430 = vmatprep.subr.mxu0 0.0
        %1431 = vmatpush1.msra.mxu0 0.0
        %1432 = vmatprep.subr.mxu0 0.0
        %1433 = vmatpush1.msra.mxu0 0.0
        %1434 = vmatprep.subr.mxu0 0.0
        %1435 = vmatpush1.msra.mxu0 0.0
        %1436 = vmatprep.subr.mxu0 0.0
        %1437 = vmatpush1.msra.mxu0 0.0
        %1438 = vmatprep.subr.mxu0 0.0
        %1439 = vmatpush1.msra.mxu0 %v1413
        %1440 = vmatprep.subr.mxu0 0.0
        %1441 = vmatpush1.msra.mxu0 %v1412
        %1442 = vmatprep.subr.mxu0 0.0
        %1443 = vmatpush1.msra.mxu0 %v1411
        %1444 = vmatprep.subr.mxu0 0.0
        %1445 = vmatpush1.msra.mxu0 %v1410
        %1446 = vmatprep.subr.mxu0 0.0
        %1447 = vmatpush2.msra.mxu0 0.0
        %1448 = vmatprep.subr.mxu0 0.0
        %1449 = vmatpush2.msra.mxu0 0.0
        %1450 = vmatprep.subr.mxu0 0.0
        %1451 = vmatpush2.msra.mxu0 0.0
        %1452 = vmatprep.subr.mxu0 0.0
        %1453 = vmatpush2.msra.mxu0 0.0
        %1454 = vmatprep.subr.mxu0 0.0
        %1455 = vmatpush2.msra.mxu0 0.0
        %1456 = vmatprep.subr.mxu0 0.0
        %1457 = vmatpush2.msra.mxu0 0.0
        %1458 = vmatprep.subr.mxu0 0.0
        %1459 = vmatpush2.msra.mxu0 0.0
        %1460 = vmatprep.subr.mxu0 0.0
        %1461 = vmatpush2.msra.mxu0 0.0
        %1462 = vmatprep.subr.mxu0 0.0
        %1463 = vmatpush2.msra.mxu0 0.0
        %1464 = vmatprep.subr.mxu0 0.0
        %1465 = vmatpush2.msra.mxu0 0.0
        %1466 = vmatprep.subr.mxu0 0.0
        %1467 = vmatpush2.msra.mxu0 0.0
        %1468 = vmatprep.subr.mxu0 0.0
        %1469 = vmatpush2.msra.mxu0 0.0
        %1470 = vmatprep.subr.mxu0 0.0
        %1471 = vmatpush2.msra.mxu0 0.0
        %1472 = vmatprep.subr.mxu0 0.0
        %1473 = vmatpush2.msra.mxu0 0.0
        %1474 = vmatprep.subr.mxu0 0.0
        %1475 = vmatpush2.msra.mxu0 0.0
        %1476 = vmatprep.subr.mxu0 0.0
        %1477 = vmatpush2.msra.mxu0 0.0
        %1478 = vmatprep.mubr.f32.mxu0 0.0
        %1479 = vmatmul.mubr.f32.gmra.mxu0 %v254
        %v1480 = vpop.f32.mrf.mxu0
        %v1481 = vadd.f32 0.0, %v1480
        %v1482 = vpop.f32.mrf.mxu0
        %1483 = vdwg.mxu0
        %v1484 = vmul.f32 %v1481, 0.5
        %s1485 = scalar_lea.vmem %s2, 96
        %v1486 = vld [vmem:[%s1485] sm:$0xff]
        %v1487 = vld [vmem:[%s1485 + $0x8] sm:$0xff]
        %v1488 = vld [vmem:[%s1485 + $0x10] sm:$0xff]
        %v1489 = vld [vmem:[%s1485 + $0x18] sm:$0xff]
        %1490 = vmatprep.subr.mxu0 0.0
        %1491 = vmatpush1.msra.mxu0 0.0
        %1492 = vmatprep.subr.mxu0 0.0
        %1493 = vmatpush1.msra.mxu0 0.0
        %1494 = vmatprep.subr.mxu0 0.0
        %1495 = vmatpush1.msra.mxu0 0.0
        %1496 = vmatprep.subr.mxu0 0.0
        %1497 = vmatpush1.msra.mxu0 0.0
        %1498 = vmatprep.subr.mxu0 0.0
        %1499 = vmatpush1.msra.mxu0 0.0
        %1500 = vmatprep.subr.mxu0 0.0
        %1501 = vmatpush1.msra.mxu0 0.0
        %1502 = vmatprep.subr.mxu0 0.0
        %1503 = vmatpush1.msra.mxu0 0.0
        %1504 = vmatprep.subr.mxu0 0.0
        %1505 = vmatpush1.msra.mxu0 0.0
        %1506 = vmatprep.subr.mxu0 0.0
        %1507 = vmatpush1.msra.mxu0 0.0
        %1508 = vmatprep.subr.mxu0 0.0
        %1509 = vmatpush1.msra.mxu0 0.0
        %1510 = vmatprep.subr.mxu0 0.0
        %1511 = vmatpush1.msra.mxu0 0.0
        %1512 = vmatprep.subr.mxu0 0.0
        %1513 = vmatpush1.msra.mxu0 0.0
        %1514 = vmatprep.subr.mxu0 0.0
        %1515 = vmatpush1.msra.mxu0 %v1489
        %1516 = vmatprep.subr.mxu0 0.0
        %1517 = vmatpush1.msra.mxu0 %v1488
        %1518 = vmatprep.subr.mxu0 0.0
        %1519 = vmatpush1.msra.mxu0 %v1487
        %1520 = vmatprep.subr.mxu0 0.0
        %1521 = vmatpush1.msra.mxu0 %v1486
        %1522 = vmatprep.subr.mxu0 0.0
        %1523 = vmatpush2.msra.mxu0 0.0
        %1524 = vmatprep.subr.mxu0 0.0
        %1525 = vmatpush2.msra.mxu0 0.0
        %1526 = vmatprep.subr.mxu0 0.0
        %1527 = vmatpush2.msra.mxu0 0.0
        %1528 = vmatprep.subr.mxu0 0.0
        %1529 = vmatpush2.msra.mxu0 0.0
        %1530 = vmatprep.subr.mxu0 0.0
        %1531 = vmatpush2.msra.mxu0 0.0
        %1532 = vmatprep.subr.mxu0 0.0
        %1533 = vmatpush2.msra.mxu0 0.0
        %1534 = vmatprep.subr.mxu0 0.0
        %1535 = vmatpush2.msra.mxu0 0.0
        %1536 = vmatprep.subr.mxu0 0.0
        %1537 = vmatpush2.msra.mxu0 0.0
        %1538 = vmatprep.subr.mxu0 0.0
        %1539 = vmatpush2.msra.mxu0 0.0
        %1540 = vmatprep.subr.mxu0 0.0
        %1541 = vmatpush2.msra.mxu0 0.0
        %1542 = vmatprep.subr.mxu0 0.0
        %1543 = vmatpush2.msra.mxu0 0.0
        %1544 = vmatprep.subr.mxu0 0.0
        %1545 = vmatpush2.msra.mxu0 0.0
        %1546 = vmatprep.subr.mxu0 0.0
        %1547 = vmatpush2.msra.mxu0 0.0
        %1548 = vmatprep.subr.mxu0 0.0
        %1549 = vmatpush2.msra.mxu0 0.0
        %1550 = vmatprep.subr.mxu0 0.0
        %1551 = vmatpush2.msra.mxu0 0.0
        %1552 = vmatprep.subr.mxu0 0.0
        %1553 = vmatpush2.msra.mxu0 0.0
        %1554 = vmatprep.mubr.f32.mxu0 0.0
        %1555 = vmatmul.mubr.f32.gmra.mxu0 %v254
        %v1556 = vpop.f32.mrf.mxu0
        %v1557 = vadd.f32 0.0, %v1556
        %v1558 = vpop.f32.mrf.mxu0
        %1559 = vdwg.mxu0
        %s1560 = scalar_lea.vmem %s3, 96
        %v1561 = vld [vmem:[%s1560] sm:$0xff]
        %v1562 = vld [vmem:[%s1560 + $0x8] sm:$0xff]
        %v1563 = vld [vmem:[%s1560 + $0x10] sm:$0xff]
        %v1564 = vld [vmem:[%s1560 + $0x18] sm:$0xff]
        %1565 = vmatprep.subr.mxu0 0.0
        %1566 = vmatpush1.msra.mxu0 0.0
        %1567 = vmatprep.subr.mxu0 0.0
        %1568 = vmatpush1.msra.mxu0 0.0
        %1569 = vmatprep.subr.mxu0 0.0
        %1570 = vmatpush1.msra.mxu0 0.0
        %1571 = vmatprep.subr.mxu0 0.0
        %1572 = vmatpush1.msra.mxu0 0.0
        %1573 = vmatprep.subr.mxu0 0.0
        %1574 = vmatpush1.msra.mxu0 0.0
        %1575 = vmatprep.subr.mxu0 0.0
        %1576 = vmatpush1.msra.mxu0 0.0
        %1577 = vmatprep.subr.mxu0 0.0
        %1578 = vmatpush1.msra.mxu0 0.0
        %1579 = vmatprep.subr.mxu0 0.0
        %1580 = vmatpush1.msra.mxu0 0.0
        %1581 = vmatprep.subr.mxu0 0.0
        %1582 = vmatpush1.msra.mxu0 0.0
        %1583 = vmatprep.subr.mxu0 0.0
        %1584 = vmatpush1.msra.mxu0 0.0
        %1585 = vmatprep.subr.mxu0 0.0
        %1586 = vmatpush1.msra.mxu0 0.0
        %1587 = vmatprep.subr.mxu0 0.0
        %1588 = vmatpush1.msra.mxu0 0.0
        %1589 = vmatprep.subr.mxu0 0.0
        %1590 = vmatpush1.msra.mxu0 %v1564
        %1591 = vmatprep.subr.mxu0 0.0
        %1592 = vmatpush1.msra.mxu0 %v1563
        %1593 = vmatprep.subr.mxu0 0.0
        %1594 = vmatpush1.msra.mxu0 %v1562
        %1595 = vmatprep.subr.mxu0 0.0
        %1596 = vmatpush1.msra.mxu0 %v1561
        %1597 = vmatprep.subr.mxu0 0.0
        %1598 = vmatpush2.msra.mxu0 0.0
        %1599 = vmatprep.subr.mxu0 0.0
        %1600 = vmatpush2.msra.mxu0 0.0
        %1601 = vmatprep.subr.mxu0 0.0
        %1602 = vmatpush2.msra.mxu0 0.0
        %1603 = vmatprep.subr.mxu0 0.0
        %1604 = vmatpush2.msra.mxu0 0.0
        %1605 = vmatprep.subr.mxu0 0.0
        %1606 = vmatpush2.msra.mxu0 0.0
        %1607 = vmatprep.subr.mxu0 0.0
        %1608 = vmatpush2.msra.mxu0 0.0
        %1609 = vmatprep.subr.mxu0 0.0
        %1610 = vmatpush2.msra.mxu0 0.0
        %1611 = vmatprep.subr.mxu0 0.0
        %1612 = vmatpush2.msra.mxu0 0.0
        %1613 = vmatprep.subr.mxu0 0.0
        %1614 = vmatpush2.msra.mxu0 0.0
        %1615 = vmatprep.subr.mxu0 0.0
        %1616 = vmatpush2.msra.mxu0 0.0
        %1617 = vmatprep.subr.mxu0 0.0
        %1618 = vmatpush2.msra.mxu0 0.0
        %1619 = vmatprep.subr.mxu0 0.0
        %1620 = vmatpush2.msra.mxu0 0.0
        %1621 = vmatprep.subr.mxu0 0.0
        %1622 = vmatpush2.msra.mxu0 0.0
        %1623 = vmatprep.subr.mxu0 0.0
        %1624 = vmatpush2.msra.mxu0 0.0
        %1625 = vmatprep.subr.mxu0 0.0
        %1626 = vmatpush2.msra.mxu0 0.0
        %1627 = vmatprep.subr.mxu0 0.0
        %1628 = vmatpush2.msra.mxu0 0.0
        %1629 = vmatprep.mubr.f32.mxu0 0.0
        %1630 = vmatmul.mubr.f32.gmra.mxu0 %v254
        %v1631 = vpop.f32.mrf.mxu0
        %v1632 = vadd.f32 0.0, %v1631
        %v1633 = vpop.f32.mrf.mxu0
        %1634 = vdwg.mxu0
        %v1636 = vsel %vm475, %v1484, 0
        %v1639 = vsel %vm475, %v1557, 0
        %1641 = vmatprep.subr.mxu0 0.0
        %1642 = vmatpush1.xpose.msra.mxu0 0.0
        %1643 = vmatprep.subr.mxu0 0.0
        %1644 = vmatpush1.xpose.msra.mxu0 0.0
        %1645 = vmatprep.subr.mxu0 0.0
        %1646 = vmatpush1.xpose.msra.mxu0 0.0
        %1647 = vmatprep.subr.mxu0 0.0
        %1648 = vmatpush1.xpose.msra.mxu0 0.0
        %1649 = vmatprep.subr.mxu0 0.0
        %1650 = vmatpush1.xpose.msra.mxu0 0.0
        %1651 = vmatprep.subr.mxu0 0.0
        %1652 = vmatpush1.xpose.msra.mxu0 0.0
        %1653 = vmatprep.subr.mxu0 0.0
        %1654 = vmatpush1.xpose.msra.mxu0 0.0
        %1655 = vmatprep.subr.mxu0 0.0
        %1656 = vmatpush1.xpose.msra.mxu0 0.0
        %1657 = vmatprep.subr.mxu0 0.0
        %1658 = vmatpush1.xpose.msra.mxu0 0.0
        %1659 = vmatprep.subr.mxu0 0.0
        %1660 = vmatpush1.xpose.msra.mxu0 0.0
        %1661 = vmatprep.subr.mxu0 0.0
        %1662 = vmatpush1.xpose.msra.mxu0 0.0
        %1663 = vmatprep.subr.mxu0 0.0
        %1664 = vmatpush1.xpose.msra.mxu0 0.0
        %1665 = vmatprep.subr.mxu0 0.0
        %1666 = vmatpush1.xpose.msra.mxu0 0.0
        %1667 = vmatprep.subr.mxu0 0.0
        %1668 = vmatpush1.xpose.msra.mxu0 0.0
        %1669 = vmatprep.subr.mxu0 0.0
        %1670 = vmatpush1.xpose.msra.mxu0 0.0
        %1671 = vmatprep.subr.mxu0 0.0
        %1672 = vmatpush1.xpose.msra.mxu0 %v1639
        %1673 = vmatprep.subr.mxu0 0.0
        %1674 = vmatpush2.xpose.msra.mxu0 0.0
        %1675 = vmatprep.subr.mxu0 0.0
        %1676 = vmatpush2.xpose.msra.mxu0 0.0
        %1677 = vmatprep.subr.mxu0 0.0
        %1678 = vmatpush2.xpose.msra.mxu0 0.0
        %1679 = vmatprep.subr.mxu0 0.0
        %1680 = vmatpush2.xpose.msra.mxu0 0.0
        %1681 = vmatprep.subr.mxu0 0.0
        %1682 = vmatpush2.xpose.msra.mxu0 0.0
        %1683 = vmatprep.subr.mxu0 0.0
        %1684 = vmatpush2.xpose.msra.mxu0 0.0
        %1685 = vmatprep.subr.mxu0 0.0
        %1686 = vmatpush2.xpose.msra.mxu0 0.0
        %1687 = vmatprep.subr.mxu0 0.0
        %1688 = vmatpush2.xpose.msra.mxu0 0.0
        %1689 = vmatprep.subr.mxu0 0.0
        %1690 = vmatpush2.xpose.msra.mxu0 0.0
        %1691 = vmatprep.subr.mxu0 0.0
        %1692 = vmatpush2.xpose.msra.mxu0 0.0
        %1693 = vmatprep.subr.mxu0 0.0
        %1694 = vmatpush2.xpose.msra.mxu0 0.0
        %1695 = vmatprep.subr.mxu0 0.0
        %1696 = vmatpush2.xpose.msra.mxu0 0.0
        %1697 = vmatprep.subr.mxu0 0.0
        %1698 = vmatpush2.xpose.msra.mxu0 0.0
        %1699 = vmatprep.subr.mxu0 0.0
        %1700 = vmatpush2.xpose.msra.mxu0 0.0
        %1701 = vmatprep.subr.mxu0 0.0
        %1702 = vmatpush2.xpose.msra.mxu0 0.0
        %1703 = vmatprep.subr.mxu0 0.0
        %1704 = vmatpush2.xpose.msra.mxu0 0.0
        %1705 = vmatprep.mubr.f32.mxu0 0.0
        %1706 = vmatmul.mubr.f32.gmra.mxu0 %v1636
        %v1707 = vpop.f32.mrf.mxu0
        %v1708 = vadd.f32 0.0, %v1707
        %v1709 = vpop.f32.mrf.mxu0
        %1710 = vdwg.mxu0
        %v1711 = vsel %vm552, %v1708, -inf
        %1712 = vmax.xlane.f32.xlu0 %v1711
        %v1713 = vpop.xlane.xlu0 %1712
        %v1714 = vsub.f32 %v1708, %v1713
        %v1715 = vmul.f32 %v1714, 1.442695
        %v1716 = vpow.pop %v1715
        %v1717 = vsel %vm552, %v1716, 0.0
        %1718 = vadd.xlane.f32.xlu0 %v1717
        %v1719 = vpop.xlane.xlu0 %1718
        %v1720 = vrcp.pop %v1719
        %v1721 = vmul.f32 %v1716, %v1720
        %v1723 = vsel %vm552, %v1721, 0
        %1725 = vmatprep.subr.mxu0 0.0
        %1726 = vmatpush1.msra.mxu0 0.0
        %1727 = vmatprep.subr.mxu0 0.0
        %1728 = vmatpush1.msra.mxu0 0.0
        %1729 = vmatprep.subr.mxu0 0.0
        %1730 = vmatpush1.msra.mxu0 0.0
        %1731 = vmatprep.subr.mxu0 0.0
        %1732 = vmatpush1.msra.mxu0 0.0
        %1733 = vmatprep.subr.mxu0 0.0
        %1734 = vmatpush1.msra.mxu0 0.0
        %1735 = vmatprep.subr.mxu0 0.0
        %1736 = vmatpush1.msra.mxu0 0.0
        %1737 = vmatprep.subr.mxu0 0.0
        %1738 = vmatpush1.msra.mxu0 0.0
        %1739 = vmatprep.subr.mxu0 0.0
        %1740 = vmatpush1.msra.mxu0 0.0
        %1741 = vmatprep.subr.mxu0 0.0
        %1742 = vmatpush1.msra.mxu0 0.0
        %1743 = vmatprep.subr.mxu0 0.0
        %1744 = vmatpush1.msra.mxu0 0.0
        %1745 = vmatprep.subr.mxu0 0.0
        %1746 = vmatpush1.msra.mxu0 0.0
        %1747 = vmatprep.subr.mxu0 0.0
        %1748 = vmatpush1.msra.mxu0 0.0
        %1749 = vmatprep.subr.mxu0 0.0
        %1750 = vmatpush1.msra.mxu0 0.0
        %1751 = vmatprep.subr.mxu0 0.0
        %1752 = vmatpush1.msra.mxu0 0.0
        %1753 = vmatprep.subr.mxu0 0.0
        %1754 = vmatpush1.msra.mxu0 0.0
        %1755 = vmatprep.subr.mxu0 0.0
        %1756 = vmatpush1.msra.mxu0 %v1632
        %1757 = vmatprep.subr.mxu0 0.0
        %1758 = vmatpush2.msra.mxu0 0.0
        %1759 = vmatprep.subr.mxu0 0.0
        %1760 = vmatpush2.msra.mxu0 0.0
        %1761 = vmatprep.subr.mxu0 0.0
        %1762 = vmatpush2.msra.mxu0 0.0
        %1763 = vmatprep.subr.mxu0 0.0
        %1764 = vmatpush2.msra.mxu0 0.0
        %1765 = vmatprep.subr.mxu0 0.0
        %1766 = vmatpush2.msra.mxu0 0.0
        %1767 = vmatprep.subr.mxu0 0.0
        %1768 = vmatpush2.msra.mxu0 0.0
        %1769 = vmatprep.subr.mxu0 0.0
        %1770 = vmatpush2.msra.mxu0 0.0
        %1771 = vmatprep.subr.mxu0 0.0
        %1772 = vmatpush2.msra.mxu0 0.0
        %1773 = vmatprep.subr.mxu0 0.0
        %1774 = vmatpush2.msra.mxu0 0.0
        %1775 = vmatprep.subr.mxu0 0.0
        %1776 = vmatpush2.msra.mxu0 0.0
        %1777 = vmatprep.subr.mxu0 0.0
        %1778 = vmatpush2.msra.mxu0 0.0
        %1779 = vmatprep.subr.mxu0 0.0
        %1780 = vmatpush2.msra.mxu0 0.0
        %1781 = vmatprep.subr.mxu0 0.0
        %1782 = vmatpush2.msra.mxu0 0.0
        %1783 = vmatprep.subr.mxu0 0.0
        %1784 = vmatpush2.msra.mxu0 0.0
        %1785 = vmatprep.subr.mxu0 0.0
        %1786 = vmatpush2.msra.mxu0 0.0
        %1787 = vmatprep.subr.mxu0 0.0
        %1788 = vmatpush2.msra.mxu0 0.0
        %1789 = vmatprep.mubr.f32.mxu0 0.0
        %1790 = vmatmul.mubr.f32.gmra.mxu0 %v1723
        %v1791 = vpop.f32.mrf.mxu0
        %v1792 = vadd.f32 0.0, %v1791
        %v1793 = vpop.f32.mrf.mxu0
        %1794 = vdwg.mxu0
        %s1795 = scalar_lea.vmem %s1, 128
        %v1796 = vld [vmem:[%s1795] sm:$0xff]
        %v1797 = vld [vmem:[%s1795 + $0x8] sm:$0xff]
        %v1798 = vld [vmem:[%s1795 + $0x10] sm:$0xff]
        %v1799 = vld [vmem:[%s1795 + $0x18] sm:$0xff]
        %1800 = vmatprep.subr.mxu0 0.0
        %1801 = vmatpush1.msra.mxu0 0.0
        %1802 = vmatprep.subr.mxu0 0.0
        %1803 = vmatpush1.msra.mxu0 0.0
        %1804 = vmatprep.subr.mxu0 0.0
        %1805 = vmatpush1.msra.mxu0 0.0
        %1806 = vmatprep.subr.mxu0 0.0
        %1807 = vmatpush1.msra.mxu0 0.0
        %1808 = vmatprep.subr.mxu0 0.0
        %1809 = vmatpush1.msra.mxu0 0.0
        %1810 = vmatprep.subr.mxu0 0.0
        %1811 = vmatpush1.msra.mxu0 0.0
        %1812 = vmatprep.subr.mxu0 0.0
        %1813 = vmatpush1.msra.mxu0 0.0
        %1814 = vmatprep.subr.mxu0 0.0
        %1815 = vmatpush1.msra.mxu0 0.0
        %1816 = vmatprep.subr.mxu0 0.0
        %1817 = vmatpush1.msra.mxu0 0.0
        %1818 = vmatprep.subr.mxu0 0.0
        %1819 = vmatpush1.msra.mxu0 0.0
        %1820 = vmatprep.subr.mxu0 0.0
        %1821 = vmatpush1.msra.mxu0 0.0
        %1822 = vmatprep.subr.mxu0 0.0
        %1823 = vmatpush1.msra.mxu0 0.0
        %1824 = vmatprep.subr.mxu0 0.0
        %1825 = vmatpush1.msra.mxu0 %v1799
        %1826 = vmatprep.subr.mxu0 0.0
        %1827 = vmatpush1.msra.mxu0 %v1798
        %1828 = vmatprep.subr.mxu0 0.0
        %1829 = vmatpush1.msra.mxu0 %v1797
        %1830 = vmatprep.subr.mxu0 0.0
        %1831 = vmatpush1.msra.mxu0 %v1796
        %1832 = vmatprep.subr.mxu0 0.0
        %1833 = vmatpush2.msra.mxu0 0.0
        %1834 = vmatprep.subr.mxu0 0.0
        %1835 = vmatpush2.msra.mxu0 0.0
        %1836 = vmatprep.subr.mxu0 0.0
        %1837 = vmatpush2.msra.mxu0 0.0
        %1838 = vmatprep.subr.mxu0 0.0
        %1839 = vmatpush2.msra.mxu0 0.0
        %1840 = vmatprep.subr.mxu0 0.0
        %1841 = vmatpush2.msra.mxu0 0.0
        %1842 = vmatprep.subr.mxu0 0.0
        %1843 = vmatpush2.msra.mxu0 0.0
        %1844 = vmatprep.subr.mxu0 0.0
        %1845 = vmatpush2.msra.mxu0 0.0
        %1846 = vmatprep.subr.mxu0 0.0
        %1847 = vmatpush2.msra.mxu0 0.0
        %1848 = vmatprep.subr.mxu0 0.0
        %1849 = vmatpush2.msra.mxu0 0.0
        %1850 = vmatprep.subr.mxu0 0.0
        %1851 = vmatpush2.msra.mxu0 0.0
        %1852 = vmatprep.subr.mxu0 0.0
        %1853 = vmatpush2.msra.mxu0 0.0
        %1854 = vmatprep.subr.mxu0 0.0
        %1855 = vmatpush2.msra.mxu0 0.0
        %1856 = vmatprep.subr.mxu0 0.0
        %1857 = vmatpush2.msra.mxu0 0.0
        %1858 = vmatprep.subr.mxu0 0.0
        %1859 = vmatpush2.msra.mxu0 0.0
        %1860 = vmatprep.subr.mxu0 0.0
        %1861 = vmatpush2.msra.mxu0 0.0
        %1862 = vmatprep.subr.mxu0 0.0
        %1863 = vmatpush2.msra.mxu0 0.0
        %1864 = vmatprep.mubr.f32.mxu0 0.0
        %1865 = vmatmul.mubr.f32.gmra.mxu0 %v254
        %v1866 = vpop.f32.mrf.mxu0
        %v1867 = vadd.f32 0.0, %v1866
        %v1868 = vpop.f32.mrf.mxu0
        %1869 = vdwg.mxu0
        %v1870 = vmul.f32 %v1867, 0.5
        %s1871 = scalar_lea.vmem %s2, 128
        %v1872 = vld [vmem:[%s1871] sm:$0xff]
        %v1873 = vld [vmem:[%s1871 + $0x8] sm:$0xff]
        %v1874 = vld [vmem:[%s1871 + $0x10] sm:$0xff]
        %v1875 = vld [vmem:[%s1871 + $0x18] sm:$0xff]
        %1876 = vmatprep.subr.mxu0 0.0
        %1877 = vmatpush1.msra.mxu0 0.0
        %1878 = vmatprep.subr.mxu0 0.0
        %1879 = vmatpush1.msra.mxu0 0.0
        %1880 = vmatprep.subr.mxu0 0.0
        %1881 = vmatpush1.msra.mxu0 0.0
        %1882 = vmatprep.subr.mxu0 0.0
        %1883 = vmatpush1.msra.mxu0 0.0
        %1884 = vmatprep.subr.mxu0 0.0
        %1885 = vmatpush1.msra.mxu0 0.0
        %1886 = vmatprep.subr.mxu0 0.0
        %1887 = vmatpush1.msra.mxu0 0.0
        %1888 = vmatprep.subr.mxu0 0.0
        %1889 = vmatpush1.msra.mxu0 0.0
        %1890 = vmatprep.subr.mxu0 0.0
        %1891 = vmatpush1.msra.mxu0 0.0
        %1892 = vmatprep.subr.mxu0 0.0
        %1893 = vmatpush1.msra.mxu0 0.0
        %1894 = vmatprep.subr.mxu0 0.0
        %1895 = vmatpush1.msra.mxu0 0.0
        %1896 = vmatprep.subr.mxu0 0.0
        %1897 = vmatpush1.msra.mxu0 0.0
        %1898 = vmatprep.subr.mxu0 0.0
        %1899 = vmatpush1.msra.mxu0 0.0
        %1900 = vmatprep.subr.mxu0 0.0
        %1901 = vmatpush1.msra.mxu0 %v1875
        %1902 = vmatprep.subr.mxu0 0.0
        %1903 = vmatpush1.msra.mxu0 %v1874
        %1904 = vmatprep.subr.mxu0 0.0
        %1905 = vmatpush1.msra.mxu0 %v1873
        %1906 = vmatprep.subr.mxu0 0.0
        %1907 = vmatpush1.msra.mxu0 %v1872
        %1908 = vmatprep.subr.mxu0 0.0
        %1909 = vmatpush2.msra.mxu0 0.0
        %1910 = vmatprep.subr.mxu0 0.0
        %1911 = vmatpush2.msra.mxu0 0.0
        %1912 = vmatprep.subr.mxu0 0.0
        %1913 = vmatpush2.msra.mxu0 0.0
        %1914 = vmatprep.subr.mxu0 0.0
        %1915 = vmatpush2.msra.mxu0 0.0
        %1916 = vmatprep.subr.mxu0 0.0
        %1917 = vmatpush2.msra.mxu0 0.0
        %1918 = vmatprep.subr.mxu0 0.0
        %1919 = vmatpush2.msra.mxu0 0.0
        %1920 = vmatprep.subr.mxu0 0.0
        %1921 = vmatpush2.msra.mxu0 0.0
        %1922 = vmatprep.subr.mxu0 0.0
        %1923 = vmatpush2.msra.mxu0 0.0
        %1924 = vmatprep.subr.mxu0 0.0
        %1925 = vmatpush2.msra.mxu0 0.0
        %1926 = vmatprep.subr.mxu0 0.0
        %1927 = vmatpush2.msra.mxu0 0.0
        %1928 = vmatprep.subr.mxu0 0.0
        %1929 = vmatpush2.msra.mxu0 0.0
        %1930 = vmatprep.subr.mxu0 0.0
        %1931 = vmatpush2.msra.mxu0 0.0
        %1932 = vmatprep.subr.mxu0 0.0
        %1933 = vmatpush2.msra.mxu0 0.0
        %1934 = vmatprep.subr.mxu0 0.0
        %1935 = vmatpush2.msra.mxu0 0.0
        %1936 = vmatprep.subr.mxu0 0.0
        %1937 = vmatpush2.msra.mxu0 0.0
        %1938 = vmatprep.subr.mxu0 0.0
        %1939 = vmatpush2.msra.mxu0 0.0
        %1940 = vmatprep.mubr.f32.mxu0 0.0
        %1941 = vmatmul.mubr.f32.gmra.mxu0 %v254
        %v1942 = vpop.f32.mrf.mxu0
        %v1943 = vadd.f32 0.0, %v1942
        %v1944 = vpop.f32.mrf.mxu0
        %1945 = vdwg.mxu0
        %s1946 = scalar_lea.vmem %s3, 128
        %v1947 = vld [vmem:[%s1946] sm:$0xff]
        %v1948 = vld [vmem:[%s1946 + $0x8] sm:$0xff]
        %v1949 = vld [vmem:[%s1946 + $0x10] sm:$0xff]
        %v1950 = vld [vmem:[%s1946 + $0x18] sm:$0xff]
        %1951 = vmatprep.subr.mxu0 0.0
        %1952 = vmatpush1.msra.mxu0 0.0
        %1953 = vmatprep.subr.mxu0 0.0
        %1954 = vmatpush1.msra.mxu0 0.0
        %1955 = vmatprep.subr.mxu0 0.0
        %1956 = vmatpush1.msra.mxu0 0.0
        %1957 = vmatprep.subr.mxu0 0.0
        %1958 = vmatpush1.msra.mxu0 0.0
        %1959 = vmatprep.subr.mxu0 0.0
        %1960 = vmatpush1.msra.mxu0 0.0
        %1961 = vmatprep.subr.mxu0 0.0
        %1962 = vmatpush1.msra.mxu0 0.0
        %1963 = vmatprep.subr.mxu0 0.0
        %1964 = vmatpush1.msra.mxu0 0.0
        %1965 = vmatprep.subr.mxu0 0.0
        %1966 = vmatpush1.msra.mxu0 0.0
        %1967 = vmatprep.subr.mxu0 0.0
        %1968 = vmatpush1.msra.mxu0 0.0
        %1969 = vmatprep.subr.mxu0 0.0
        %1970 = vmatpush1.msra.mxu0 0.0
        %1971 = vmatprep.subr.mxu0 0.0
        %1972 = vmatpush1.msra.mxu0 0.0
        %1973 = vmatprep.subr.mxu0 0.0
        %1974 = vmatpush1.msra.mxu0 0.0
        %1975 = vmatprep.subr.mxu0 0.0
        %1976 = vmatpush1.msra.mxu0 %v1950
        %1977 = vmatprep.subr.mxu0 0.0
        %1978 = vmatpush1.msra.mxu0 %v1949
        %1979 = vmatprep.subr.mxu0 0.0
        %1980 = vmatpush1.msra.mxu0 %v1948
        %1981 = vmatprep.subr.mxu0 0.0
        %1982 = vmatpush1.msra.mxu0 %v1947
        %1983 = vmatprep.subr.mxu0 0.0
        %1984 = vmatpush2.msra.mxu0 0.0
        %1985 = vmatprep.subr.mxu0 0.0
        %1986 = vmatpush2.msra.mxu0 0.0
        %1987 = vmatprep.subr.mxu0 0.0
        %1988 = vmatpush2.msra.mxu0 0.0
        %1989 = vmatprep.subr.mxu0 0.0
        %1990 = vmatpush2.msra.mxu0 0.0
        %1991 = vmatprep.subr.mxu0 0.0
        %1992 = vmatpush2.msra.mxu0 0.0
        %1993 = vmatprep.subr.mxu0 0.0
        %1994 = vmatpush2.msra.mxu0 0.0
        %1995 = vmatprep.subr.mxu0 0.0
        %1996 = vmatpush2.msra.mxu0 0.0
        %1997 = vmatprep.subr.mxu0 0.0
        %1998 = vmatpush2.msra.mxu0 0.0
        %1999 = vmatprep.subr.mxu0 0.0
        %2000 = vmatpush2.msra.mxu0 0.0
        %2001 = vmatprep.subr.mxu0 0.0
        %2002 = vmatpush2.msra.mxu0 0.0
        %2003 = vmatprep.subr.mxu0 0.0
        %2004 = vmatpush2.msra.mxu0 0.0
        %2005 = vmatprep.subr.mxu0 0.0
        %2006 = vmatpush2.msra.mxu0 0.0
        %2007 = vmatprep.subr.mxu0 0.0
        %2008 = vmatpush2.msra.mxu0 0.0
        %2009 = vmatprep.subr.mxu0 0.0
        %2010 = vmatpush2.msra.mxu0 0.0
        %2011 = vmatprep.subr.mxu0 0.0
        %2012 = vmatpush2.msra.mxu0 0.0
        %2013 = vmatprep.subr.mxu0 0.0
        %2014 = vmatpush2.msra.mxu0 0.0
        %2015 = vmatprep.mubr.f32.mxu0 0.0
        %2016 = vmatmul.mubr.f32.gmra.mxu0 %v254
        %v2017 = vpop.f32.mrf.mxu0
        %v2018 = vadd.f32 0.0, %v2017
        %v2019 = vpop.f32.mrf.mxu0
        %2020 = vdwg.mxu0
        %v2022 = vsel %vm475, %v1870, 0
        %v2025 = vsel %vm475, %v1943, 0
        %2027 = vmatprep.subr.mxu0 0.0
        %2028 = vmatpush1.xpose.msra.mxu0 0.0
        %2029 = vmatprep.subr.mxu0 0.0
        %2030 = vmatpush1.xpose.msra.mxu0 0.0
        %2031 = vmatprep.subr.mxu0 0.0
        %2032 = vmatpush1.xpose.msra.mxu0 0.0
        %2033 = vmatprep.subr.mxu0 0.0
        %2034 = vmatpush1.xpose.msra.mxu0 0.0
        %2035 = vmatprep.subr.mxu0 0.0
        %2036 = vmatpush1.xpose.msra.mxu0 0.0
        %2037 = vmatprep.subr.mxu0 0.0
        %2038 = vmatpush1.xpose.msra.mxu0 0.0
        %2039 = vmatprep.subr.mxu0 0.0
        %2040 = vmatpush1.xpose.msra.mxu0 0.0
        %2041 = vmatprep.subr.mxu0 0.0
        %2042 = vmatpush1.xpose.msra.mxu0 0.0
        %2043 = vmatprep.subr.mxu0 0.0
        %2044 = vmatpush1.xpose.msra.mxu0 0.0
        %2045 = vmatprep.subr.mxu0 0.0
        %2046 = vmatpush1.xpose.msra.mxu0 0.0
        %2047 = vmatprep.subr.mxu0 0.0
        %2048 = vmatpush1.xpose.msra.mxu0 0.0
        %2049 = vmatprep.subr.mxu0 0.0
        %2050 = vmatpush1.xpose.msra.mxu0 0.0
        %2051 = vmatprep.subr.mxu0 0.0
        %2052 = vmatpush1.xpose.msra.mxu0 0.0
        %2053 = vmatprep.subr.mxu0 0.0
        %2054 = vmatpush1.xpose.msra.mxu0 0.0
        %2055 = vmatprep.subr.mxu0 0.0
        %2056 = vmatpush1.xpose.msra.mxu0 0.0
        %2057 = vmatprep.subr.mxu0 0.0
        %2058 = vmatpush1.xpose.msra.mxu0 %v2025
        %2059 = vmatprep.subr.mxu0 0.0
        %2060 = vmatpush2.xpose.msra.mxu0 0.0
        %2061 = vmatprep.subr.mxu0 0.0
        %2062 = vmatpush2.xpose.msra.mxu0 0.0
        %2063 = vmatprep.subr.mxu0 0.0
        %2064 = vmatpush2.xpose.msra.mxu0 0.0
        %2065 = vmatprep.subr.mxu0 0.0
        %2066 = vmatpush2.xpose.msra.mxu0 0.0
        %2067 = vmatprep.subr.mxu0 0.0
        %2068 = vmatpush2.xpose.msra.mxu0 0.0
        %2069 = vmatprep.subr.mxu0 0.0
        %2070 = vmatpush2.xpose.msra.mxu0 0.0
        %2071 = vmatprep.subr.mxu0 0.0
        %2072 = vmatpush2.xpose.msra.mxu0 0.0
        %2073 = vmatprep.subr.mxu0 0.0
        %2074 = vmatpush2.xpose.msra.mxu0 0.0
        %2075 = vmatprep.subr.mxu0 0.0
        %2076 = vmatpush2.xpose.msra.mxu0 0.0
        %2077 = vmatprep.subr.mxu0 0.0
        %2078 = vmatpush2.xpose.msra.mxu0 0.0
        %2079 = vmatprep.subr.mxu0 0.0
        %2080 = vmatpush2.xpose.msra.mxu0 0.0
        %2081 = vmatprep.subr.mxu0 0.0
        %2082 = vmatpush2.xpose.msra.mxu0 0.0
        %2083 = vmatprep.subr.mxu0 0.0
        %2084 = vmatpush2.xpose.msra.mxu0 0.0
        %2085 = vmatprep.subr.mxu0 0.0
        %2086 = vmatpush2.xpose.msra.mxu0 0.0
        %2087 = vmatprep.subr.mxu0 0.0
        %2088 = vmatpush2.xpose.msra.mxu0 0.0
        %2089 = vmatprep.subr.mxu0 0.0
        %2090 = vmatpush2.xpose.msra.mxu0 0.0
        %2091 = vmatprep.mubr.f32.mxu0 0.0
        %2092 = vmatmul.mubr.f32.gmra.mxu0 %v2022
        %v2093 = vpop.f32.mrf.mxu0
        %v2094 = vadd.f32 0.0, %v2093
        %v2095 = vpop.f32.mrf.mxu0
        %2096 = vdwg.mxu0
        %v2097 = vsel %vm552, %v2094, -inf
        %2098 = vmax.xlane.f32.xlu0 %v2097
        %v2099 = vpop.xlane.xlu0 %2098
        %v2100 = vsub.f32 %v2094, %v2099
        %v2101 = vmul.f32 %v2100, 1.442695
        %v2102 = vpow.pop %v2101
        %v2103 = vsel %vm552, %v2102, 0.0
        %2104 = vadd.xlane.f32.xlu0 %v2103
        %v2105 = vpop.xlane.xlu0 %2104
        %v2106 = vrcp.pop %v2105
        %v2107 = vmul.f32 %v2102, %v2106
        %v2109 = vsel %vm552, %v2107, 0
        %2111 = vmatprep.subr.mxu0 0.0
        %2112 = vmatpush1.msra.mxu0 0.0
        %2113 = vmatprep.subr.mxu0 0.0
        %2114 = vmatpush1.msra.mxu0 0.0
        %2115 = vmatprep.subr.mxu0 0.0
        %2116 = vmatpush1.msra.mxu0 0.0
        %2117 = vmatprep.subr.mxu0 0.0
        %2118 = vmatpush1.msra.mxu0 0.0
        %2119 = vmatprep.subr.mxu0 0.0
        %2120 = vmatpush1.msra.mxu0 0.0
        %2121 = vmatprep.subr.mxu0 0.0
        %2122 = vmatpush1.msra.mxu0 0.0
        %2123 = vmatprep.subr.mxu0 0.0
        %2124 = vmatpush1.msra.mxu0 0.0
        %2125 = vmatprep.subr.mxu0 0.0
        %2126 = vmatpush1.msra.mxu0 0.0
        %2127 = vmatprep.subr.mxu0 0.0
        %2128 = vmatpush1.msra.mxu0 0.0
        %2129 = vmatprep.subr.mxu0 0.0
        %2130 = vmatpush1.msra.mxu0 0.0
        %2131 = vmatprep.subr.mxu0 0.0
        %2132 = vmatpush1.msra.mxu0 0.0
        %2133 = vmatprep.subr.mxu0 0.0
        %2134 = vmatpush1.msra.mxu0 0.0
        %2135 = vmatprep.subr.mxu0 0.0
        %2136 = vmatpush1.msra.mxu0 0.0
        %2137 = vmatprep.subr.mxu0 0.0
        %2138 = vmatpush1.msra.mxu0 0.0
        %2139 = vmatprep.subr.mxu0 0.0
        %2140 = vmatpush1.msra.mxu0 0.0
        %2141 = vmatprep.subr.mxu0 0.0
        %2142 = vmatpush1.msra.mxu0 %v2018
        %2143 = vmatprep.subr.mxu0 0.0
        %2144 = vmatpush2.msra.mxu0 0.0
        %2145 = vmatprep.subr.mxu0 0.0
        %2146 = vmatpush2.msra.mxu0 0.0
        %2147 = vmatprep.subr.mxu0 0.0
        %2148 = vmatpush2.msra.mxu0 0.0
        %2149 = vmatprep.subr.mxu0 0.0
        %2150 = vmatpush2.msra.mxu0 0.0
        %2151 = vmatprep.subr.mxu0 0.0
        %2152 = vmatpush2.msra.mxu0 0.0
        %2153 = vmatprep.subr.mxu0 0.0
        %2154 = vmatpush2.msra.mxu0 0.0
        %2155 = vmatprep.subr.mxu0 0.0
        %2156 = vmatpush2.msra.mxu0 0.0
        %2157 = vmatprep.subr.mxu0 0.0
        %2158 = vmatpush2.msra.mxu0 0.0
        %2159 = vmatprep.subr.mxu0 0.0
        %2160 = vmatpush2.msra.mxu0 0.0
        %2161 = vmatprep.subr.mxu0 0.0
        %2162 = vmatpush2.msra.mxu0 0.0
        %2163 = vmatprep.subr.mxu0 0.0
        %2164 = vmatpush2.msra.mxu0 0.0
        %2165 = vmatprep.subr.mxu0 0.0
        %2166 = vmatpush2.msra.mxu0 0.0
        %2167 = vmatprep.subr.mxu0 0.0
        %2168 = vmatpush2.msra.mxu0 0.0
        %2169 = vmatprep.subr.mxu0 0.0
        %2170 = vmatpush2.msra.mxu0 0.0
        %2171 = vmatprep.subr.mxu0 0.0
        %2172 = vmatpush2.msra.mxu0 0.0
        %2173 = vmatprep.subr.mxu0 0.0
        %2174 = vmatpush2.msra.mxu0 0.0
        %2175 = vmatprep.mubr.f32.mxu0 0.0
        %2176 = vmatmul.mubr.f32.gmra.mxu0 %v2109
        %v2177 = vpop.f32.mrf.mxu0
        %v2178 = vadd.f32 0.0, %v2177
        %v2179 = vpop.f32.mrf.mxu0
        %2180 = vdwg.mxu0
        %s2181 = scalar_lea.vmem %s1, 160
        %v2182 = vld [vmem:[%s2181] sm:$0xff]
        %v2183 = vld [vmem:[%s2181 + $0x8] sm:$0xff]
        %v2184 = vld [vmem:[%s2181 + $0x10] sm:$0xff]
        %v2185 = vld [vmem:[%s2181 + $0x18] sm:$0xff]
        %2186 = vmatprep.subr.mxu0 0.0
        %2187 = vmatpush1.msra.mxu0 0.0
        %2188 = vmatprep.subr.mxu0 0.0
        %2189 = vmatpush1.msra.mxu0 0.0
        %2190 = vmatprep.subr.mxu0 0.0
        %2191 = vmatpush1.msra.mxu0 0.0
        %2192 = vmatprep.subr.mxu0 0.0
        %2193 = vmatpush1.msra.mxu0 0.0
        %2194 = vmatprep.subr.mxu0 0.0
        %2195 = vmatpush1.msra.mxu0 0.0
        %2196 = vmatprep.subr.mxu0 0.0
        %2197 = vmatpush1.msra.mxu0 0.0
        %2198 = vmatprep.subr.mxu0 0.0
        %2199 = vmatpush1.msra.mxu0 0.0
        %2200 = vmatprep.subr.mxu0 0.0
        %2201 = vmatpush1.msra.mxu0 0.0
        %2202 = vmatprep.subr.mxu0 0.0
        %2203 = vmatpush1.msra.mxu0 0.0
        %2204 = vmatprep.subr.mxu0 0.0
        %2205 = vmatpush1.msra.mxu0 0.0
        %2206 = vmatprep.subr.mxu0 0.0
        %2207 = vmatpush1.msra.mxu0 0.0
        %2208 = vmatprep.subr.mxu0 0.0
        %2209 = vmatpush1.msra.mxu0 0.0
        %2210 = vmatprep.subr.mxu0 0.0
        %2211 = vmatpush1.msra.mxu0 %v2185
        %2212 = vmatprep.subr.mxu0 0.0
        %2213 = vmatpush1.msra.mxu0 %v2184
        %2214 = vmatprep.subr.mxu0 0.0
        %2215 = vmatpush1.msra.mxu0 %v2183
        %2216 = vmatprep.subr.mxu0 0.0
        %2217 = vmatpush1.msra.mxu0 %v2182
        %2218 = vmatprep.subr.mxu0 0.0
        %2219 = vmatpush2.msra.mxu0 0.0
        %2220 = vmatprep.subr.mxu0 0.0
        %2221 = vmatpush2.msra.mxu0 0.0
        %2222 = vmatprep.subr.mxu0 0.0
        %2223 = vmatpush2.msra.mxu0 0.0
        %2224 = vmatprep.subr.mxu0 0.0
        %2225 = vmatpush2.msra.mxu0 0.0
        %2226 = vmatprep.subr.mxu0 0.0
        %2227 = vmatpush2.msra.mxu0 0.0
        %2228 = vmatprep.subr.mxu0 0.0
        %2229 = vmatpush2.msra.mxu0 0.0
        %2230 = vmatprep.subr.mxu0 0.0
        %2231 = vmatpush2.msra.mxu0 0.0
        %2232 = vmatprep.subr.mxu0 0.0
        %2233 = vmatpush2.msra.mxu0 0.0
        %2234 = vmatprep.subr.mxu0 0.0
        %2235 = vmatpush2.msra.mxu0 0.0
        %2236 = vmatprep.subr.mxu0 0.0
        %2237 = vmatpush2.msra.mxu0 0.0
        %2238 = vmatprep.subr.mxu0 0.0
        %2239 = vmatpush2.msra.mxu0 0.0
        %2240 = vmatprep.subr.mxu0 0.0
        %2241 = vmatpush2.msra.mxu0 0.0
        %2242 = vmatprep.subr.mxu0 0.0
        %2243 = vmatpush2.msra.mxu0 0.0
        %2244 = vmatprep.subr.mxu0 0.0
        %2245 = vmatpush2.msra.mxu0 0.0
        %2246 = vmatprep.subr.mxu0 0.0
        %2247 = vmatpush2.msra.mxu0 0.0
        %2248 = vmatprep.subr.mxu0 0.0
        %2249 = vmatpush2.msra.mxu0 0.0
        %2250 = vmatprep.mubr.f32.mxu0 0.0
        %2251 = vmatmul.mubr.f32.gmra.mxu0 %v254
        %v2252 = vpop.f32.mrf.mxu0
        %v2253 = vadd.f32 0.0, %v2252
        %v2254 = vpop.f32.mrf.mxu0
        %2255 = vdwg.mxu0
        %v2256 = vmul.f32 %v2253, 0.5
        %s2257 = scalar_lea.vmem %s2, 160
        %v2258 = vld [vmem:[%s2257] sm:$0xff]
        %v2259 = vld [vmem:[%s2257 + $0x8] sm:$0xff]
        %v2260 = vld [vmem:[%s2257 + $0x10] sm:$0xff]
        %v2261 = vld [vmem:[%s2257 + $0x18] sm:$0xff]
        %2262 = vmatprep.subr.mxu0 0.0
        %2263 = vmatpush1.msra.mxu0 0.0
        %2264 = vmatprep.subr.mxu0 0.0
        %2265 = vmatpush1.msra.mxu0 0.0
        %2266 = vmatprep.subr.mxu0 0.0
        %2267 = vmatpush1.msra.mxu0 0.0
        %2268 = vmatprep.subr.mxu0 0.0
        %2269 = vmatpush1.msra.mxu0 0.0
        %2270 = vmatprep.subr.mxu0 0.0
        %2271 = vmatpush1.msra.mxu0 0.0
        %2272 = vmatprep.subr.mxu0 0.0
        %2273 = vmatpush1.msra.mxu0 0.0
        %2274 = vmatprep.subr.mxu0 0.0
        %2275 = vmatpush1.msra.mxu0 0.0
        %2276 = vmatprep.subr.mxu0 0.0
        %2277 = vmatpush1.msra.mxu0 0.0
        %2278 = vmatprep.subr.mxu0 0.0
        %2279 = vmatpush1.msra.mxu0 0.0
        %2280 = vmatprep.subr.mxu0 0.0
        %2281 = vmatpush1.msra.mxu0 0.0
        %2282 = vmatprep.subr.mxu0 0.0
        %2283 = vmatpush1.msra.mxu0 0.0
        %2284 = vmatprep.subr.mxu0 0.0
        %2285 = vmatpush1.msra.mxu0 0.0
        %2286 = vmatprep.subr.mxu0 0.0
        %2287 = vmatpush1.msra.mxu0 %v2261
        %2288 = vmatprep.subr.mxu0 0.0
        %2289 = vmatpush1.msra.mxu0 %v2260
        %2290 = vmatprep.subr.mxu0 0.0
        %2291 = vmatpush1.msra.mxu0 %v2259
        %2292 = vmatprep.subr.mxu0 0.0
        %2293 = vmatpush1.msra.mxu0 %v2258
        %2294 = vmatprep.subr.mxu0 0.0
        %2295 = vmatpush2.msra.mxu0 0.0
        %2296 = vmatprep.subr.mxu0 0.0
        %2297 = vmatpush2.msra.mxu0 0.0
        %2298 = vmatprep.subr.mxu0 0.0
        %2299 = vmatpush2.msra.mxu0 0.0
        %2300 = vmatprep.subr.mxu0 0.0
        %2301 = vmatpush2.msra.mxu0 0.0
        %2302 = vmatprep.subr.mxu0 0.0
        %2303 = vmatpush2.msra.mxu0 0.0
        %2304 = vmatprep.subr.mxu0 0.0
        %2305 = vmatpush2.msra.mxu0 0.0
        %2306 = vmatprep.subr.mxu0 0.0
        %2307 = vmatpush2.msra.mxu0 0.0
        %2308 = vmatprep.subr.mxu0 0.0
        %2309 = vmatpush2.msra.mxu0 0.0
        %2310 = vmatprep.subr.mxu0 0.0
        %2311 = vmatpush2.msra.mxu0 0.0
        %2312 = vmatprep.subr.mxu0 0.0
        %2313 = vmatpush2.msra.mxu0 0.0
        %2314 = vmatprep.subr.mxu0 0.0
        %2315 = vmatpush2.msra.mxu0 0.0
        %2316 = vmatprep.subr.mxu0 0.0
        %2317 = vmatpush2.msra.mxu0 0.0
        %2318 = vmatprep.subr.mxu0 0.0
        %2319 = vmatpush2.msra.mxu0 0.0
        %2320 = vmatprep.subr.mxu0 0.0
        %2321 = vmatpush2.msra.mxu0 0.0
        %2322 = vmatprep.subr.mxu0 0.0
        %2323 = vmatpush2.msra.mxu0 0.0
        %2324 = vmatprep.subr.mxu0 0.0
        %2325 = vmatpush2.msra.mxu0 0.0
        %2326 = vmatprep.mubr.f32.mxu0 0.0
        %2327 = vmatmul.mubr.f32.gmra.mxu0 %v254
        %v2328 = vpop.f32.mrf.mxu0
        %v2329 = vadd.f32 0.0, %v2328
        %v2330 = vpop.f32.mrf.mxu0
        %2331 = vdwg.mxu0
        %s2332 = scalar_lea.vmem %s3, 160
        %v2333 = vld [vmem:[%s2332] sm:$0xff]
        %v2334 = vld [vmem:[%s2332 + $0x8] sm:$0xff]
        %v2335 = vld [vmem:[%s2332 + $0x10] sm:$0xff]
        %v2336 = vld [vmem:[%s2332 + $0x18] sm:$0xff]
        %2337 = vmatprep.subr.mxu0 0.0
        %2338 = vmatpush1.msra.mxu0 0.0
        %2339 = vmatprep.subr.mxu0 0.0
        %2340 = vmatpush1.msra.mxu0 0.0
        %2341 = vmatprep.subr.mxu0 0.0
        %2342 = vmatpush1.msra.mxu0 0.0
        %2343 = vmatprep.subr.mxu0 0.0
        %2344 = vmatpush1.msra.mxu0 0.0
        %2345 = vmatprep.subr.mxu0 0.0
        %2346 = vmatpush1.msra.mxu0 0.0
        %2347 = vmatprep.subr.mxu0 0.0
        %2348 = vmatpush1.msra.mxu0 0.0
        %2349 = vmatprep.subr.mxu0 0.0
        %2350 = vmatpush1.msra.mxu0 0.0
        %2351 = vmatprep.subr.mxu0 0.0
        %2352 = vmatpush1.msra.mxu0 0.0
        %2353 = vmatprep.subr.mxu0 0.0
        %2354 = vmatpush1.msra.mxu0 0.0
        %2355 = vmatprep.subr.mxu0 0.0
        %2356 = vmatpush1.msra.mxu0 0.0
        %2357 = vmatprep.subr.mxu0 0.0
        %2358 = vmatpush1.msra.mxu0 0.0
        %2359 = vmatprep.subr.mxu0 0.0
        %2360 = vmatpush1.msra.mxu0 0.0
        %2361 = vmatprep.subr.mxu0 0.0
        %2362 = vmatpush1.msra.mxu0 %v2336
        %2363 = vmatprep.subr.mxu0 0.0
        %2364 = vmatpush1.msra.mxu0 %v2335
        %2365 = vmatprep.subr.mxu0 0.0
        %2366 = vmatpush1.msra.mxu0 %v2334
        %2367 = vmatprep.subr.mxu0 0.0
        %2368 = vmatpush1.msra.mxu0 %v2333
        %2369 = vmatprep.subr.mxu0 0.0
        %2370 = vmatpush2.msra.mxu0 0.0
        %2371 = vmatprep.subr.mxu0 0.0
        %2372 = vmatpush2.msra.mxu0 0.0
        %2373 = vmatprep.subr.mxu0 0.0
        %2374 = vmatpush2.msra.mxu0 0.0
        %2375 = vmatprep.subr.mxu0 0.0
        %2376 = vmatpush2.msra.mxu0 0.0
        %2377 = vmatprep.subr.mxu0 0.0
        %2378 = vmatpush2.msra.mxu0 0.0
        %2379 = vmatprep.subr.mxu0 0.0
        %2380 = vmatpush2.msra.mxu0 0.0
        %2381 = vmatprep.subr.mxu0 0.0
        %2382 = vmatpush2.msra.mxu0 0.0
        %2383 = vmatprep.subr.mxu0 0.0
        %2384 = vmatpush2.msra.mxu0 0.0
        %2385 = vmatprep.subr.mxu0 0.0
        %2386 = vmatpush2.msra.mxu0 0.0
        %2387 = vmatprep.subr.mxu0 0.0
        %2388 = vmatpush2.msra.mxu0 0.0
        %2389 = vmatprep.subr.mxu0 0.0
        %2390 = vmatpush2.msra.mxu0 0.0
        %2391 = vmatprep.subr.mxu0 0.0
        %2392 = vmatpush2.msra.mxu0 0.0
        %2393 = vmatprep.subr.mxu0 0.0
        %2394 = vmatpush2.msra.mxu0 0.0
        %2395 = vmatprep.subr.mxu0 0.0
        %2396 = vmatpush2.msra.mxu0 0.0
        %2397 = vmatprep.subr.mxu0 0.0
        %2398 = vmatpush2.msra.mxu0 0.0
        %2399 = vmatprep.subr.mxu0 0.0
        %2400 = vmatpush2.msra.mxu0 0.0
        %2401 = vmatprep.mubr.f32.mxu0 0.0
        %2402 = vmatmul.mubr.f32.gmra.mxu0 %v254
        %v2403 = vpop.f32.mrf.mxu0
        %v2404 = vadd.f32 0.0, %v2403
        %v2405 = vpop.f32.mrf.mxu0
        %2406 = vdwg.mxu0
        %v2408 = vsel %vm475, %v2256, 0
        %v2411 = vsel %vm475, %v2329, 0
        %2413 = vmatprep.subr.mxu0 0.0
        %2414 = vmatpush1.xpose.msra.mxu0 0.0
        %2415 = vmatprep.subr.mxu0 0.0
        %2416 = vmatpush1.xpose.msra.mxu0 0.0
        %2417 = vmatprep.subr.mxu0 0.0
        %2418 = vmatpush1.xpose.msra.mxu0 0.0
        %2419 = vmatprep.subr.mxu0 0.0
        %2420 = vmatpush1.xpose.msra.mxu0 0.0
        %2421 = vmatprep.subr.mxu0 0.0
        %2422 = vmatpush1.xpose.msra.mxu0 0.0
        %2423 = vmatprep.subr.mxu0 0.0
        %2424 = vmatpush1.xpose.msra.mxu0 0.0
        %2425 = vmatprep.subr.mxu0 0.0
        %2426 = vmatpush1.xpose.msra.mxu0 0.0
        %2427 = vmatprep.subr.mxu0 0.0
        %2428 = vmatpush1.xpose.msra.mxu0 0.0
        %2429 = vmatprep.subr.mxu0 0.0
        %2430 = vmatpush1.xpose.msra.mxu0 0.0
        %2431 = vmatprep.subr.mxu0 0.0
        %2432 = vmatpush1.xpose.msra.mxu0 0.0
        %2433 = vmatprep.subr.mxu0 0.0
        %2434 = vmatpush1.xpose.msra.mxu0 0.0
        %2435 = vmatprep.subr.mxu0 0.0
        %2436 = vmatpush1.xpose.msra.mxu0 0.0
        %2437 = vmatprep.subr.mxu0 0.0
        %2438 = vmatpush1.xpose.msra.mxu0 0.0
        %2439 = vmatprep.subr.mxu0 0.0
        %2440 = vmatpush1.xpose.msra.mxu0 0.0
        %2441 = vmatprep.subr.mxu0 0.0
        %2442 = vmatpush1.xpose.msra.mxu0 0.0
        %2443 = vmatprep.subr.mxu0 0.0
        %2444 = vmatpush1.xpose.msra.mxu0 %v2411
        %2445 = vmatprep.subr.mxu0 0.0
        %2446 = vmatpush2.xpose.msra.mxu0 0.0
        %2447 = vmatprep.subr.mxu0 0.0
        %2448 = vmatpush2.xpose.msra.mxu0 0.0
        %2449 = vmatprep.subr.mxu0 0.0
        %2450 = vmatpush2.xpose.msra.mxu0 0.0
        %2451 = vmatprep.subr.mxu0 0.0
        %2452 = vmatpush2.xpose.msra.mxu0 0.0
        %2453 = vmatprep.subr.mxu0 0.0
        %2454 = vmatpush2.xpose.msra.mxu0 0.0
        %2455 = vmatprep.subr.mxu0 0.0
        %2456 = vmatpush2.xpose.msra.mxu0 0.0
        %2457 = vmatprep.subr.mxu0 0.0
        %2458 = vmatpush2.xpose.msra.mxu0 0.0
        %2459 = vmatprep.subr.mxu0 0.0
        %2460 = vmatpush2.xpose.msra.mxu0 0.0
        %2461 = vmatprep.subr.mxu0 0.0
        %2462 = vmatpush2.xpose.msra.mxu0 0.0
        %2463 = vmatprep.subr.mxu0 0.0
        %2464 = vmatpush2.xpose.msra.mxu0 0.0
        %2465 = vmatprep.subr.mxu0 0.0
        %2466 = vmatpush2.xpose.msra.mxu0 0.0
        %2467 = vmatprep.subr.mxu0 0.0
        %2468 = vmatpush2.xpose.msra.mxu0 0.0
        %2469 = vmatprep.subr.mxu0 0.0
        %2470 = vmatpush2.xpose.msra.mxu0 0.0
        %2471 = vmatprep.subr.mxu0 0.0
        %2472 = vmatpush2.xpose.msra.mxu0 0.0
        %2473 = vmatprep.subr.mxu0 0.0
        %2474 = vmatpush2.xpose.msra.mxu0 0.0
        %2475 = vmatprep.subr.mxu0 0.0
        %2476 = vmatpush2.xpose.msra.mxu0 0.0
        %2477 = vmatprep.mubr.f32.mxu0 0.0
        %2478 = vmatmul.mubr.f32.gmra.mxu0 %v2408
        %v2479 = vpop.f32.mrf.mxu0
        %v2480 = vadd.f32 0.0, %v2479
        %v2481 = vpop.f32.mrf.mxu0
        %2482 = vdwg.mxu0
        %v2483 = vsel %vm552, %v2480, -inf
        %2484 = vmax.xlane.f32.xlu0 %v2483
        %v2485 = vpop.xlane.xlu0 %2484
        %v2486 = vsub.f32 %v2480, %v2485
        %v2487 = vmul.f32 %v2486, 1.442695
        %v2488 = vpow.pop %v2487
        %v2489 = vsel %vm552, %v2488, 0.0
        %2490 = vadd.xlane.f32.xlu0 %v2489
        %v2491 = vpop.xlane.xlu0 %2490
        %v2492 = vrcp.pop %v2491
        %v2493 = vmul.f32 %v2488, %v2492
        %v2495 = vsel %vm552, %v2493, 0
        %2497 = vmatprep.subr.mxu0 0.0
        %2498 = vmatpush1.msra.mxu0 0.0
        %2499 = vmatprep.subr.mxu0 0.0
        %2500 = vmatpush1.msra.mxu0 0.0
        %2501 = vmatprep.subr.mxu0 0.0
        %2502 = vmatpush1.msra.mxu0 0.0
        %2503 = vmatprep.subr.mxu0 0.0
        %2504 = vmatpush1.msra.mxu0 0.0
        %2505 = vmatprep.subr.mxu0 0.0
        %2506 = vmatpush1.msra.mxu0 0.0
        %2507 = vmatprep.subr.mxu0 0.0
        %2508 = vmatpush1.msra.mxu0 0.0
        %2509 = vmatprep.subr.mxu0 0.0
        %2510 = vmatpush1.msra.mxu0 0.0
        %2511 = vmatprep.subr.mxu0 0.0
        %2512 = vmatpush1.msra.mxu0 0.0
        %2513 = vmatprep.subr.mxu0 0.0
        %2514 = vmatpush1.msra.mxu0 0.0
        %2515 = vmatprep.subr.mxu0 0.0
        %2516 = vmatpush1.msra.mxu0 0.0
        %2517 = vmatprep.subr.mxu0 0.0
        %2518 = vmatpush1.msra.mxu0 0.0
        %2519 = vmatprep.subr.mxu0 0.0
        %2520 = vmatpush1.msra.mxu0 0.0
        %2521 = vmatprep.subr.mxu0 0.0
        %2522 = vmatpush1.msra.mxu0 0.0
        %2523 = vmatprep.subr.mxu0 0.0
        %2524 = vmatpush1.msra.mxu0 0.0
        %2525 = vmatprep.subr.mxu0 0.0
        %2526 = vmatpush1.msra.mxu0 0.0
        %2527 = vmatprep.subr.mxu0 0.0
        %2528 = vmatpush1.msra.mxu0 %v2404
        %2529 = vmatprep.subr.mxu0 0.0
        %2530 = vmatpush2.msra.mxu0 0.0
        %2531 = vmatprep.subr.mxu0 0.0
        %2532 = vmatpush2.msra.mxu0 0.0
        %2533 = vmatprep.subr.mxu0 0.0
        %2534 = vmatpush2.msra.mxu0 0.0
        %2535 = vmatprep.subr.mxu0 0.0
        %2536 = vmatpush2.msra.mxu0 0.0
        %2537 = vmatprep.subr.mxu0 0.0
        %2538 = vmatpush2.msra.mxu0 0.0
        %2539 = vmatprep.subr.mxu0 0.0
        %2540 = vmatpush2.msra.mxu0 0.0
        %2541 = vmatprep.subr.mxu0 0.0
        %2542 = vmatpush2.msra.mxu0 0.0
        %2543 = vmatprep.subr.mxu0 0.0
        %2544 = vmatpush2.msra.mxu0 0.0
        %2545 = vmatprep.subr.mxu0 0.0
        %2546 = vmatpush2.msra.mxu0 0.0
        %2547 = vmatprep.subr.mxu0 0.0
        %2548 = vmatpush2.msra.mxu0 0.0
        %2549 = vmatprep.subr.mxu0 0.0
        %2550 = vmatpush2.msra.mxu0 0.0
        %2551 = vmatprep.subr.mxu0 0.0
        %2552 = vmatpush2.msra.mxu0 0.0
        %2553 = vmatprep.subr.mxu0 0.0
        %2554 = vmatpush2.msra.mxu0 0.0
        %2555 = vmatprep.subr.mxu0 0.0
        %2556 = vmatpush2.msra.mxu0 0.0
        %2557 = vmatprep.subr.mxu0 0.0
        %2558 = vmatpush2.msra.mxu0 0.0
        %2559 = vmatprep.subr.mxu0 0.0
        %2560 = vmatpush2.msra.mxu0 0.0
        %2561 = vmatprep.mubr.f32.mxu0 0.0
        %2562 = vmatmul.mubr.f32.gmra.mxu0 %v2495
        %v2563 = vpop.f32.mrf.mxu0
        %v2564 = vadd.f32 0.0, %v2563
        %v2565 = vpop.f32.mrf.mxu0
        %2566 = vdwg.mxu0
        %s2567 = scalar_lea.vmem %s1, 192
        %v2568 = vld [vmem:[%s2567] sm:$0xff]
        %v2569 = vld [vmem:[%s2567 + $0x8] sm:$0xff]
        %v2570 = vld [vmem:[%s2567 + $0x10] sm:$0xff]
        %v2571 = vld [vmem:[%s2567 + $0x18] sm:$0xff]
        %2572 = vmatprep.subr.mxu0 0.0
        %2573 = vmatpush1.msra.mxu0 0.0
        %2574 = vmatprep.subr.mxu0 0.0
        %2575 = vmatpush1.msra.mxu0 0.0
        %2576 = vmatprep.subr.mxu0 0.0
        %2577 = vmatpush1.msra.mxu0 0.0
        %2578 = vmatprep.subr.mxu0 0.0
        %2579 = vmatpush1.msra.mxu0 0.0
        %2580 = vmatprep.subr.mxu0 0.0
        %2581 = vmatpush1.msra.mxu0 0.0
        %2582 = vmatprep.subr.mxu0 0.0
        %2583 = vmatpush1.msra.mxu0 0.0
        %2584 = vmatprep.subr.mxu0 0.0
        %2585 = vmatpush1.msra.mxu0 0.0
        %2586 = vmatprep.subr.mxu0 0.0
        %2587 = vmatpush1.msra.mxu0 0.0
        %2588 = vmatprep.subr.mxu0 0.0
        %2589 = vmatpush1.msra.mxu0 0.0
        %2590 = vmatprep.subr.mxu0 0.0
        %2591 = vmatpush1.msra.mxu0 0.0
        %2592 = vmatprep.subr.mxu0 0.0
        %2593 = vmatpush1.msra.mxu0 0.0
        %2594 = vmatprep.subr.mxu0 0.0
        %2595 = vmatpush1.msra.mxu0 0.0
        %2596 = vmatprep.subr.mxu0 0.0
        %2597 = vmatpush1.msra.mxu0 %v2571
        %2598 = vmatprep.subr.mxu0 0.0
        %2599 = vmatpush1.msra.mxu0 %v2570
        %2600 = vmatprep.subr.mxu0 0.0
        %2601 = vmatpush1.msra.mxu0 %v2569
        %2602 = vmatprep.subr.mxu0 0.0
        %2603 = vmatpush1.msra.mxu0 %v2568
        %2604 = vmatprep.subr.mxu0 0.0
        %2605 = vmatpush2.msra.mxu0 0.0
        %2606 = vmatprep.subr.mxu0 0.0
        %2607 = vmatpush2.msra.mxu0 0.0
        %2608 = vmatprep.subr.mxu0 0.0
        %2609 = vmatpush2.msra.mxu0 0.0
        %2610 = vmatprep.subr.mxu0 0.0
        %2611 = vmatpush2.msra.mxu0 0.0
        %2612 = vmatprep.subr.mxu0 0.0
        %2613 = vmatpush2.msra.mxu0 0.0
        %2614 = vmatprep.subr.mxu0 0.0
        %2615 = vmatpush2.msra.mxu0 0.0
        %2616 = vmatprep.subr.mxu0 0.0
        %2617 = vmatpush2.msra.mxu0 0.0
        %2618 = vmatprep.subr.mxu0 0.0
        %2619 = vmatpush2.msra.mxu0 0.0
        %2620 = vmatprep.subr.mxu0 0.0
        %2621 = vmatpush2.msra.mxu0 0.0
        %2622 = vmatprep.subr.mxu0 0.0
        %2623 = vmatpush2.msra.mxu0 0.0
        %2624 = vmatprep.subr.mxu0 0.0
        %2625 = vmatpush2.msra.mxu0 0.0
        %2626 = vmatprep.subr.mxu0 0.0
        %2627 = vmatpush2.msra.mxu0 0.0
        %2628 = vmatprep.subr.mxu0 0.0
        %2629 = vmatpush2.msra.mxu0 0.0
        %2630 = vmatprep.subr.mxu0 0.0
        %2631 = vmatpush2.msra.mxu0 0.0
        %2632 = vmatprep.subr.mxu0 0.0
        %2633 = vmatpush2.msra.mxu0 0.0
        %2634 = vmatprep.subr.mxu0 0.0
        %2635 = vmatpush2.msra.mxu0 0.0
        %2636 = vmatprep.mubr.f32.mxu0 0.0
        %2637 = vmatmul.mubr.f32.gmra.mxu0 %v254
        %v2638 = vpop.f32.mrf.mxu0
        %v2639 = vadd.f32 0.0, %v2638
        %v2640 = vpop.f32.mrf.mxu0
        %2641 = vdwg.mxu0
        %v2642 = vmul.f32 %v2639, 0.5
        %s2643 = scalar_lea.vmem %s2, 192
        %v2644 = vld [vmem:[%s2643] sm:$0xff]
        %v2645 = vld [vmem:[%s2643 + $0x8] sm:$0xff]
        %v2646 = vld [vmem:[%s2643 + $0x10] sm:$0xff]
        %v2647 = vld [vmem:[%s2643 + $0x18] sm:$0xff]
        %2648 = vmatprep.subr.mxu0 0.0
        %2649 = vmatpush1.msra.mxu0 0.0
        %2650 = vmatprep.subr.mxu0 0.0
        %2651 = vmatpush1.msra.mxu0 0.0
        %2652 = vmatprep.subr.mxu0 0.0
        %2653 = vmatpush1.msra.mxu0 0.0
        %2654 = vmatprep.subr.mxu0 0.0
        %2655 = vmatpush1.msra.mxu0 0.0
        %2656 = vmatprep.subr.mxu0 0.0
        %2657 = vmatpush1.msra.mxu0 0.0
        %2658 = vmatprep.subr.mxu0 0.0
        %2659 = vmatpush1.msra.mxu0 0.0
        %2660 = vmatprep.subr.mxu0 0.0
        %2661 = vmatpush1.msra.mxu0 0.0
        %2662 = vmatprep.subr.mxu0 0.0
        %2663 = vmatpush1.msra.mxu0 0.0
        %2664 = vmatprep.subr.mxu0 0.0
        %2665 = vmatpush1.msra.mxu0 0.0
        %2666 = vmatprep.subr.mxu0 0.0
        %2667 = vmatpush1.msra.mxu0 0.0
        %2668 = vmatprep.subr.mxu0 0.0
        %2669 = vmatpush1.msra.mxu0 0.0
        %2670 = vmatprep.subr.mxu0 0.0
        %2671 = vmatpush1.msra.mxu0 0.0
        %2672 = vmatprep.subr.mxu0 0.0
        %2673 = vmatpush1.msra.mxu0 %v2647
        %2674 = vmatprep.subr.mxu0 0.0
        %2675 = vmatpush1.msra.mxu0 %v2646
        %2676 = vmatprep.subr.mxu0 0.0
        %2677 = vmatpush1.msra.mxu0 %v2645
        %2678 = vmatprep.subr.mxu0 0.0
        %2679 = vmatpush1.msra.mxu0 %v2644
        %2680 = vmatprep.subr.mxu0 0.0
        %2681 = vmatpush2.msra.mxu0 0.0
        %2682 = vmatprep.subr.mxu0 0.0
        %2683 = vmatpush2.msra.mxu0 0.0
        %2684 = vmatprep.subr.mxu0 0.0
        %2685 = vmatpush2.msra.mxu0 0.0
        %2686 = vmatprep.subr.mxu0 0.0
        %2687 = vmatpush2.msra.mxu0 0.0
        %2688 = vmatprep.subr.mxu0 0.0
        %2689 = vmatpush2.msra.mxu0 0.0
        %2690 = vmatprep.subr.mxu0 0.0
        %2691 = vmatpush2.msra.mxu0 0.0
        %2692 = vmatprep.subr.mxu0 0.0
        %2693 = vmatpush2.msra.mxu0 0.0
        %2694 = vmatprep.subr.mxu0 0.0
        %2695 = vmatpush2.msra.mxu0 0.0
        %2696 = vmatprep.subr.mxu0 0.0
        %2697 = vmatpush2.msra.mxu0 0.0
        %2698 = vmatprep.subr.mxu0 0.0
        %2699 = vmatpush2.msra.mxu0 0.0
        %2700 = vmatprep.subr.mxu0 0.0
        %2701 = vmatpush2.msra.mxu0 0.0
        %2702 = vmatprep.subr.mxu0 0.0
        %2703 = vmatpush2.msra.mxu0 0.0
        %2704 = vmatprep.subr.mxu0 0.0
        %2705 = vmatpush2.msra.mxu0 0.0
        %2706 = vmatprep.subr.mxu0 0.0
        %2707 = vmatpush2.msra.mxu0 0.0
        %2708 = vmatprep.subr.mxu0 0.0
        %2709 = vmatpush2.msra.mxu0 0.0
        %2710 = vmatprep.subr.mxu0 0.0
        %2711 = vmatpush2.msra.mxu0 0.0
        %2712 = vmatprep.mubr.f32.mxu0 0.0
        %2713 = vmatmul.mubr.f32.gmra.mxu0 %v254
        %v2714 = vpop.f32.mrf.mxu0
        %v2715 = vadd.f32 0.0, %v2714
        %v2716 = vpop.f32.mrf.mxu0
        %2717 = vdwg.mxu0
        %s2718 = scalar_lea.vmem %s3, 192
        %v2719 = vld [vmem:[%s2718] sm:$0xff]
        %v2720 = vld [vmem:[%s2718 + $0x8] sm:$0xff]
        %v2721 = vld [vmem:[%s2718 + $0x10] sm:$0xff]
        %v2722 = vld [vmem:[%s2718 + $0x18] sm:$0xff]
        %2723 = vmatprep.subr.mxu0 0.0
        %2724 = vmatpush1.msra.mxu0 0.0
        %2725 = vmatprep.subr.mxu0 0.0
        %2726 = vmatpush1.msra.mxu0 0.0
        %2727 = vmatprep.subr.mxu0 0.0
        %2728 = vmatpush1.msra.mxu0 0.0
        %2729 = vmatprep.subr.mxu0 0.0
        %2730 = vmatpush1.msra.mxu0 0.0
        %2731 = vmatprep.subr.mxu0 0.0
        %2732 = vmatpush1.msra.mxu0 0.0
        %2733 = vmatprep.subr.mxu0 0.0
        %2734 = vmatpush1.msra.mxu0 0.0
        %2735 = vmatprep.subr.mxu0 0.0
        %2736 = vmatpush1.msra.mxu0 0.0
        %2737 = vmatprep.subr.mxu0 0.0
        %2738 = vmatpush1.msra.mxu0 0.0
        %2739 = vmatprep.subr.mxu0 0.0
        %2740 = vmatpush1.msra.mxu0 0.0
        %2741 = vmatprep.subr.mxu0 0.0
        %2742 = vmatpush1.msra.mxu0 0.0
        %2743 = vmatprep.subr.mxu0 0.0
        %2744 = vmatpush1.msra.mxu0 0.0
        %2745 = vmatprep.subr.mxu0 0.0
        %2746 = vmatpush1.msra.mxu0 0.0
        %2747 = vmatprep.subr.mxu0 0.0
        %2748 = vmatpush1.msra.mxu0 %v2722
        %2749 = vmatprep.subr.mxu0 0.0
        %2750 = vmatpush1.msra.mxu0 %v2721
        %2751 = vmatprep.subr.mxu0 0.0
        %2752 = vmatpush1.msra.mxu0 %v2720
        %2753 = vmatprep.subr.mxu0 0.0
        %2754 = vmatpush1.msra.mxu0 %v2719
        %2755 = vmatprep.subr.mxu0 0.0
        %2756 = vmatpush2.msra.mxu0 0.0
        %2757 = vmatprep.subr.mxu0 0.0
        %2758 = vmatpush2.msra.mxu0 0.0
        %2759 = vmatprep.subr.mxu0 0.0
        %2760 = vmatpush2.msra.mxu0 0.0
        %2761 = vmatprep.subr.mxu0 0.0
        %2762 = vmatpush2.msra.mxu0 0.0
        %2763 = vmatprep.subr.mxu0 0.0
        %2764 = vmatpush2.msra.mxu0 0.0
        %2765 = vmatprep.subr.mxu0 0.0
        %2766 = vmatpush2.msra.mxu0 0.0
        %2767 = vmatprep.subr.mxu0 0.0
        %2768 = vmatpush2.msra.mxu0 0.0
        %2769 = vmatprep.subr.mxu0 0.0
        %2770 = vmatpush2.msra.mxu0 0.0
        %2771 = vmatprep.subr.mxu0 0.0
        %2772 = vmatpush2.msra.mxu0 0.0
        %2773 = vmatprep.subr.mxu0 0.0
        %2774 = vmatpush2.msra.mxu0 0.0
        %2775 = vmatprep.subr.mxu0 0.0
        %2776 = vmatpush2.msra.mxu0 0.0
        %2777 = vmatprep.subr.mxu0 0.0
        %2778 = vmatpush2.msra.mxu0 0.0
        %2779 = vmatprep.subr.mxu0 0.0
        %2780 = vmatpush2.msra.mxu0 0.0
        %2781 = vmatprep.subr.mxu0 0.0
        %2782 = vmatpush2.msra.mxu0 0.0
        %2783 = vmatprep.subr.mxu0 0.0
        %2784 = vmatpush2.msra.mxu0 0.0
        %2785 = vmatprep.subr.mxu0 0.0
        %2786 = vmatpush2.msra.mxu0 0.0
        %2787 = vmatprep.mubr.f32.mxu0 0.0
        %2788 = vmatmul.mubr.f32.gmra.mxu0 %v254
        %v2789 = vpop.f32.mrf.mxu0
        %v2790 = vadd.f32 0.0, %v2789
        %v2791 = vpop.f32.mrf.mxu0
        %2792 = vdwg.mxu0
        %v2794 = vsel %vm475, %v2642, 0
        %v2797 = vsel %vm475, %v2715, 0
        %2799 = vmatprep.subr.mxu0 0.0
        %2800 = vmatpush1.xpose.msra.mxu0 0.0
        %2801 = vmatprep.subr.mxu0 0.0
        %2802 = vmatpush1.xpose.msra.mxu0 0.0
        %2803 = vmatprep.subr.mxu0 0.0
        %2804 = vmatpush1.xpose.msra.mxu0 0.0
        %2805 = vmatprep.subr.mxu0 0.0
        %2806 = vmatpush1.xpose.msra.mxu0 0.0
        %2807 = vmatprep.subr.mxu0 0.0
        %2808 = vmatpush1.xpose.msra.mxu0 0.0
        %2809 = vmatprep.subr.mxu0 0.0
        %2810 = vmatpush1.xpose.msra.mxu0 0.0
        %2811 = vmatprep.subr.mxu0 0.0
        %2812 = vmatpush1.xpose.msra.mxu0 0.0
        %2813 = vmatprep.subr.mxu0 0.0
        %2814 = vmatpush1.xpose.msra.mxu0 0.0
        %2815 = vmatprep.subr.mxu0 0.0
        %2816 = vmatpush1.xpose.msra.mxu0 0.0
        %2817 = vmatprep.subr.mxu0 0.0
        %2818 = vmatpush1.xpose.msra.mxu0 0.0
        %2819 = vmatprep.subr.mxu0 0.0
        %2820 = vmatpush1.xpose.msra.mxu0 0.0
        %2821 = vmatprep.subr.mxu0 0.0
        %2822 = vmatpush1.xpose.msra.mxu0 0.0
        %2823 = vmatprep.subr.mxu0 0.0
        %2824 = vmatpush1.xpose.msra.mxu0 0.0
        %2825 = vmatprep.subr.mxu0 0.0
        %2826 = vmatpush1.xpose.msra.mxu0 0.0
        %2827 = vmatprep.subr.mxu0 0.0
        %2828 = vmatpush1.xpose.msra.mxu0 0.0
        %2829 = vmatprep.subr.mxu0 0.0
        %2830 = vmatpush1.xpose.msra.mxu0 %v2797
        %2831 = vmatprep.subr.mxu0 0.0
        %2832 = vmatpush2.xpose.msra.mxu0 0.0
        %2833 = vmatprep.subr.mxu0 0.0
        %2834 = vmatpush2.xpose.msra.mxu0 0.0
        %2835 = vmatprep.subr.mxu0 0.0
        %2836 = vmatpush2.xpose.msra.mxu0 0.0
        %2837 = vmatprep.subr.mxu0 0.0
        %2838 = vmatpush2.xpose.msra.mxu0 0.0
        %2839 = vmatprep.subr.mxu0 0.0
        %2840 = vmatpush2.xpose.msra.mxu0 0.0
        %2841 = vmatprep.subr.mxu0 0.0
        %2842 = vmatpush2.xpose.msra.mxu0 0.0
        %2843 = vmatprep.subr.mxu0 0.0
        %2844 = vmatpush2.xpose.msra.mxu0 0.0
        %2845 = vmatprep.subr.mxu0 0.0
        %2846 = vmatpush2.xpose.msra.mxu0 0.0
        %2847 = vmatprep.subr.mxu0 0.0
        %2848 = vmatpush2.xpose.msra.mxu0 0.0
        %2849 = vmatprep.subr.mxu0 0.0
        %2850 = vmatpush2.xpose.msra.mxu0 0.0
        %2851 = vmatprep.subr.mxu0 0.0
        %2852 = vmatpush2.xpose.msra.mxu0 0.0
        %2853 = vmatprep.subr.mxu0 0.0
        %2854 = vmatpush2.xpose.msra.mxu0 0.0
        %2855 = vmatprep.subr.mxu0 0.0
        %2856 = vmatpush2.xpose.msra.mxu0 0.0
        %2857 = vmatprep.subr.mxu0 0.0
        %2858 = vmatpush2.xpose.msra.mxu0 0.0
        %2859 = vmatprep.subr.mxu0 0.0
        %2860 = vmatpush2.xpose.msra.mxu0 0.0
        %2861 = vmatprep.subr.mxu0 0.0
        %2862 = vmatpush2.xpose.msra.mxu0 0.0
        %2863 = vmatprep.mubr.f32.mxu0 0.0
        %2864 = vmatmul.mubr.f32.gmra.mxu0 %v2794
        %v2865 = vpop.f32.mrf.mxu0
        %v2866 = vadd.f32 0.0, %v2865
        %v2867 = vpop.f32.mrf.mxu0
        %2868 = vdwg.mxu0
        %v2869 = vsel %vm552, %v2866, -inf
        %2870 = vmax.xlane.f32.xlu0 %v2869
        %v2871 = vpop.xlane.xlu0 %2870
        %v2872 = vsub.f32 %v2866, %v2871
        %v2873 = vmul.f32 %v2872, 1.442695
        %v2874 = vpow.pop %v2873
        %v2875 = vsel %vm552, %v2874, 0.0
        %2876 = vadd.xlane.f32.xlu0 %v2875
        %v2877 = vpop.xlane.xlu0 %2876
        %v2878 = vrcp.pop %v2877
        %v2879 = vmul.f32 %v2874, %v2878
        %v2881 = vsel %vm552, %v2879, 0
        %2883 = vmatprep.subr.mxu0 0.0
        %2884 = vmatpush1.msra.mxu0 0.0
        %2885 = vmatprep.subr.mxu0 0.0
        %2886 = vmatpush1.msra.mxu0 0.0
        %2887 = vmatprep.subr.mxu0 0.0
        %2888 = vmatpush1.msra.mxu0 0.0
        %2889 = vmatprep.subr.mxu0 0.0
        %2890 = vmatpush1.msra.mxu0 0.0
        %2891 = vmatprep.subr.mxu0 0.0
        %2892 = vmatpush1.msra.mxu0 0.0
        %2893 = vmatprep.subr.mxu0 0.0
        %2894 = vmatpush1.msra.mxu0 0.0
        %2895 = vmatprep.subr.mxu0 0.0
        %2896 = vmatpush1.msra.mxu0 0.0
        %2897 = vmatprep.subr.mxu0 0.0
        %2898 = vmatpush1.msra.mxu0 0.0
        %2899 = vmatprep.subr.mxu0 0.0
        %2900 = vmatpush1.msra.mxu0 0.0
        %2901 = vmatprep.subr.mxu0 0.0
        %2902 = vmatpush1.msra.mxu0 0.0
        %2903 = vmatprep.subr.mxu0 0.0
        %2904 = vmatpush1.msra.mxu0 0.0
        %2905 = vmatprep.subr.mxu0 0.0
        %2906 = vmatpush1.msra.mxu0 0.0
        %2907 = vmatprep.subr.mxu0 0.0
        %2908 = vmatpush1.msra.mxu0 0.0
        %2909 = vmatprep.subr.mxu0 0.0
        %2910 = vmatpush1.msra.mxu0 0.0
        %2911 = vmatprep.subr.mxu0 0.0
        %2912 = vmatpush1.msra.mxu0 0.0
        %2913 = vmatprep.subr.mxu0 0.0
        %2914 = vmatpush1.msra.mxu0 %v2790
        %2915 = vmatprep.subr.mxu0 0.0
        %2916 = vmatpush2.msra.mxu0 0.0
        %2917 = vmatprep.subr.mxu0 0.0
        %2918 = vmatpush2.msra.mxu0 0.0
        %2919 = vmatprep.subr.mxu0 0.0
        %2920 = vmatpush2.msra.mxu0 0.0
        %2921 = vmatprep.subr.mxu0 0.0
        %2922 = vmatpush2.msra.mxu0 0.0
        %2923 = vmatprep.subr.mxu0 0.0
        %2924 = vmatpush2.msra.mxu0 0.0
        %2925 = vmatprep.subr.mxu0 0.0
        %2926 = vmatpush2.msra.mxu0 0.0
        %2927 = vmatprep.subr.mxu0 0.0
        %2928 = vmatpush2.msra.mxu0 0.0
        %2929 = vmatprep.subr.mxu0 0.0
        %2930 = vmatpush2.msra.mxu0 0.0
        %2931 = vmatprep.subr.mxu0 0.0
        %2932 = vmatpush2.msra.mxu0 0.0
        %2933 = vmatprep.subr.mxu0 0.0
        %2934 = vmatpush2.msra.mxu0 0.0
        %2935 = vmatprep.subr.mxu0 0.0
        %2936 = vmatpush2.msra.mxu0 0.0
        %2937 = vmatprep.subr.mxu0 0.0
        %2938 = vmatpush2.msra.mxu0 0.0
        %2939 = vmatprep.subr.mxu0 0.0
        %2940 = vmatpush2.msra.mxu0 0.0
        %2941 = vmatprep.subr.mxu0 0.0
        %2942 = vmatpush2.msra.mxu0 0.0
        %2943 = vmatprep.subr.mxu0 0.0
        %2944 = vmatpush2.msra.mxu0 0.0
        %2945 = vmatprep.subr.mxu0 0.0
        %2946 = vmatpush2.msra.mxu0 0.0
        %2947 = vmatprep.mubr.f32.mxu0 0.0
        %2948 = vmatmul.mubr.f32.gmra.mxu0 %v2881
        %v2949 = vpop.f32.mrf.mxu0
        %v2950 = vadd.f32 0.0, %v2949
        %v2951 = vpop.f32.mrf.mxu0
        %2952 = vdwg.mxu0
        %s2953 = scalar_lea.vmem %s1, 224
        %v2954 = vld [vmem:[%s2953] sm:$0xff]
        %v2955 = vld [vmem:[%s2953 + $0x8] sm:$0xff]
        %v2956 = vld [vmem:[%s2953 + $0x10] sm:$0xff]
        %v2957 = vld [vmem:[%s2953 + $0x18] sm:$0xff]
        %2958 = vmatprep.subr.mxu0 0.0
        %2959 = vmatpush1.msra.mxu0 0.0
        %2960 = vmatprep.subr.mxu0 0.0
        %2961 = vmatpush1.msra.mxu0 0.0
        %2962 = vmatprep.subr.mxu0 0.0
        %2963 = vmatpush1.msra.mxu0 0.0
        %2964 = vmatprep.subr.mxu0 0.0
        %2965 = vmatpush1.msra.mxu0 0.0
        %2966 = vmatprep.subr.mxu0 0.0
        %2967 = vmatpush1.msra.mxu0 0.0
        %2968 = vmatprep.subr.mxu0 0.0
        %2969 = vmatpush1.msra.mxu0 0.0
        %2970 = vmatprep.subr.mxu0 0.0
        %2971 = vmatpush1.msra.mxu0 0.0
        %2972 = vmatprep.subr.mxu0 0.0
        %2973 = vmatpush1.msra.mxu0 0.0
        %2974 = vmatprep.subr.mxu0 0.0
        %2975 = vmatpush1.msra.mxu0 0.0
        %2976 = vmatprep.subr.mxu0 0.0
        %2977 = vmatpush1.msra.mxu0 0.0
        %2978 = vmatprep.subr.mxu0 0.0
        %2979 = vmatpush1.msra.mxu0 0.0
        %2980 = vmatprep.subr.mxu0 0.0
        %2981 = vmatpush1.msra.mxu0 0.0
        %2982 = vmatprep.subr.mxu0 0.0
        %2983 = vmatpush1.msra.mxu0 %v2957
        %2984 = vmatprep.subr.mxu0 0.0
        %2985 = vmatpush1.msra.mxu0 %v2956
        %2986 = vmatprep.subr.mxu0 0.0
        %2987 = vmatpush1.msra.mxu0 %v2955
        %2988 = vmatprep.subr.mxu0 0.0
        %2989 = vmatpush1.msra.mxu0 %v2954
        %2990 = vmatprep.subr.mxu0 0.0
        %2991 = vmatpush2.msra.mxu0 0.0
        %2992 = vmatprep.subr.mxu0 0.0
        %2993 = vmatpush2.msra.mxu0 0.0
        %2994 = vmatprep.subr.mxu0 0.0
        %2995 = vmatpush2.msra.mxu0 0.0
        %2996 = vmatprep.subr.mxu0 0.0
        %2997 = vmatpush2.msra.mxu0 0.0
        %2998 = vmatprep.subr.mxu0 0.0
        %2999 = vmatpush2.msra.mxu0 0.0
        %3000 = vmatprep.subr.mxu0 0.0
        %3001 = vmatpush2.msra.mxu0 0.0
        %3002 = vmatprep.subr.mxu0 0.0
        %3003 = vmatpush2.msra.mxu0 0.0
        %3004 = vmatprep.subr.mxu0 0.0
        %3005 = vmatpush2.msra.mxu0 0.0
        %3006 = vmatprep.subr.mxu0 0.0
        %3007 = vmatpush2.msra.mxu0 0.0
        %3008 = vmatprep.subr.mxu0 0.0
        %3009 = vmatpush2.msra.mxu0 0.0
        %3010 = vmatprep.subr.mxu0 0.0
        %3011 = vmatpush2.msra.mxu0 0.0
        %3012 = vmatprep.subr.mxu0 0.0
        %3013 = vmatpush2.msra.mxu0 0.0
        %3014 = vmatprep.subr.mxu0 0.0
        %3015 = vmatpush2.msra.mxu0 0.0
        %3016 = vmatprep.subr.mxu0 0.0
        %3017 = vmatpush2.msra.mxu0 0.0
        %3018 = vmatprep.subr.mxu0 0.0
        %3019 = vmatpush2.msra.mxu0 0.0
        %3020 = vmatprep.subr.mxu0 0.0
        %3021 = vmatpush2.msra.mxu0 0.0
        %3022 = vmatprep.mubr.f32.mxu0 0.0
        %3023 = vmatmul.mubr.f32.gmra.mxu0 %v254
        %v3024 = vpop.f32.mrf.mxu0
        %v3025 = vadd.f32 0.0, %v3024
        %v3026 = vpop.f32.mrf.mxu0
        %3027 = vdwg.mxu0
        %v3028 = vmul.f32 %v3025, 0.5
        %s3029 = scalar_lea.vmem %s2, 224
        %v3030 = vld [vmem:[%s3029] sm:$0xff]
        %v3031 = vld [vmem:[%s3029 + $0x8] sm:$0xff]
        %v3032 = vld [vmem:[%s3029 + $0x10] sm:$0xff]
        %v3033 = vld [vmem:[%s3029 + $0x18] sm:$0xff]
        %3034 = vmatprep.subr.mxu0 0.0
        %3035 = vmatpush1.msra.mxu0 0.0
        %3036 = vmatprep.subr.mxu0 0.0
        %3037 = vmatpush1.msra.mxu0 0.0
        %3038 = vmatprep.subr.mxu0 0.0
        %3039 = vmatpush1.msra.mxu0 0.0
        %3040 = vmatprep.subr.mxu0 0.0
        %3041 = vmatpush1.msra.mxu0 0.0
        %3042 = vmatprep.subr.mxu0 0.0
        %3043 = vmatpush1.msra.mxu0 0.0
        %3044 = vmatprep.subr.mxu0 0.0
        %3045 = vmatpush1.msra.mxu0 0.0
        %3046 = vmatprep.subr.mxu0 0.0
        %3047 = vmatpush1.msra.mxu0 0.0
        %3048 = vmatprep.subr.mxu0 0.0
        %3049 = vmatpush1.msra.mxu0 0.0
        %3050 = vmatprep.subr.mxu0 0.0
        %3051 = vmatpush1.msra.mxu0 0.0
        %3052 = vmatprep.subr.mxu0 0.0
        %3053 = vmatpush1.msra.mxu0 0.0
        %3054 = vmatprep.subr.mxu0 0.0
        %3055 = vmatpush1.msra.mxu0 0.0
        %3056 = vmatprep.subr.mxu0 0.0
        %3057 = vmatpush1.msra.mxu0 0.0
        %3058 = vmatprep.subr.mxu0 0.0
        %3059 = vmatpush1.msra.mxu0 %v3033
        %3060 = vmatprep.subr.mxu0 0.0
        %3061 = vmatpush1.msra.mxu0 %v3032
        %3062 = vmatprep.subr.mxu0 0.0
        %3063 = vmatpush1.msra.mxu0 %v3031
        %3064 = vmatprep.subr.mxu0 0.0
        %3065 = vmatpush1.msra.mxu0 %v3030
        %3066 = vmatprep.subr.mxu0 0.0
        %3067 = vmatpush2.msra.mxu0 0.0
        %3068 = vmatprep.subr.mxu0 0.0
        %3069 = vmatpush2.msra.mxu0 0.0
        %3070 = vmatprep.subr.mxu0 0.0
        %3071 = vmatpush2.msra.mxu0 0.0
        %3072 = vmatprep.subr.mxu0 0.0
        %3073 = vmatpush2.msra.mxu0 0.0
        %3074 = vmatprep.subr.mxu0 0.0
        %3075 = vmatpush2.msra.mxu0 0.0
        %3076 = vmatprep.subr.mxu0 0.0
        %3077 = vmatpush2.msra.mxu0 0.0
        %3078 = vmatprep.subr.mxu0 0.0
        %3079 = vmatpush2.msra.mxu0 0.0
        %3080 = vmatprep.subr.mxu0 0.0
        %3081 = vmatpush2.msra.mxu0 0.0
        %3082 = vmatprep.subr.mxu0 0.0
        %3083 = vmatpush2.msra.mxu0 0.0
        %3084 = vmatprep.subr.mxu0 0.0
        %3085 = vmatpush2.msra.mxu0 0.0
        %3086 = vmatprep.subr.mxu0 0.0
        %3087 = vmatpush2.msra.mxu0 0.0
        %3088 = vmatprep.subr.mxu0 0.0
        %3089 = vmatpush2.msra.mxu0 0.0
        %3090 = vmatprep.subr.mxu0 0.0
        %3091 = vmatpush2.msra.mxu0 0.0
        %3092 = vmatprep.subr.mxu0 0.0
        %3093 = vmatpush2.msra.mxu0 0.0
        %3094 = vmatprep.subr.mxu0 0.0
        %3095 = vmatpush2.msra.mxu0 0.0
        %3096 = vmatprep.subr.mxu0 0.0
        %3097 = vmatpush2.msra.mxu0 0.0
        %3098 = vmatprep.mubr.f32.mxu0 0.0
        %3099 = vmatmul.mubr.f32.gmra.mxu0 %v254
        %v3100 = vpop.f32.mrf.mxu0
        %v3101 = vadd.f32 0.0, %v3100
        %v3102 = vpop.f32.mrf.mxu0
        %3103 = vdwg.mxu0
        %s3104 = scalar_lea.vmem %s3, 224
        %v3105 = vld [vmem:[%s3104] sm:$0xff]
        %v3106 = vld [vmem:[%s3104 + $0x8] sm:$0xff]
        %v3107 = vld [vmem:[%s3104 + $0x10] sm:$0xff]
        %v3108 = vld [vmem:[%s3104 + $0x18] sm:$0xff]
        %3109 = vmatprep.subr.mxu0 0.0
        %3110 = vmatpush1.msra.mxu0 0.0
        %3111 = vmatprep.subr.mxu0 0.0
        %3112 = vmatpush1.msra.mxu0 0.0
        %3113 = vmatprep.subr.mxu0 0.0
        %3114 = vmatpush1.msra.mxu0 0.0
        %3115 = vmatprep.subr.mxu0 0.0
        %3116 = vmatpush1.msra.mxu0 0.0
        %3117 = vmatprep.subr.mxu0 0.0
        %3118 = vmatpush1.msra.mxu0 0.0
        %3119 = vmatprep.subr.mxu0 0.0
        %3120 = vmatpush1.msra.mxu0 0.0
        %3121 = vmatprep.subr.mxu0 0.0
        %3122 = vmatpush1.msra.mxu0 0.0
        %3123 = vmatprep.subr.mxu0 0.0
        %3124 = vmatpush1.msra.mxu0 0.0
        %3125 = vmatprep.subr.mxu0 0.0
        %3126 = vmatpush1.msra.mxu0 0.0
        %3127 = vmatprep.subr.mxu0 0.0
        %3128 = vmatpush1.msra.mxu0 0.0
        %3129 = vmatprep.subr.mxu0 0.0
        %3130 = vmatpush1.msra.mxu0 0.0
        %3131 = vmatprep.subr.mxu0 0.0
        %3132 = vmatpush1.msra.mxu0 0.0
        %3133 = vmatprep.subr.mxu0 0.0
        %3134 = vmatpush1.msra.mxu0 %v3108
        %3135 = vmatprep.subr.mxu0 0.0
        %3136 = vmatpush1.msra.mxu0 %v3107
        %3137 = vmatprep.subr.mxu0 0.0
        %3138 = vmatpush1.msra.mxu0 %v3106
        %3139 = vmatprep.subr.mxu0 0.0
        %3140 = vmatpush1.msra.mxu0 %v3105
        %3141 = vmatprep.subr.mxu0 0.0
        %3142 = vmatpush2.msra.mxu0 0.0
        %3143 = vmatprep.subr.mxu0 0.0
        %3144 = vmatpush2.msra.mxu0 0.0
        %3145 = vmatprep.subr.mxu0 0.0
        %3146 = vmatpush2.msra.mxu0 0.0
        %3147 = vmatprep.subr.mxu0 0.0
        %3148 = vmatpush2.msra.mxu0 0.0
        %3149 = vmatprep.subr.mxu0 0.0
        %3150 = vmatpush2.msra.mxu0 0.0
        %3151 = vmatprep.subr.mxu0 0.0
        %3152 = vmatpush2.msra.mxu0 0.0
        %3153 = vmatprep.subr.mxu0 0.0
        %3154 = vmatpush2.msra.mxu0 0.0
        %3155 = vmatprep.subr.mxu0 0.0
        %3156 = vmatpush2.msra.mxu0 0.0
        %3157 = vmatprep.subr.mxu0 0.0
        %3158 = vmatpush2.msra.mxu0 0.0
        %3159 = vmatprep.subr.mxu0 0.0
        %3160 = vmatpush2.msra.mxu0 0.0
        %3161 = vmatprep.subr.mxu0 0.0
        %3162 = vmatpush2.msra.mxu0 0.0
        %3163 = vmatprep.subr.mxu0 0.0
        %3164 = vmatpush2.msra.mxu0 0.0
        %3165 = vmatprep.subr.mxu0 0.0
        %3166 = vmatpush2.msra.mxu0 0.0
        %3167 = vmatprep.subr.mxu0 0.0
        %3168 = vmatpush2.msra.mxu0 0.0
        %3169 = vmatprep.subr.mxu0 0.0
        %3170 = vmatpush2.msra.mxu0 0.0
        %3171 = vmatprep.subr.mxu0 0.0
        %3172 = vmatpush2.msra.mxu0 0.0
        %3173 = vmatprep.mubr.f32.mxu0 0.0
        %3174 = vmatmul.mubr.f32.gmra.mxu0 %v254
        %v3175 = vpop.f32.mrf.mxu0
        %v3176 = vadd.f32 0.0, %v3175
        %v3177 = vpop.f32.mrf.mxu0
        %3178 = vdwg.mxu0
        %v3180 = vsel %vm475, %v3028, 0
        %v3183 = vsel %vm475, %v3101, 0
        %3185 = vmatprep.subr.mxu0 0.0
        %3186 = vmatpush1.xpose.msra.mxu0 0.0
        %3187 = vmatprep.subr.mxu0 0.0
        %3188 = vmatpush1.xpose.msra.mxu0 0.0
        %3189 = vmatprep.subr.mxu0 0.0
        %3190 = vmatpush1.xpose.msra.mxu0 0.0
        %3191 = vmatprep.subr.mxu0 0.0
        %3192 = vmatpush1.xpose.msra.mxu0 0.0
        %3193 = vmatprep.subr.mxu0 0.0
        %3194 = vmatpush1.xpose.msra.mxu0 0.0
        %3195 = vmatprep.subr.mxu0 0.0
        %3196 = vmatpush1.xpose.msra.mxu0 0.0
        %3197 = vmatprep.subr.mxu0 0.0
        %3198 = vmatpush1.xpose.msra.mxu0 0.0
        %3199 = vmatprep.subr.mxu0 0.0
        %3200 = vmatpush1.xpose.msra.mxu0 0.0
        %3201 = vmatprep.subr.mxu0 0.0
        %3202 = vmatpush1.xpose.msra.mxu0 0.0
        %3203 = vmatprep.subr.mxu0 0.0
        %3204 = vmatpush1.xpose.msra.mxu0 0.0
        %3205 = vmatprep.subr.mxu0 0.0
        %3206 = vmatpush1.xpose.msra.mxu0 0.0
        %3207 = vmatprep.subr.mxu0 0.0
        %3208 = vmatpush1.xpose.msra.mxu0 0.0
        %3209 = vmatprep.subr.mxu0 0.0
        %3210 = vmatpush1.xpose.msra.mxu0 0.0
        %3211 = vmatprep.subr.mxu0 0.0
        %3212 = vmatpush1.xpose.msra.mxu0 0.0
        %3213 = vmatprep.subr.mxu0 0.0
        %3214 = vmatpush1.xpose.msra.mxu0 0.0
        %3215 = vmatprep.subr.mxu0 0.0
        %3216 = vmatpush1.xpose.msra.mxu0 %v3183
        %3217 = vmatprep.subr.mxu0 0.0
        %3218 = vmatpush2.xpose.msra.mxu0 0.0
        %3219 = vmatprep.subr.mxu0 0.0
        %3220 = vmatpush2.xpose.msra.mxu0 0.0
        %3221 = vmatprep.subr.mxu0 0.0
        %3222 = vmatpush2.xpose.msra.mxu0 0.0
        %3223 = vmatprep.subr.mxu0 0.0
        %3224 = vmatpush2.xpose.msra.mxu0 0.0
        %3225 = vmatprep.subr.mxu0 0.0
        %3226 = vmatpush2.xpose.msra.mxu0 0.0
        %3227 = vmatprep.subr.mxu0 0.0
        %3228 = vmatpush2.xpose.msra.mxu0 0.0
        %3229 = vmatprep.subr.mxu0 0.0
        %3230 = vmatpush2.xpose.msra.mxu0 0.0
        %3231 = vmatprep.subr.mxu0 0.0
        %3232 = vmatpush2.xpose.msra.mxu0 0.0
        %3233 = vmatprep.subr.mxu0 0.0
        %3234 = vmatpush2.xpose.msra.mxu0 0.0
        %3235 = vmatprep.subr.mxu0 0.0
        %3236 = vmatpush2.xpose.msra.mxu0 0.0
        %3237 = vmatprep.subr.mxu0 0.0
        %3238 = vmatpush2.xpose.msra.mxu0 0.0
        %3239 = vmatprep.subr.mxu0 0.0
        %3240 = vmatpush2.xpose.msra.mxu0 0.0
        %3241 = vmatprep.subr.mxu0 0.0
        %3242 = vmatpush2.xpose.msra.mxu0 0.0
        %3243 = vmatprep.subr.mxu0 0.0
        %3244 = vmatpush2.xpose.msra.mxu0 0.0
        %3245 = vmatprep.subr.mxu0 0.0
        %3246 = vmatpush2.xpose.msra.mxu0 0.0
        %3247 = vmatprep.subr.mxu0 0.0
        %3248 = vmatpush2.xpose.msra.mxu0 0.0
        %3249 = vmatprep.mubr.f32.mxu0 0.0
        %3250 = vmatmul.mubr.f32.gmra.mxu0 %v3180
        %v3251 = vpop.f32.mrf.mxu0
        %v3252 = vadd.f32 0.0, %v3251
        %v3253 = vpop.f32.mrf.mxu0
        %3254 = vdwg.mxu0
        %v3255 = vsel %vm552, %v3252, -inf
        %3256 = vmax.xlane.f32.xlu0 %v3255
        %v3257 = vpop.xlane.xlu0 %3256
        %v3258 = vsub.f32 %v3252, %v3257
        %v3259 = vmul.f32 %v3258, 1.442695
        %v3260 = vpow.pop %v3259
        %v3261 = vsel %vm552, %v3260, 0.0
        %3262 = vadd.xlane.f32.xlu0 %v3261
        %v3263 = vpop.xlane.xlu0 %3262
        %v3264 = vrcp.pop %v3263
        %v3265 = vmul.f32 %v3260, %v3264
        %v3267 = vsel %vm552, %v3265, 0
        %3269 = vmatprep.subr.mxu0 0.0
        %3270 = vmatpush1.msra.mxu0 0.0
        %3271 = vmatprep.subr.mxu0 0.0
        %3272 = vmatpush1.msra.mxu0 0.0
        %3273 = vmatprep.subr.mxu0 0.0
        %3274 = vmatpush1.msra.mxu0 0.0
        %3275 = vmatprep.subr.mxu0 0.0
        %3276 = vmatpush1.msra.mxu0 0.0
        %3277 = vmatprep.subr.mxu0 0.0
        %3278 = vmatpush1.msra.mxu0 0.0
        %3279 = vmatprep.subr.mxu0 0.0
        %3280 = vmatpush1.msra.mxu0 0.0
        %3281 = vmatprep.subr.mxu0 0.0
        %3282 = vmatpush1.msra.mxu0 0.0
        %3283 = vmatprep.subr.mxu0 0.0
        %3284 = vmatpush1.msra.mxu0 0.0
        %3285 = vmatprep.subr.mxu0 0.0
        %3286 = vmatpush1.msra.mxu0 0.0
        %3287 = vmatprep.subr.mxu0 0.0
        %3288 = vmatpush1.msra.mxu0 0.0
        %3289 = vmatprep.subr.mxu0 0.0
        %3290 = vmatpush1.msra.mxu0 0.0
        %3291 = vmatprep.subr.mxu0 0.0
        %3292 = vmatpush1.msra.mxu0 0.0
        %3293 = vmatprep.subr.mxu0 0.0
        %3294 = vmatpush1.msra.mxu0 0.0
        %3295 = vmatprep.subr.mxu0 0.0
        %3296 = vmatpush1.msra.mxu0 0.0
        %3297 = vmatprep.subr.mxu0 0.0
        %3298 = vmatpush1.msra.mxu0 0.0
        %3299 = vmatprep.subr.mxu0 0.0
        %3300 = vmatpush1.msra.mxu0 %v3176
        %3301 = vmatprep.subr.mxu0 0.0
        %3302 = vmatpush2.msra.mxu0 0.0
        %3303 = vmatprep.subr.mxu0 0.0
        %3304 = vmatpush2.msra.mxu0 0.0
        %3305 = vmatprep.subr.mxu0 0.0
        %3306 = vmatpush2.msra.mxu0 0.0
        %3307 = vmatprep.subr.mxu0 0.0
        %3308 = vmatpush2.msra.mxu0 0.0
        %3309 = vmatprep.subr.mxu0 0.0
        %3310 = vmatpush2.msra.mxu0 0.0
        %3311 = vmatprep.subr.mxu0 0.0
        %3312 = vmatpush2.msra.mxu0 0.0
        %3313 = vmatprep.subr.mxu0 0.0
        %3314 = vmatpush2.msra.mxu0 0.0
        %3315 = vmatprep.subr.mxu0 0.0
        %3316 = vmatpush2.msra.mxu0 0.0
        %3317 = vmatprep.subr.mxu0 0.0
        %3318 = vmatpush2.msra.mxu0 0.0
        %3319 = vmatprep.subr.mxu0 0.0
        %3320 = vmatpush2.msra.mxu0 0.0
        %3321 = vmatprep.subr.mxu0 0.0
        %3322 = vmatpush2.msra.mxu0 0.0
        %3323 = vmatprep.subr.mxu0 0.0
        %3324 = vmatpush2.msra.mxu0 0.0
        %3325 = vmatprep.subr.mxu0 0.0
        %3326 = vmatpush2.msra.mxu0 0.0
        %3327 = vmatprep.subr.mxu0 0.0
        %3328 = vmatpush2.msra.mxu0 0.0
        %3329 = vmatprep.subr.mxu0 0.0
        %3330 = vmatpush2.msra.mxu0 0.0
        %3331 = vmatprep.subr.mxu0 0.0
        %3332 = vmatpush2.msra.mxu0 0.0
        %3333 = vmatprep.mubr.f32.mxu0 0.0
        %3334 = vmatmul.mubr.f32.gmra.mxu0 %v3267
        %v3335 = vpop.f32.mrf.mxu0
        %v3336 = vadd.f32 0.0, %v3335
        %v3337 = vpop.f32.mrf.mxu0
        %3338 = vdwg.mxu0
        %3340 = vrot.lane.b32.xlu0 %v1020, 4
        %v3341 = vpop.permute.xlu0 %3340
        %3344 = vrot.lane.b32.xlu0 %v1406, 8
        %v3345 = vpop.permute.xlu0 %3344
        %3348 = vrot.lane.b32.xlu0 %v1792, 12
        %v3349 = vpop.permute.xlu0 %3348
        %3352 = vrot.lane.b32.xlu0 %v2178, 16
        %v3353 = vpop.permute.xlu0 %3352
        %3356 = vrot.lane.b32.xlu0 %v2564, 20
        %v3357 = vpop.permute.xlu0 %3356
        %3360 = vrot.lane.b32.xlu0 %v2950, 24
        %v3361 = vpop.permute.xlu0 %3360
        %3364 = vrot.lane.b32.xlu0 %v3336, 28
        %v3365 = vpop.permute.xlu0 %3364
        %v3367 = vsel %vm475, %v634, %v3341
        %v3368 = vsel %vm552, %v3367, %v3345
        %vm3369 = vcmask 97280
        %v3370 = vsel %vm3369, %v3368, %v3349
        %vm3371 = vcmask 130048
        %v3372 = vsel %vm3371, %v3370, %v3353
        %vm3373 = vcmask 162816
        %v3374 = vsel %vm3373, %v3372, %v3357
        %vm3375 = vcmask 195584
        %v3376 = vsel %vm3375, %v3374, %v3361
        %vm3377 = vcmask 228352
        %v3378 = vsel %vm3377, %v3376, %v3365
        %v3379 = vld [vmem:[%s4] sm:$0xff]
        %v3380 = vld [vmem:[%s4 + $0x8] sm:$0xff]
        %v3381 = vld [vmem:[%s4 + $0x10] sm:$0xff]
        %v3382 = vld [vmem:[%s4 + $0x18] sm:$0xff]
        %v3383 = vld [vmem:[%s5] sm:$0x1]
        %v3385 = vlaneseq
        %v3386 = vshrl.u32 %v3385, 7
        %v3387 = vsub.s32 0, %v3386
        %v3388 = vrot.slane %v3383, %v3387
        %v3391 = vsel %vm252, %v3378, 0
        %3393 = vmatprep.subr.mxu0 0.0
        %3394 = vmatpush1.msra.mxu0 0.0
        %3395 = vmatprep.subr.mxu0 0.0
        %3396 = vmatpush1.msra.mxu0 0.0
        %3397 = vmatprep.subr.mxu0 0.0
        %3398 = vmatpush1.msra.mxu0 0.0
        %3399 = vmatprep.subr.mxu0 0.0
        %3400 = vmatpush1.msra.mxu0 0.0
        %3401 = vmatprep.subr.mxu0 0.0
        %3402 = vmatpush1.msra.mxu0 0.0
        %3403 = vmatprep.subr.mxu0 0.0
        %3404 = vmatpush1.msra.mxu0 0.0
        %3405 = vmatprep.subr.mxu0 0.0
        %3406 = vmatpush1.msra.mxu0 0.0
        %3407 = vmatprep.subr.mxu0 0.0
        %3408 = vmatpush1.msra.mxu0 0.0
        %3409 = vmatprep.subr.mxu0 0.0
        %3410 = vmatpush1.msra.mxu0 0.0
        %3411 = vmatprep.subr.mxu0 0.0
        %3412 = vmatpush1.msra.mxu0 0.0
        %3413 = vmatprep.subr.mxu0 0.0
        %3414 = vmatpush1.msra.mxu0 0.0
        %3415 = vmatprep.subr.mxu0 0.0
        %3416 = vmatpush1.msra.mxu0 0.0
        %3417 = vmatprep.subr.mxu0 0.0
        %3418 = vmatpush1.msra.mxu0 %v3382
        %3419 = vmatprep.subr.mxu0 0.0
        %3420 = vmatpush1.msra.mxu0 %v3381
        %3421 = vmatprep.subr.mxu0 0.0
        %3422 = vmatpush1.msra.mxu0 %v3380
        %3423 = vmatprep.subr.mxu0 0.0
        %3424 = vmatpush1.msra.mxu0 %v3379
        %3425 = vmatprep.subr.mxu0 0.0
        %3426 = vmatpush2.msra.mxu0 0.0
        %3427 = vmatprep.subr.mxu0 0.0
        %3428 = vmatpush2.msra.mxu0 0.0
        %3429 = vmatprep.subr.mxu0 0.0
        %3430 = vmatpush2.msra.mxu0 0.0
        %3431 = vmatprep.subr.mxu0 0.0
        %3432 = vmatpush2.msra.mxu0 0.0
        %3433 = vmatprep.subr.mxu0 0.0
        %3434 = vmatpush2.msra.mxu0 0.0
        %3435 = vmatprep.subr.mxu0 0.0
        %3436 = vmatpush2.msra.mxu0 0.0
        %3437 = vmatprep.subr.mxu0 0.0
        %3438 = vmatpush2.msra.mxu0 0.0
        %3439 = vmatprep.subr.mxu0 0.0
        %3440 = vmatpush2.msra.mxu0 0.0
        %3441 = vmatprep.subr.mxu0 0.0
        %3442 = vmatpush2.msra.mxu0 0.0
        %3443 = vmatprep.subr.mxu0 0.0
        %3444 = vmatpush2.msra.mxu0 0.0
        %3445 = vmatprep.subr.mxu0 0.0
        %3446 = vmatpush2.msra.mxu0 0.0
        %3447 = vmatprep.subr.mxu0 0.0
        %3448 = vmatpush2.msra.mxu0 0.0
        %3449 = vmatprep.subr.mxu0 0.0
        %3450 = vmatpush2.msra.mxu0 0.0
        %3451 = vmatprep.subr.mxu0 0.0
        %3452 = vmatpush2.msra.mxu0 0.0
        %3453 = vmatprep.subr.mxu0 0.0
        %3454 = vmatpush2.msra.mxu0 0.0
        %3455 = vmatprep.subr.mxu0 0.0
        %3456 = vmatpush2.msra.mxu0 0.0
        %3457 = vmatprep.mubr.f32.mxu0 0.0
        %3458 = vmatmul.mubr.f32.gmra.mxu0 %v3391
        %v3459 = vpop.f32.mrf.mxu0
        %v3460 = vadd.f32 %v3388, %v3459
        %v3461 = vpop.f32.mrf.mxu0
        %3462 = vdwg.mxu0
        %3463 = vst.msk [vmem:[%s242] sm:$0xff] %vm252, %v3460
        %s3464 = sand.u32 %s159, 1
        %s3465 = scalar_lea.sflag [#allocation3], %s3464
        %s3466 = sand.u32 %s159, 1
        %s3467 = smul.addr %s3466, 8
        %s3468 = scalar_lea.vmem [#allocation2], %s3467
        // Predicated region
        $region45: #{tpu_custom_call.1} parent=43 // pred_check
          %p3469 = pneg %p169
        $region46: #{tpu_custom_call.1} parent=43 // pred_check_branch
          %3471 = sbr.rel (%p3469) target = $region48
        $region47: #{tpu_custom_call.1} parent=43 // pred_region
          %s3473 = ssub.s32 128, 128
          %3474 = vsyncadd %s3465, %s3473
          %s3475 = smul.addr %s20, 128
          %s3476 = scalar_lea.hbm %s6, %s3475
          %s3478 = sshll.u32 %s3468, 4
          %s3479 = int_to_ptr.vmem [resolvable:$true] %s3478
          %3481 = dma.vmem_to_hbm [thread:$0]  %s3479, 128, %s3476, %s3465
        $region48: #{tpu_custom_call.1} parent=43 // pred_fallthru
          _
      $region44: #{tpu_custom_call.1} parent=5 // pred_fallthru
        _
      %p3482 = scmp.le.s32.totalorder 2, %s15
      // Predicated region
      $region49: #{tpu_custom_call.1} parent=5 // pred_check
        %p3483 = pneg %p3482
      $region50: #{tpu_custom_call.1} parent=5 // pred_check_branch
        %3485 = sbr.rel (%p3483) target = $region52
      $region51: #{tpu_custom_call.1} parent=5 // pred_region
        %s3486 = ssub.s32 %s15, 2
        // Predicated region
        $region53: #{tpu_custom_call.1} parent=51 // pred_check
          %p3487 = pneg %p175
        $region54: #{tpu_custom_call.1} parent=51 // pred_check_branch
          %3489 = sbr.rel (%p3487) target = $region56
        $region55: #{tpu_custom_call.1} parent=51 // pred_region
          %s3490 = sand.u32 %s160, 1
          %s3491 = scalar_lea.sflag [#allocation3], %s3490
          %s3492 = sand.u32 %s160, 1
          %s3493 = smul.addr %s3492, 8
          %s3494 = scalar_lea.vmem [#allocation2], %s3493
          %3495 = dma.done %s3491, 128
        $region56: #{tpu_custom_call.1} parent=51 // pred_fallthru
          _
      $region52: #{tpu_custom_call.1} parent=5 // pred_fallthru
        _
    $region6: #{tpu_custom_call.1} parent=1 // loop_footer
      %s19 = sadd.s32 1, %s15
    $region7: #{tpu_custom_call.1} parent=1 // loop_footer_branch
      %14 = sbr.rel target = $region3
    $region8: #{tpu_custom_call.1} parent=1 // loop_exit
      _
    %3496 = vsyncpa [#allocation3], 1
    %s3497 = scalar_lea.sflag [#allocation3], 1
    %3498 = vsyncpa %s3497, 1

</llo_original>
